<compile_context>
chip_gen: v6e
topology: v6e:2x2x1
jax: 0.10.0
libtpu: 0.0.40
codegen_flags: <defaults>
</compile_context>

<pallas_src>
import jax
import jax.numpy as jnp
import numpy as np
from jax import lax
from jax.experimental import pallas as pl
from jax.experimental.pallas import tpu as pltpu

NCLS = 2      # classifier outputs
CPAD = 128    # lane-dense padded class dim (wrapper slices back to NCLS)


def make_rnn_kernel(num_layers, T, BB, H):
    """Build a kernel for a fixed (num_layers, T, BB, H) configuration."""
    L = num_layers

    def kernel(*refs):
        # in_refs : x, then 3 refs per layer (w_ih, w_hh, bias), w_cls, b_cls
        # out_refs: logits (BB, CPAD)
        # scratch : xw_scr (T*BB, H) f32 -- layer-0 input projections
        x_ref = refs[0]
        layer_refs = refs[1:1 + 3 * L]
        w_cls_ref = refs[1 + 3 * L]
        b_cls_ref = refs[2 + 3 * L]
        out_ref = refs[3 + 3 * L]
        xw_scr = refs[4 + 3 * L]

        w_ih_refs = [layer_refs[3 * l] for l in range(L)]
        w_hh_refs = [layer_refs[3 * l + 1] for l in range(L)]
        bias_refs = [layer_refs[3 * l + 2] for l in range(L)]

        # Layer-0 input projection for ALL time steps in ONE MXU matmul:
        # (T*BB, I)_bf16 @ (I, H)_bf16 -> f32, folded bias (b_ih + b_hh) added.
        xw_scr[...] = (jnp.dot(x_ref[0], w_ih_refs[0][...],
                               preferred_element_type=jnp.float32)
                       + bias_refs[0][...])

        # Resident weights / biases, loaded once (constant index_maps).
        whh = [w_hh_refs[l][...] for l in range(L)]            # bf16 (H, H)
        wih = [w_ih_refs[l][...] for l in range(1, L)]         # bf16 (H, H), layers > 0
        bias = [bias_refs[l][...] for l in range(L)]           # f32  (1, H)

        hb = [jnp.zeros((BB, H), jnp.bfloat16) for _ in range(L)]   # h_{t-1} per layer
        h_last_f32 = jnp.zeros((BB, H), jnp.float32)

        # Wavefront (diagonal) schedule: wavefront step s runs layer l at time
        # t = s - l.  The up-to-L per-step matmuls are mutually independent, so
        # the dependent matmul+tanh chain is T+L-1 links instead of L*T.
        # s, t are static Python ints -> fully unrolled straight-line code with
        # static, sublane-aligned BB-row slices into xw_scr.
        for s in range(T + L - 1):
            hb_prev = list(hb)          # snapshot: consume previous-wavefront values
            for l in range(L):
                t = s - l
                if 0 <= t < T:
                    if l == 0:
                        pre = xw_scr[pl.ds(t * BB, BB), :]
                    else:
                        # per-step input projection from the layer below
                        pre = (jnp.dot(hb_prev[l - 1], wih[l - 1],
                                       preferred_element_type=jnp.float32)
                               + bias[l])
                    pre = pre + jnp.dot(hb_prev[l], whh[l],
                                        preferred_element_type=jnp.float32)
                    h_new = jnp.tanh(pre)                     # f32 (EUP)
                    hb[l] = h_new.astype(jnp.bfloat16)
                    if l == L - 1:
                        h_last_f32 = h_new                    # only value the head needs

        # classify(last hidden state of last layer); class dim zero-padded to
        # 128 lanes -> unmasked lane-dense stores (wrapper slices [:, :NCLS]).
        out_ref[...] = (jnp.dot(h_last_f32, w_cls_ref[...],
                                preferred_element_type=jnp.float32)
                        + b_cls_ref[...])

    return kernel


def _const_spec(shape):
    n = len(shape)
    return pl.BlockSpec(shape, lambda b, _n=n: (0,) * _n)


def _tensorcores_per_chip():
    """1 TC/chip on v5e/v6e (and v2/v3 per-device), 2 TCs/chip on v4/v5p/v7x."""
    try:
        kind = jax.devices()[0].device_kind.lower()
    except Exception:
        return 1
    if any(s in kind for s in ("v5 lite", "v5e", "v6 lite", "v6e", "v2", "v3")):
        return 1
    if any(s in kind for s in ("v7", "v5p", "v4")):
        return 2
    return 1


def _vmem_bytes_estimate(T, BB, I, H, L):
    """Rough lane/sublane-padded VMEM footprint (inputs double-buffered)."""
    lane = lambda n: ((n + 127) // 128) * 128
    sub = lambda n: ((n + 7) // 8) * 8
    x_blk = 2 * sub(T * BB) * lane(I) * 2                       # bf16 x block
    xw_scr = sub(T * BB) * lane(H) * 4                          # f32 scratch
    w = 0
    for l in range(L):
        d_in = I if l == 0 else H
        w += sub(d_in) * lane(H) * 2 + sub(H) * lane(H) * 2 + sub(1) * lane(H) * 4
    w += sub(H) * lane(CPAD) * 4 + sub(1) * lane(CPAD) * 4
    out_blk = 2 * sub(BB) * lane(CPAD) * 4
    return x_blk + xw_scr + 2 * w + out_blk


def init_params(key, input_size, hidden_size, num_layers):
    """PyTorch-style uniform(-1/sqrt(H), 1/sqrt(H)) init."""
    stdv = 1.0 / np.sqrt(hidden_size)
    layers = []
    for l in range(num_layers):
        d_in = input_size if l == 0 else hidden_size
        key, k0, k1, k2, k3 = jax.random.split(key, 5)
        layers.append(dict(
            w_ih=jax.random.uniform(k0, (hidden_size, d_in), jnp.float32, -stdv, stdv),
            b_ih=jax.random.uniform(k1, (hidden_size,), jnp.float32, -stdv, stdv),
            w_hh=jax.random.uniform(k2, (hidden_size, hidden_size), jnp.float32, -stdv, stdv),
            b_hh=jax.random.uniform(k3, (hidden_size,), jnp.float32, -stdv, stdv),
        ))
    key, k1, k2 = jax.random.split(key, 3)
    return dict(
        layers=layers,
        w_cls=jax.random.uniform(k1, (NCLS, hidden_size), jnp.float32, -stdv, stdv),
        b_cls=jax.random.uniform(k2, (NCLS,), jnp.float32, -stdv, stdv),
    )


def rnn_forward_pallas(x, params, *, block_batch=None):
    """x: (B, T, input_size), batch_first as in the PyTorch module."""
    B, T, I = x.shape
    H = params["layers"][0]["w_hh"].shape[0]
    L = len(params["layers"])

    # Generation-aware batch block: one grid step per TensorCore.
    if block_batch is None:
        cores = _tensorcores_per_chip()
        block_batch = B if (cores <= 1 or B % cores != 0) else B // cores
    BB = block_batch
    assert B % BB == 0, "batch must be a multiple of the batch block"
    G = B // BB

    # VMEM scaling note: at these shapes the footprint is well under 1 MiB; if
    # T, H, or BB grow (e.g. H>=1024, T*BB>=4096), re-derive the tiling against
    # v7x's 64 MiB VMEM (128 MiB on v5e/v6e) and set vmem_limit_bytes.
    assert _vmem_bytes_estimate(T, BB, I, H, L) < 48 * 1024 * 1024, \
        "VMEM estimate too large for v7x; shrink BB / tile the time axis"

    # Lay x out as (G, T*BB, I): rows within a block are time-major so the
    # kernel only does aligned BB-row slices. MXU operands go in bf16.
    x_g = jnp.transpose(x.astype(jnp.float32), (1, 0, 2))        # (T, B, I)
    x_g = x_g.reshape(T, G, BB, I)
    x_g = jnp.transpose(x_g, (1, 0, 2, 3)).reshape(G, T * BB, I)
    x_g = x_g.astype(jnp.bfloat16)

    args = [x_g]
    for lp in params["layers"]:
        args.append(jnp.transpose(lp["w_ih"]).astype(jnp.bfloat16))   # (D_in, H)
        args.append(jnp.transpose(lp["w_hh"]).astype(jnp.bfloat16))   # (H, H)
        # Fold both biases once, at parameter-prep time.
        args.append((lp["b_ih"] + lp["b_hh"]).reshape(1, H).astype(jnp.float32))

    # Lane-dense classifier head: pad 2 classes out to 128 lanes with zeros.
    w_cls = jnp.zeros((H, CPAD), jnp.float32).at[:, :NCLS].set(
        jnp.transpose(params["w_cls"]).astype(jnp.float32))
    b_cls = jnp.zeros((1, CPAD), jnp.float32).at[0, :NCLS].set(
        params["b_cls"].astype(jnp.float32))
    args += [w_cls, b_cls]

    in_specs = [pl.BlockSpec((1, T * BB, I), lambda b: (b, 0, 0))]
    in_specs += [_const_spec(a.shape) for a in args[1:]]

    out = pl.pallas_call(
        make_rnn_kernel(L, T, BB, H),
        out_shape=jax.ShapeDtypeStruct((B, CPAD), jnp.float32),
        grid_spec=pltpu.PrefetchScalarGridSpec(
            num_scalar_prefetch=0,
            grid=(G,),
            in_specs=in_specs,
            out_specs=pl.BlockSpec((BB, CPAD), lambda b: (b, 0)),
            scratch_shapes=[pltpu.VMEM((T * BB, H), jnp.float32)],
        ),
        compiler_params=pltpu.CompilerParams(
            dimension_semantics=("parallel",)),
    )(*args)
    return out[:, :NCLS]


def rnn_forward_reference(x, params):
    """Pure-JAX reference of the PyTorch forward (h0 = 0, tanh RNN, batch_first)."""
    hp = lax.Precision.HIGHEST
    B, T, _ = x.shape
    H = params["layers"][0]["w_hh"].shape[0]
    seq = x.astype(jnp.float32)
    for lp in params["layers"]:
        h = jnp.zeros((B, H), jnp.float32)
        outs = []
        for t in range(T):
            h = jnp.tanh(jnp.dot(seq[:, t, :], lp["w_ih"].T, precision=hp) + lp["b_ih"]
                         + jnp.dot(h, lp["w_hh"].T, precision=hp) + lp["b_hh"])
            outs.append(h)
        seq = jnp.stack(outs, axis=1)
    return jnp.dot(seq[:, -1, :], params["w_cls"].T, precision=hp) + params["b_cls"]


if __name__ == "__main__":
    # Small shapes consistent with the module: batch=16, seq=16, input=16,
    # hidden=32, num_layers=2.
    B, T, I, H, L = 16, 16, 16, 32, 2
    key = jax.random.PRNGKey(0)
    kx, kp = jax.random.split(key)
    x = jax.random.normal(kx, (B, T, I), jnp.float32)
    params = init_params(kp, I, H, L)

    out = jax.block_until_ready(rnn_forward_pallas(x, params))
    ref = jax.block_until_ready(rnn_forward_reference(x, params))

    assert out.shape == (B, NCLS)
    # bf16 MXU operands in the recurrence -> slightly looser tolerance than f32.
    if not np.allclose(np.asarray(out), np.asarray(ref), rtol=5e-2, atol=2e-2):
        max_err = float(jnp.max(jnp.abs(out - ref)))
        raise AssertionError(f"Pallas RNN output mismatch vs reference "
                             f"(max abs err {max_err:.3e})")
    print("KERNEL_OK")
</pallas_src>

<mosaic_0001>
module attributes {stable_mosaic.version = 11 : i64} {
  func.func @kernel(%arg0: i32, %arg1: memref<1x256x16xbf16, #tpu.memory_space<vmem>>, %arg2: memref<16x32xbf16, #tpu.memory_space<vmem>>, %arg3: memref<32x32xbf16, #tpu.memory_space<vmem>>, %arg4: memref<1x32xf32, #tpu.memory_space<vmem>>, %arg5: memref<32x32xbf16, #tpu.memory_space<vmem>>, %arg6: memref<32x32xbf16, #tpu.memory_space<vmem>>, %arg7: memref<1x32xf32, #tpu.memory_space<vmem>>, %arg8: memref<32x128xf32, #tpu.memory_space<vmem>>, %arg9: memref<1x128xf32, #tpu.memory_space<vmem>>, %arg10: memref<16x128xf32, #tpu.memory_space<vmem>>, %arg11: memref<256x32xf32, #tpu.memory_space<vmem>>) attributes {dimension_semantics = [#tpu.dimension_semantics<parallel>], iteration_bounds = array<i64: 1>, scalar_prefetch = 0 : i64, scratch_operands = 1 : i64, tpu.core_type = #tpu.core_type<tc>, window_params = [{transform_indices = @transform_0, window_bounds = array<i64: 1, 256, 16>}, {pipeline_mode = #tpu.pipeline_mode<synchronous>, transform_indices = @transform_1, window_bounds = array<i64: 16, 32>}, {pipeline_mode = #tpu.pipeline_mode<synchronous>, transform_indices = @transform_2, window_bounds = array<i64: 32, 32>}, {pipeline_mode = #tpu.pipeline_mode<synchronous>, transform_indices = @transform_3, window_bounds = array<i64: 1, 32>}, {pipeline_mode = #tpu.pipeline_mode<synchronous>, transform_indices = @transform_4, window_bounds = array<i64: 32, 32>}, {pipeline_mode = #tpu.pipeline_mode<synchronous>, transform_indices = @transform_5, window_bounds = array<i64: 32, 32>}, {pipeline_mode = #tpu.pipeline_mode<synchronous>, transform_indices = @transform_6, window_bounds = array<i64: 1, 32>}, {pipeline_mode = #tpu.pipeline_mode<synchronous>, transform_indices = @transform_7, window_bounds = array<i64: 32, 128>}, {pipeline_mode = #tpu.pipeline_mode<synchronous>, transform_indices = @transform_8, window_bounds = array<i64: 1, 128>}, {transform_indices = @transform_9, window_bounds = array<i64: 16, 128>}]} {
    %c0 = arith.constant 0 : index
    %c0_0 = arith.constant 0 : index
    %c0_1 = arith.constant 0 : index
    %0 = vector.load %arg1[%c0, %c0_0, %c0_1] : memref<1x256x16xbf16, #tpu.memory_space<vmem>>, vector<1x256x16xbf16>
    %1 = vector.shape_cast %0 : vector<1x256x16xbf16> to vector<256x16xbf16>
    %c0_2 = arith.constant 0 : index
    %c0_3 = arith.constant 0 : index
    %2 = vector.load %arg2[%c0_2, %c0_3] : memref<16x32xbf16, #tpu.memory_space<vmem>>, vector<16x32xbf16>
    %cst = arith.constant dense<0.000000e+00> : vector<256x32xf32>
    %3 = tpu.matmul %1, %2, %cst {dimension_numbers = #tpu.dot_dimension_numbers<[1], [0], [0], [1], [0, 0, 1, 1], [], []>} : vector<256x16xbf16>, vector<16x32xbf16>, vector<256x32xf32> -> vector<256x32xf32>
    %c0_4 = arith.constant 0 : index
    %c0_5 = arith.constant 0 : index
    %4 = vector.load %arg4[%c0_4, %c0_5] : memref<1x32xf32, #tpu.memory_space<vmem>>, vector<1x32xf32>
    %5 = vector.broadcast %4 : vector<1x32xf32> to vector<256x32xf32>
    %6 = arith.addf %3, %5 : vector<256x32xf32>
    %c0_6 = arith.constant 0 : index
    %c0_7 = arith.constant 0 : index
    %7 = vector.load %arg11[%c0_6, %c0_7] : memref<256x32xf32, #tpu.memory_space<vmem>>, vector<256x32xf32>
    tpu.vector_store %arg11[%c0_6, %c0_7], %6 {strides = array<i32>} : memref<256x32xf32, #tpu.memory_space<vmem>>, vector<256x32xf32>,
    %c0_8 = arith.constant 0 : index
    %c0_9 = arith.constant 0 : index
    %8 = vector.load %arg3[%c0_8, %c0_9] : memref<32x32xbf16, #tpu.memory_space<vmem>>, vector<32x32xbf16>
    %c0_10 = arith.constant 0 : index
    %c0_11 = arith.constant 0 : index
    %9 = vector.load %arg6[%c0_10, %c0_11] : memref<32x32xbf16, #tpu.memory_space<vmem>>, vector<32x32xbf16>
    %c0_12 = arith.constant 0 : index
    %c0_13 = arith.constant 0 : index
    %10 = vector.load %arg5[%c0_12, %c0_13] : memref<32x32xbf16, #tpu.memory_space<vmem>>, vector<32x32xbf16>
    %c0_14 = arith.constant 0 : index
    %c0_15 = arith.constant 0 : index
    %11 = vector.load %arg7[%c0_14, %c0_15] : memref<1x32xf32, #tpu.memory_space<vmem>>, vector<1x32xf32>
    %cst_16 = arith.constant 0.000000e+00 : bf16
    %12 = vector.broadcast %cst_16 : bf16 to vector<16x32xbf16>
    %cst_17 = arith.constant 0.000000e+00 : bf16
    %13 = vector.broadcast %cst_17 : bf16 to vector<16x32xbf16>
    %c0_18 = arith.constant 0 : index
    %c0_19 = arith.constant 0 : index
    %14 = vector.load %arg11[%c0_18, %c0_19] : memref<256x32xf32, #tpu.memory_space<vmem>>, vector<16x32xf32>
    %cst_20 = arith.constant dense<0.000000e+00> : vector<16x32xf32>
    %15 = tpu.matmul %12, %8, %cst_20 {dimension_numbers = #tpu.dot_dimension_numbers<[1], [0], [0], [1], [0, 0, 1, 1], [], []>} : vector<16x32xbf16>, vector<32x32xbf16>, vector<16x32xf32> -> vector<16x32xf32>
    %16 = arith.addf %14, %15 : vector<16x32xf32>
    %17 = math.tanh %16 : vector<16x32xf32>
    %18 = arith.truncf %17 : vector<16x32xf32> to vector<16x32xbf16>
    %c16 = arith.constant 16 : index
    %c0_21 = arith.constant 0 : index
    %19 = vector.load %arg11[%c16, %c0_21] : memref<256x32xf32, #tpu.memory_space<vmem>>, vector<16x32xf32>
    %cst_22 = arith.constant dense<0.000000e+00> : vector<16x32xf32>
    %20 = tpu.matmul %18, %8, %cst_22 {dimension_numbers = #tpu.dot_dimension_numbers<[1], [0], [0], [1], [0, 0, 1, 1], [], []>} : vector<16x32xbf16>, vector<32x32xbf16>, vector<16x32xf32> -> vector<16x32xf32>
    %21 = arith.addf %19, %20 : vector<16x32xf32>
    %22 = math.tanh %21 : vector<16x32xf32>
    %23 = arith.truncf %22 : vector<16x32xf32> to vector<16x32xbf16>
    %cst_23 = arith.constant dense<0.000000e+00> : vector<16x32xf32>
    %24 = tpu.matmul %18, %10, %cst_23 {dimension_numbers = #tpu.dot_dimension_numbers<[1], [0], [0], [1], [0, 0, 1, 1], [], []>} : vector<16x32xbf16>, vector<32x32xbf16>, vector<16x32xf32> -> vector<16x32xf32>
    %25 = vector.broadcast %11 : vector<1x32xf32> to vector<16x32xf32>
    %26 = arith.addf %24, %25 : vector<16x32xf32>
    %cst_24 = arith.constant dense<0.000000e+00> : vector<16x32xf32>
    %27 = tpu.matmul %13, %9, %cst_24 {dimension_numbers = #tpu.dot_dimension_numbers<[1], [0], [0], [1], [0, 0, 1, 1], [], []>} : vector<16x32xbf16>, vector<32x32xbf16>, vector<16x32xf32> -> vector<16x32xf32>
    %28 = arith.addf %26, %27 : vector<16x32xf32>
    %29 = math.tanh %28 : vector<16x32xf32>
    %30 = arith.truncf %29 : vector<16x32xf32> to vector<16x32xbf16>
    %c32 = arith.constant 32 : index
    %c0_25 = arith.constant 0 : index
    %31 = vector.load %arg11[%c32, %c0_25] : memref<256x32xf32, #tpu.memory_space<vmem>>, vector<16x32xf32>
    %cst_26 = arith.constant dense<0.000000e+00> : vector<16x32xf32>
    %32 = tpu.matmul %23, %8, %cst_26 {dimension_numbers = #tpu.dot_dimension_numbers<[1], [0], [0], [1], [0, 0, 1, 1], [], []>} : vector<16x32xbf16>, vector<32x32xbf16>, vector<16x32xf32> -> vector<16x32xf32>
    %33 = arith.addf %31, %32 : vector<16x32xf32>
    %34 = math.tanh %33 : vector<16x32xf32>
    %35 = arith.truncf %34 : vector<16x32xf32> to vector<16x32xbf16>
    %cst_27 = arith.constant dense<0.000000e+00> : vector<16x32xf32>
    %36 = tpu.matmul %23, %10, %cst_27 {dimension_numbers = #tpu.dot_dimension_numbers<[1], [0], [0], [1], [0, 0, 1, 1], [], []>} : vector<16x32xbf16>, vector<32x32xbf16>, vector<16x32xf32> -> vector<16x32xf32>
    %37 = vector.broadcast %11 : vector<1x32xf32> to vector<16x32xf32>
    %38 = arith.addf %36, %37 : vector<16x32xf32>
    %cst_28 = arith.constant dense<0.000000e+00> : vector<16x32xf32>
    %39 = tpu.matmul %30, %9, %cst_28 {dimension_numbers = #tpu.dot_dimension_numbers<[1], [0], [0], [1], [0, 0, 1, 1], [], []>} : vector<16x32xbf16>, vector<32x32xbf16>, vector<16x32xf32> -> vector<16x32xf32>
    %40 = arith.addf %38, %39 : vector<16x32xf32>
    %41 = math.tanh %40 : vector<16x32xf32>
    %42 = arith.truncf %41 : vector<16x32xf32> to vector<16x32xbf16>
    %c48 = arith.constant 48 : index
    %c0_29 = arith.constant 0 : index
    %43 = vector.load %arg11[%c48, %c0_29] : memref<256x32xf32, #tpu.memory_space<vmem>>, vector<16x32xf32>
    %cst_30 = arith.constant dense<0.000000e+00> : vector<16x32xf32>
    %44 = tpu.matmul %35, %8, %cst_30 {dimension_numbers = #tpu.dot_dimension_numbers<[1], [0], [0], [1], [0, 0, 1, 1], [], []>} : vector<16x32xbf16>, vector<32x32xbf16>, vector<16x32xf32> -> vector<16x32xf32>
    %45 = arith.addf %43, %44 : vector<16x32xf32>
    %46 = math.tanh %45 : vector<16x32xf32>
    %47 = arith.truncf %46 : vector<16x32xf32> to vector<16x32xbf16>
    %cst_31 = arith.constant dense<0.000000e+00> : vector<16x32xf32>
    %48 = tpu.matmul %35, %10, %cst_31 {dimension_numbers = #tpu.dot_dimension_numbers<[1], [0], [0], [1], [0, 0, 1, 1], [], []>} : vector<16x32xbf16>, vector<32x32xbf16>, vector<16x32xf32> -> vector<16x32xf32>
    %49 = vector.broadcast %11 : vector<1x32xf32> to vector<16x32xf32>
    %50 = arith.addf %48, %49 : vector<16x32xf32>
    %cst_32 = arith.constant dense<0.000000e+00> : vector<16x32xf32>
    %51 = tpu.matmul %42, %9, %cst_32 {dimension_numbers = #tpu.dot_dimension_numbers<[1], [0], [0], [1], [0, 0, 1, 1], [], []>} : vector<16x32xbf16>, vector<32x32xbf16>, vector<16x32xf32> -> vector<16x32xf32>
    %52 = arith.addf %50, %51 : vector<16x32xf32>
    %53 = math.tanh %52 : vector<16x32xf32>
    %54 = arith.truncf %53 : vector<16x32xf32> to vector<16x32xbf16>
    %c64 = arith.constant 64 : index
    %c0_33 = arith.constant 0 : index
    %55 = vector.load %arg11[%c64, %c0_33] : memref<256x32xf32, #tpu.memory_space<vmem>>, vector<16x32xf32>
    %cst_34 = arith.constant dense<0.000000e+00> : vector<16x32xf32>
    %56 = tpu.matmul %47, %8, %cst_34 {dimension_numbers = #tpu.dot_dimension_numbers<[1], [0], [0], [1], [0, 0, 1, 1], [], []>} : vector<16x32xbf16>, vector<32x32xbf16>, vector<16x32xf32> -> vector<16x32xf32>
    %57 = arith.addf %55, %56 : vector<16x32xf32>
    %58 = math.tanh %57 : vector<16x32xf32>
    %59 = arith.truncf %58 : vector<16x32xf32> to vector<16x32xbf16>
    %cst_35 = arith.constant dense<0.000000e+00> : vector<16x32xf32>
    %60 = tpu.matmul %47, %10, %cst_35 {dimension_numbers = #tpu.dot_dimension_numbers<[1], [0], [0], [1], [0, 0, 1, 1], [], []>} : vector<16x32xbf16>, vector<32x32xbf16>, vector<16x32xf32> -> vector<16x32xf32>
    %61 = vector.broadcast %11 : vector<1x32xf32> to vector<16x32xf32>
    %62 = arith.addf %60, %61 : vector<16x32xf32>
    %cst_36 = arith.constant dense<0.000000e+00> : vector<16x32xf32>
    %63 = tpu.matmul %54, %9, %cst_36 {dimension_numbers = #tpu.dot_dimension_numbers<[1], [0], [0], [1], [0, 0, 1, 1], [], []>} : vector<16x32xbf16>, vector<32x32xbf16>, vector<16x32xf32> -> vector<16x32xf32>
    %64 = arith.addf %62, %63 : vector<16x32xf32>
    %65 = math.tanh %64 : vector<16x32xf32>
    %66 = arith.truncf %65 : vector<16x32xf32> to vector<16x32xbf16>
    %c80 = arith.constant 80 : index
    %c0_37 = arith.constant 0 : index
    %67 = vector.load %arg11[%c80, %c0_37] : memref<256x32xf32, #tpu.memory_space<vmem>>, vector<16x32xf32>
    %cst_38 = arith.constant dense<0.000000e+00> : vector<16x32xf32>
    %68 = tpu.matmul %59, %8, %cst_38 {dimension_numbers = #tpu.dot_dimension_numbers<[1], [0], [0], [1], [0, 0, 1, 1], [], []>} : vector<16x32xbf16>, vector<32x32xbf16>, vector<16x32xf32> -> vector<16x32xf32>
    %69 = arith.addf %67, %68 : vector<16x32xf32>
    %70 = math.tanh %69 : vector<16x32xf32>
    %71 = arith.truncf %70 : vector<16x32xf32> to vector<16x32xbf16>
    %cst_39 = arith.constant dense<0.000000e+00> : vector<16x32xf32>
    %72 = tpu.matmul %59, %10, %cst_39 {dimension_numbers = #tpu.dot_dimension_numbers<[1], [0], [0], [1], [0, 0, 1, 1], [], []>} : vector<16x32xbf16>, vector<32x32xbf16>, vector<16x32xf32> -> vector<16x32xf32>
    %73 = vector.broadcast %11 : vector<1x32xf32> to vector<16x32xf32>
    %74 = arith.addf %72, %73 : vector<16x32xf32>
    %cst_40 = arith.constant dense<0.000000e+00> : vector<16x32xf32>
    %75 = tpu.matmul %66, %9, %cst_40 {dimension_numbers = #tpu.dot_dimension_numbers<[1], [0], [0], [1], [0, 0, 1, 1], [], []>} : vector<16x32xbf16>, vector<32x32xbf16>, vector<16x32xf32> -> vector<16x32xf32>
    %76 = arith.addf %74, %75 : vector<16x32xf32>
    %77 = math.tanh %76 : vector<16x32xf32>
    %78 = arith.truncf %77 : vector<16x32xf32> to vector<16x32xbf16>
    %c96 = arith.constant 96 : index
    %c0_41 = arith.constant 0 : index
    %79 = vector.load %arg11[%c96, %c0_41] : memref<256x32xf32, #tpu.memory_space<vmem>>, vector<16x32xf32>
    %cst_42 = arith.constant dense<0.000000e+00> : vector<16x32xf32>
    %80 = tpu.matmul %71, %8, %cst_42 {dimension_numbers = #tpu.dot_dimension_numbers<[1], [0], [0], [1], [0, 0, 1, 1], [], []>} : vector<16x32xbf16>, vector<32x32xbf16>, vector<16x32xf32> -> vector<16x32xf32>
    %81 = arith.addf %79, %80 : vector<16x32xf32>
    %82 = math.tanh %81 : vector<16x32xf32>
    %83 = arith.truncf %82 : vector<16x32xf32> to vector<16x32xbf16>
    %cst_43 = arith.constant dense<0.000000e+00> : vector<16x32xf32>
    %84 = tpu.matmul %71, %10, %cst_43 {dimension_numbers = #tpu.dot_dimension_numbers<[1], [0], [0], [1], [0, 0, 1, 1], [], []>} : vector<16x32xbf16>, vector<32x32xbf16>, vector<16x32xf32> -> vector<16x32xf32>
    %85 = vector.broadcast %11 : vector<1x32xf32> to vector<16x32xf32>
    %86 = arith.addf %84, %85 : vector<16x32xf32>
    %cst_44 = arith.constant dense<0.000000e+00> : vector<16x32xf32>
    %87 = tpu.matmul %78, %9, %cst_44 {dimension_numbers = #tpu.dot_dimension_numbers<[1], [0], [0], [1], [0, 0, 1, 1], [], []>} : vector<16x32xbf16>, vector<32x32xbf16>, vector<16x32xf32> -> vector<16x32xf32>
    %88 = arith.addf %86, %87 : vector<16x32xf32>
    %89 = math.tanh %88 : vector<16x32xf32>
    %90 = arith.truncf %89 : vector<16x32xf32> to vector<16x32xbf16>
    %c112 = arith.constant 112 : index
    %c0_45 = arith.constant 0 : index
    %91 = vector.load %arg11[%c112, %c0_45] : memref<256x32xf32, #tpu.memory_space<vmem>>, vector<16x32xf32>
    %cst_46 = arith.constant dense<0.000000e+00> : vector<16x32xf32>
    %92 = tpu.matmul %83, %8, %cst_46 {dimension_numbers = #tpu.dot_dimension_numbers<[1], [0], [0], [1], [0, 0, 1, 1], [], []>} : vector<16x32xbf16>, vector<32x32xbf16>, vector<16x32xf32> -> vector<16x32xf32>
    %93 = arith.addf %91, %92 : vector<16x32xf32>
    %94 = math.tanh %93 : vector<16x32xf32>
    %95 = arith.truncf %94 : vector<16x32xf32> to vector<16x32xbf16>
    %cst_47 = arith.constant dense<0.000000e+00> : vector<16x32xf32>
    %96 = tpu.matmul %83, %10, %cst_47 {dimension_numbers = #tpu.dot_dimension_numbers<[1], [0], [0], [1], [0, 0, 1, 1], [], []>} : vector<16x32xbf16>, vector<32x32xbf16>, vector<16x32xf32> -> vector<16x32xf32>
    %97 = vector.broadcast %11 : vector<1x32xf32> to vector<16x32xf32>
    %98 = arith.addf %96, %97 : vector<16x32xf32>
    %cst_48 = arith.constant dense<0.000000e+00> : vector<16x32xf32>
    %99 = tpu.matmul %90, %9, %cst_48 {dimension_numbers = #tpu.dot_dimension_numbers<[1], [0], [0], [1], [0, 0, 1, 1], [], []>} : vector<16x32xbf16>, vector<32x32xbf16>, vector<16x32xf32> -> vector<16x32xf32>
    %100 = arith.addf %98, %99 : vector<16x32xf32>
    %101 = math.tanh %100 : vector<16x32xf32>
    %102 = arith.truncf %101 : vector<16x32xf32> to vector<16x32xbf16>
    %c128 = arith.constant 128 : index
    %c0_49 = arith.constant 0 : index
    %103 = vector.load %arg11[%c128, %c0_49] : memref<256x32xf32, #tpu.memory_space<vmem>>, vector<16x32xf32>
    %cst_50 = arith.constant dense<0.000000e+00> : vector<16x32xf32>
    %104 = tpu.matmul %95, %8, %cst_50 {dimension_numbers = #tpu.dot_dimension_numbers<[1], [0], [0], [1], [0, 0, 1, 1], [], []>} : vector<16x32xbf16>, vector<32x32xbf16>, vector<16x32xf32> -> vector<16x32xf32>
    %105 = arith.addf %103, %104 : vector<16x32xf32>
    %106 = math.tanh %105 : vector<16x32xf32>
    %107 = arith.truncf %106 : vector<16x32xf32> to vector<16x32xbf16>
    %cst_51 = arith.constant dense<0.000000e+00> : vector<16x32xf32>
    %108 = tpu.matmul %95, %10, %cst_51 {dimension_numbers = #tpu.dot_dimension_numbers<[1], [0], [0], [1], [0, 0, 1, 1], [], []>} : vector<16x32xbf16>, vector<32x32xbf16>, vector<16x32xf32> -> vector<16x32xf32>
    %109 = vector.broadcast %11 : vector<1x32xf32> to vector<16x32xf32>
    %110 = arith.addf %108, %109 : vector<16x32xf32>
    %cst_52 = arith.constant dense<0.000000e+00> : vector<16x32xf32>
    %111 = tpu.matmul %102, %9, %cst_52 {dimension_numbers = #tpu.dot_dimension_numbers<[1], [0], [0], [1], [0, 0, 1, 1], [], []>} : vector<16x32xbf16>, vector<32x32xbf16>, vector<16x32xf32> -> vector<16x32xf32>
    %112 = arith.addf %110, %111 : vector<16x32xf32>
    %113 = math.tanh %112 : vector<16x32xf32>
    %114 = arith.truncf %113 : vector<16x32xf32> to vector<16x32xbf16>
    %c144 = arith.constant 144 : index
    %c0_53 = arith.constant 0 : index
    %115 = vector.load %arg11[%c144, %c0_53] : memref<256x32xf32, #tpu.memory_space<vmem>>, vector<16x32xf32>
    %cst_54 = arith.constant dense<0.000000e+00> : vector<16x32xf32>
    %116 = tpu.matmul %107, %8, %cst_54 {dimension_numbers = #tpu.dot_dimension_numbers<[1], [0], [0], [1], [0, 0, 1, 1], [], []>} : vector<16x32xbf16>, vector<32x32xbf16>, vector<16x32xf32> -> vector<16x32xf32>
    %117 = arith.addf %115, %116 : vector<16x32xf32>
    %118 = math.tanh %117 : vector<16x32xf32>
    %119 = arith.truncf %118 : vector<16x32xf32> to vector<16x32xbf16>
    %cst_55 = arith.constant dense<0.000000e+00> : vector<16x32xf32>
    %120 = tpu.matmul %107, %10, %cst_55 {dimension_numbers = #tpu.dot_dimension_numbers<[1], [0], [0], [1], [0, 0, 1, 1], [], []>} : vector<16x32xbf16>, vector<32x32xbf16>, vector<16x32xf32> -> vector<16x32xf32>
    %121 = vector.broadcast %11 : vector<1x32xf32> to vector<16x32xf32>
    %122 = arith.addf %120, %121 : vector<16x32xf32>
    %cst_56 = arith.constant dense<0.000000e+00> : vector<16x32xf32>
    %123 = tpu.matmul %114, %9, %cst_56 {dimension_numbers = #tpu.dot_dimension_numbers<[1], [0], [0], [1], [0, 0, 1, 1], [], []>} : vector<16x32xbf16>, vector<32x32xbf16>, vector<16x32xf32> -> vector<16x32xf32>
    %124 = arith.addf %122, %123 : vector<16x32xf32>
    %125 = math.tanh %124 : vector<16x32xf32>
    %126 = arith.truncf %125 : vector<16x32xf32> to vector<16x32xbf16>
    %c160 = arith.constant 160 : index
    %c0_57 = arith.constant 0 : index
    %127 = vector.load %arg11[%c160, %c0_57] : memref<256x32xf32, #tpu.memory_space<vmem>>, vector<16x32xf32>
    %cst_58 = arith.constant dense<0.000000e+00> : vector<16x32xf32>
    %128 = tpu.matmul %119, %8, %cst_58 {dimension_numbers = #tpu.dot_dimension_numbers<[1], [0], [0], [1], [0, 0, 1, 1], [], []>} : vector<16x32xbf16>, vector<32x32xbf16>, vector<16x32xf32> -> vector<16x32xf32>
    %129 = arith.addf %127, %128 : vector<16x32xf32>
    %130 = math.tanh %129 : vector<16x32xf32>
    %131 = arith.truncf %130 : vector<16x32xf32> to vector<16x32xbf16>
    %cst_59 = arith.constant dense<0.000000e+00> : vector<16x32xf32>
    %132 = tpu.matmul %119, %10, %cst_59 {dimension_numbers = #tpu.dot_dimension_numbers<[1], [0], [0], [1], [0, 0, 1, 1], [], []>} : vector<16x32xbf16>, vector<32x32xbf16>, vector<16x32xf32> -> vector<16x32xf32>
    %133 = vector.broadcast %11 : vector<1x32xf32> to vector<16x32xf32>
    %134 = arith.addf %132, %133 : vector<16x32xf32>
    %cst_60 = arith.constant dense<0.000000e+00> : vector<16x32xf32>
    %135 = tpu.matmul %126, %9, %cst_60 {dimension_numbers = #tpu.dot_dimension_numbers<[1], [0], [0], [1], [0, 0, 1, 1], [], []>} : vector<16x32xbf16>, vector<32x32xbf16>, vector<16x32xf32> -> vector<16x32xf32>
    %136 = arith.addf %134, %135 : vector<16x32xf32>
    %137 = math.tanh %136 : vector<16x32xf32>
    %138 = arith.truncf %137 : vector<16x32xf32> to vector<16x32xbf16>
    %c176 = arith.constant 176 : index
    %c0_61 = arith.constant 0 : index
    %139 = vector.load %arg11[%c176, %c0_61] : memref<256x32xf32, #tpu.memory_space<vmem>>, vector<16x32xf32>
    %cst_62 = arith.constant dense<0.000000e+00> : vector<16x32xf32>
    %140 = tpu.matmul %131, %8, %cst_62 {dimension_numbers = #tpu.dot_dimension_numbers<[1], [0], [0], [1], [0, 0, 1, 1], [], []>} : vector<16x32xbf16>, vector<32x32xbf16>, vector<16x32xf32> -> vector<16x32xf32>
    %141 = arith.addf %139, %140 : vector<16x32xf32>
    %142 = math.tanh %141 : vector<16x32xf32>
    %143 = arith.truncf %142 : vector<16x32xf32> to vector<16x32xbf16>
    %cst_63 = arith.constant dense<0.000000e+00> : vector<16x32xf32>
    %144 = tpu.matmul %131, %10, %cst_63 {dimension_numbers = #tpu.dot_dimension_numbers<[1], [0], [0], [1], [0, 0, 1, 1], [], []>} : vector<16x32xbf16>, vector<32x32xbf16>, vector<16x32xf32> -> vector<16x32xf32>
    %145 = vector.broadcast %11 : vector<1x32xf32> to vector<16x32xf32>
    %146 = arith.addf %144, %145 : vector<16x32xf32>
    %cst_64 = arith.constant dense<0.000000e+00> : vector<16x32xf32>
    %147 = tpu.matmul %138, %9, %cst_64 {dimension_numbers = #tpu.dot_dimension_numbers<[1], [0], [0], [1], [0, 0, 1, 1], [], []>} : vector<16x32xbf16>, vector<32x32xbf16>, vector<16x32xf32> -> vector<16x32xf32>
    %148 = arith.addf %146, %147 : vector<16x32xf32>
    %149 = math.tanh %148 : vector<16x32xf32>
    %150 = arith.truncf %149 : vector<16x32xf32> to vector<16x32xbf16>
    %c192 = arith.constant 192 : index
    %c0_65 = arith.constant 0 : index
    %151 = vector.load %arg11[%c192, %c0_65] : memref<256x32xf32, #tpu.memory_space<vmem>>, vector<16x32xf32>
    %cst_66 = arith.constant dense<0.000000e+00> : vector<16x32xf32>
    %152 = tpu.matmul %143, %8, %cst_66 {dimension_numbers = #tpu.dot_dimension_numbers<[1], [0], [0], [1], [0, 0, 1, 1], [], []>} : vector<16x32xbf16>, vector<32x32xbf16>, vector<16x32xf32> -> vector<16x32xf32>
    %153 = arith.addf %151, %152 : vector<16x32xf32>
    %154 = math.tanh %153 : vector<16x32xf32>
    %155 = arith.truncf %154 : vector<16x32xf32> to vector<16x32xbf16>
    %cst_67 = arith.constant dense<0.000000e+00> : vector<16x32xf32>
    %156 = tpu.matmul %143, %10, %cst_67 {dimension_numbers = #tpu.dot_dimension_numbers<[1], [0], [0], [1], [0, 0, 1, 1], [], []>} : vector<16x32xbf16>, vector<32x32xbf16>, vector<16x32xf32> -> vector<16x32xf32>
    %157 = vector.broadcast %11 : vector<1x32xf32> to vector<16x32xf32>
    %158 = arith.addf %156, %157 : vector<16x32xf32>
    %cst_68 = arith.constant dense<0.000000e+00> : vector<16x32xf32>
    %159 = tpu.matmul %150, %9, %cst_68 {dimension_numbers = #tpu.dot_dimension_numbers<[1], [0], [0], [1], [0, 0, 1, 1], [], []>} : vector<16x32xbf16>, vector<32x32xbf16>, vector<16x32xf32> -> vector<16x32xf32>
    %160 = arith.addf %158, %159 : vector<16x32xf32>
    %161 = math.tanh %160 : vector<16x32xf32>
    %162 = arith.truncf %161 : vector<16x32xf32> to vector<16x32xbf16>
    %c208 = arith.constant 208 : index
    %c0_69 = arith.constant 0 : index
    %163 = vector.load %arg11[%c208, %c0_69] : memref<256x32xf32, #tpu.memory_space<vmem>>, vector<16x32xf32>
    %cst_70 = arith.constant dense<0.000000e+00> : vector<16x32xf32>
    %164 = tpu.matmul %155, %8, %cst_70 {dimension_numbers = #tpu.dot_dimension_numbers<[1], [0], [0], [1], [0, 0, 1, 1], [], []>} : vector<16x32xbf16>, vector<32x32xbf16>, vector<16x32xf32> -> vector<16x32xf32>
    %165 = arith.addf %163, %164 : vector<16x32xf32>
    %166 = math.tanh %165 : vector<16x32xf32>
    %167 = arith.truncf %166 : vector<16x32xf32> to vector<16x32xbf16>
    %cst_71 = arith.constant dense<0.000000e+00> : vector<16x32xf32>
    %168 = tpu.matmul %155, %10, %cst_71 {dimension_numbers = #tpu.dot_dimension_numbers<[1], [0], [0], [1], [0, 0, 1, 1], [], []>} : vector<16x32xbf16>, vector<32x32xbf16>, vector<16x32xf32> -> vector<16x32xf32>
    %169 = vector.broadcast %11 : vector<1x32xf32> to vector<16x32xf32>
    %170 = arith.addf %168, %169 : vector<16x32xf32>
    %cst_72 = arith.constant dense<0.000000e+00> : vector<16x32xf32>
    %171 = tpu.matmul %162, %9, %cst_72 {dimension_numbers = #tpu.dot_dimension_numbers<[1], [0], [0], [1], [0, 0, 1, 1], [], []>} : vector<16x32xbf16>, vector<32x32xbf16>, vector<16x32xf32> -> vector<16x32xf32>
    %172 = arith.addf %170, %171 : vector<16x32xf32>
    %173 = math.tanh %172 : vector<16x32xf32>
    %174 = arith.truncf %173 : vector<16x32xf32> to vector<16x32xbf16>
    %c224 = arith.constant 224 : index
    %c0_73 = arith.constant 0 : index
    %175 = vector.load %arg11[%c224, %c0_73] : memref<256x32xf32, #tpu.memory_space<vmem>>, vector<16x32xf32>
    %cst_74 = arith.constant dense<0.000000e+00> : vector<16x32xf32>
    %176 = tpu.matmul %167, %8, %cst_74 {dimension_numbers = #tpu.dot_dimension_numbers<[1], [0], [0], [1], [0, 0, 1, 1], [], []>} : vector<16x32xbf16>, vector<32x32xbf16>, vector<16x32xf32> -> vector<16x32xf32>
    %177 = arith.addf %175, %176 : vector<16x32xf32>
    %178 = math.tanh %177 : vector<16x32xf32>
    %179 = arith.truncf %178 : vector<16x32xf32> to vector<16x32xbf16>
    %cst_75 = arith.constant dense<0.000000e+00> : vector<16x32xf32>
    %180 = tpu.matmul %167, %10, %cst_75 {dimension_numbers = #tpu.dot_dimension_numbers<[1], [0], [0], [1], [0, 0, 1, 1], [], []>} : vector<16x32xbf16>, vector<32x32xbf16>, vector<16x32xf32> -> vector<16x32xf32>
    %181 = vector.broadcast %11 : vector<1x32xf32> to vector<16x32xf32>
    %182 = arith.addf %180, %181 : vector<16x32xf32>
    %cst_76 = arith.constant dense<0.000000e+00> : vector<16x32xf32>
    %183 = tpu.matmul %174, %9, %cst_76 {dimension_numbers = #tpu.dot_dimension_numbers<[1], [0], [0], [1], [0, 0, 1, 1], [], []>} : vector<16x32xbf16>, vector<32x32xbf16>, vector<16x32xf32> -> vector<16x32xf32>
    %184 = arith.addf %182, %183 : vector<16x32xf32>
    %185 = math.tanh %184 : vector<16x32xf32>
    %186 = arith.truncf %185 : vector<16x32xf32> to vector<16x32xbf16>
    %c240 = arith.constant 240 : index
    %c0_77 = arith.constant 0 : index
    %187 = vector.load %arg11[%c240, %c0_77] : memref<256x32xf32, #tpu.memory_space<vmem>>, vector<16x32xf32>
    %cst_78 = arith.constant dense<0.000000e+00> : vector<16x32xf32>
    %188 = tpu.matmul %179, %8, %cst_78 {dimension_numbers = #tpu.dot_dimension_numbers<[1], [0], [0], [1], [0, 0, 1, 1], [], []>} : vector<16x32xbf16>, vector<32x32xbf16>, vector<16x32xf32> -> vector<16x32xf32>
    %189 = arith.addf %187, %188 : vector<16x32xf32>
    %190 = math.tanh %189 : vector<16x32xf32>
    %191 = arith.truncf %190 : vector<16x32xf32> to vector<16x32xbf16>
    %cst_79 = arith.constant dense<0.000000e+00> : vector<16x32xf32>
    %192 = tpu.matmul %179, %10, %cst_79 {dimension_numbers = #tpu.dot_dimension_numbers<[1], [0], [0], [1], [0, 0, 1, 1], [], []>} : vector<16x32xbf16>, vector<32x32xbf16>, vector<16x32xf32> -> vector<16x32xf32>
    %193 = vector.broadcast %11 : vector<1x32xf32> to vector<16x32xf32>
    %194 = arith.addf %192, %193 : vector<16x32xf32>
    %cst_80 = arith.constant dense<0.000000e+00> : vector<16x32xf32>
    %195 = tpu.matmul %186, %9, %cst_80 {dimension_numbers = #tpu.dot_dimension_numbers<[1], [0], [0], [1], [0, 0, 1, 1], [], []>} : vector<16x32xbf16>, vector<32x32xbf16>, vector<16x32xf32> -> vector<16x32xf32>
    %196 = arith.addf %194, %195 : vector<16x32xf32>
    %197 = math.tanh %196 : vector<16x32xf32>
    %198 = arith.truncf %197 : vector<16x32xf32> to vector<16x32xbf16>
    %cst_81 = arith.constant dense<0.000000e+00> : vector<16x32xf32>
    %199 = tpu.matmul %191, %10, %cst_81 {dimension_numbers = #tpu.dot_dimension_numbers<[1], [0], [0], [1], [0, 0, 1, 1], [], []>} : vector<16x32xbf16>, vector<32x32xbf16>, vector<16x32xf32> -> vector<16x32xf32>
    %200 = vector.broadcast %11 : vector<1x32xf32> to vector<16x32xf32>
    %201 = arith.addf %199, %200 : vector<16x32xf32>
    %cst_82 = arith.constant dense<0.000000e+00> : vector<16x32xf32>
    %202 = tpu.matmul %198, %9, %cst_82 {dimension_numbers = #tpu.dot_dimension_numbers<[1], [0], [0], [1], [0, 0, 1, 1], [], []>} : vector<16x32xbf16>, vector<32x32xbf16>, vector<16x32xf32> -> vector<16x32xf32>
    %203 = arith.addf %201, %202 : vector<16x32xf32>
    %204 = math.tanh %203 : vector<16x32xf32>
    %c0_83 = arith.constant 0 : index
    %c0_84 = arith.constant 0 : index
    %205 = vector.load %arg8[%c0_83, %c0_84] : memref<32x128xf32, #tpu.memory_space<vmem>>, vector<32x128xf32>
    %cst_85 = arith.constant dense<0.000000e+00> : vector<16x128xf32>
    %206 = tpu.matmul %204, %205, %cst_85 {dimension_numbers = #tpu.dot_dimension_numbers<[1], [0], [0], [1], [0, 0, 1, 1], [], []>} : vector<16x32xf32>, vector<32x128xf32>, vector<16x128xf32> -> vector<16x128xf32>
    %c0_86 = arith.constant 0 : index
    %c0_87 = arith.constant 0 : index
    %207 = vector.load %arg9[%c0_86, %c0_87] : memref<1x128xf32, #tpu.memory_space<vmem>>, vector<1x128xf32>
    %208 = vector.broadcast %207 : vector<1x128xf32> to vector<16x128xf32>
    %209 = arith.addf %206, %208 : vector<16x128xf32>
    %c0_88 = arith.constant 0 : index
    %c0_89 = arith.constant 0 : index
    %210 = vector.load %arg10[%c0_88, %c0_89] : memref<16x128xf32, #tpu.memory_space<vmem>>, vector<16x128xf32>
    tpu.vector_store %arg10[%c0_88, %c0_89], %209 {strides = array<i32>} : memref<16x128xf32, #tpu.memory_space<vmem>>, vector<16x128xf32>,
    return
  }
  func.func @transform_0(%arg0: i32) -> (i32, i32, i32) {
    %c0_i32 = arith.constant 0 : i32
    %c0_i32_0 = arith.constant 0 : i32
    %c0_i32_1 = arith.constant 0 : i32
    return %arg0, %c0_i32, %c0_i32_0 : i32, i32, i32
  }
  func.func @transform_1(%arg0: i32) -> (i32, i32) {
    %c0_i32 = arith.constant 0 : i32
    %c0_i32_0 = arith.constant 0 : i32
    %c0_i32_1 = arith.constant 0 : i32
    return %c0_i32, %c0_i32_0 : i32, i32
  }
  func.func @transform_2(%arg0: i32) -> (i32, i32) {
    %c0_i32 = arith.constant 0 : i32
    %c0_i32_0 = arith.constant 0 : i32
    %c0_i32_1 = arith.constant 0 : i32
    return %c0_i32, %c0_i32_0 : i32, i32
  }
  func.func @transform_3(%arg0: i32) -> (i32, i32) {
    %c0_i32 = arith.constant 0 : i32
    %c0_i32_0 = arith.constant 0 : i32
    %c0_i32_1 = arith.constant 0 : i32
    return %c0_i32, %c0_i32_0 : i32, i32
  }
  func.func @transform_4(%arg0: i32) -> (i32, i32) {
    %c0_i32 = arith.constant 0 : i32
    %c0_i32_0 = arith.constant 0 : i32
    %c0_i32_1 = arith.constant 0 : i32
    return %c0_i32, %c0_i32_0 : i32, i32
  }
  func.func @transform_5(%arg0: i32) -> (i32, i32) {
    %c0_i32 = arith.constant 0 : i32
    %c0_i32_0 = arith.constant 0 : i32
    %c0_i32_1 = arith.constant 0 : i32
    return %c0_i32, %c0_i32_0 : i32, i32
  }
  func.func @transform_6(%arg0: i32) -> (i32, i32) {
    %c0_i32 = arith.constant 0 : i32
    %c0_i32_0 = arith.constant 0 : i32
    %c0_i32_1 = arith.constant 0 : i32
    return %c0_i32, %c0_i32_0 : i32, i32
  }
  func.func @transform_7(%arg0: i32) -> (i32, i32) {
    %c0_i32 = arith.constant 0 : i32
    %c0_i32_0 = arith.constant 0 : i32
    %c0_i32_1 = arith.constant 0 : i32
    return %c0_i32, %c0_i32_0 : i32, i32
  }
  func.func @transform_8(%arg0: i32) -> (i32, i32) {
    %c0_i32 = arith.constant 0 : i32
    %c0_i32_0 = arith.constant 0 : i32
    %c0_i32_1 = arith.constant 0 : i32
    return %c0_i32, %c0_i32_0 : i32, i32
  }
  func.func @transform_9(%arg0: i32) -> (i32, i32) {
    %c0_i32 = arith.constant 0 : i32
    %c0_i32_0 = arith.constant 0 : i32
    return %arg0, %c0_i32 : i32, i32
  }
}

</mosaic_0001>

<llo_original>
// kernel: tpu_custom_call.1
$region0: #{tpu_custom_call.1}
  #allocation0 [shape = 'u32[]', space=smem, size = 0x4, offset = 0x4, fixed_abs, tag = 'smem constant byte address 0x4 - core index']
  #allocation1 [shape = 'u32[144,128]{1,0:T(1,128)}', space=vmem, size = 0x12000, scoped, tag = 'internal scratch']
  #allocation2 [shape = 'f32[256,32]{1,0:T(8,128)}', space=vmem, size = 0x20000, scoped, tag = 'scratch operand']
  %s0 = inlined_call_operand.vmem [shape: bf16[1,256,16], index: 0, kind: input, shape index: {}]
  %s1 = inlined_call_operand.vmem [shape: bf16[16,32], index: 1, kind: input, shape index: {}]
  %s2 = inlined_call_operand.vmem [shape: bf16[32,32], index: 2, kind: input, shape index: {}]
  %s3 = inlined_call_operand.vmem [shape: f32[1,32], index: 3, kind: input, shape index: {}]
  %s4 = inlined_call_operand.vmem [shape: bf16[32,32], index: 4, kind: input, shape index: {}]
  %s5 = inlined_call_operand.vmem [shape: bf16[32,32], index: 5, kind: input, shape index: {}]
  %s6 = inlined_call_operand.vmem [shape: f32[1,32], index: 6, kind: input, shape index: {}]
  %s7 = inlined_call_operand.vmem [shape: f32[32,128], index: 7, kind: input, shape index: {}]
  %s8 = inlined_call_operand.vmem [shape: f32[1,128], index: 8, kind: input, shape index: {}]
  %s9 = inlined_call_operand.hbm [shape: f32[16,128], index: 9, kind: output, shape index: {}]
  %s10 = sld [smem:[#allocation0]]
  $region46: #{tpu_custom_call.1} parent=0
    _
  %s12 = ssub.s32 1, %s10
  %s13 = scalar_select 0, %s12, %s10
  $region1: #{tpu_custom_call.1} parent=0
    #allocation3 [shape = 'u8[8192]{0}', space=vmem, size = 0x2000, scoped, tag = 'output window, operand 0, single buffered']
    #allocation4 [shape = 's32[1]{0}', space=sflag, size = 0x4, scoped, tag = 'scoped memory for tpu_custom_call.1']
    %14 = vsyncpa [#allocation4], 0
    // Predicated region
    $region2: #{tpu_custom_call.1} parent=1 // pred_check
      _
    $region3: #{tpu_custom_call.1} parent=1 // pred_check_branch
      %16 = sbr.rel (0) target = $region5
    $region4: #{tpu_custom_call.1} parent=1 // pred_region
      _
    $region5: #{tpu_custom_call.1} parent=1 // pred_fallthru
      _
    // Predicated region
    $region6: #{tpu_custom_call.1} parent=1 // pred_check
      _
    $region7: #{tpu_custom_call.1} parent=1 // pred_check_branch
      %18 = sbr.rel (0) target = $region9
    $region8: #{tpu_custom_call.1} parent=1 // pred_region
      _
    $region9: #{tpu_custom_call.1} parent=1 // pred_fallthru
      _
    // Predicated region
    $region10: #{tpu_custom_call.1} parent=1 // pred_check
      _
    $region11: #{tpu_custom_call.1} parent=1 // pred_check_branch
      %20 = sbr.rel (0) target = $region13
    $region12: #{tpu_custom_call.1} parent=1 // pred_region
      _
    $region13: #{tpu_custom_call.1} parent=1 // pred_fallthru
      _
    // Predicated region
    $region14: #{tpu_custom_call.1} parent=1 // pred_check
      _
    $region15: #{tpu_custom_call.1} parent=1 // pred_check_branch
      %22 = sbr.rel (0) target = $region17
    $region16: #{tpu_custom_call.1} parent=1 // pred_region
      _
    $region17: #{tpu_custom_call.1} parent=1 // pred_fallthru
      _
    // Predicated region
    $region18: #{tpu_custom_call.1} parent=1 // pred_check
      _
    $region19: #{tpu_custom_call.1} parent=1 // pred_check_branch
      %24 = sbr.rel (0) target = $region21
    $region20: #{tpu_custom_call.1} parent=1 // pred_region
      _
    $region21: #{tpu_custom_call.1} parent=1 // pred_fallthru
      _
    // Predicated region
    $region22: #{tpu_custom_call.1} parent=1 // pred_check
      _
    $region23: #{tpu_custom_call.1} parent=1 // pred_check_branch
      %26 = sbr.rel (0) target = $region25
    $region24: #{tpu_custom_call.1} parent=1 // pred_region
      _
    $region25: #{tpu_custom_call.1} parent=1 // pred_fallthru
      _
    // Predicated region
    $region26: #{tpu_custom_call.1} parent=1 // pred_check
      _
    $region27: #{tpu_custom_call.1} parent=1 // pred_check_branch
      %28 = sbr.rel (0) target = $region29
    $region28: #{tpu_custom_call.1} parent=1 // pred_region
      _
    $region29: #{tpu_custom_call.1} parent=1 // pred_fallthru
      _
    // Predicated region
    $region30: #{tpu_custom_call.1} parent=1 // pred_check
      _
    $region31: #{tpu_custom_call.1} parent=1 // pred_check_branch
      %30 = sbr.rel (0) target = $region33
    $region32: #{tpu_custom_call.1} parent=1 // pred_region
      _
    $region33: #{tpu_custom_call.1} parent=1 // pred_fallthru
      _
    // Predicated region
    $region34: #{tpu_custom_call.1} parent=1 // pred_check
      _
    $region35: #{tpu_custom_call.1} parent=1 // pred_check_branch
      %32 = sbr.rel (0) target = $region37
    $region36: #{tpu_custom_call.1} parent=1 // pred_region
      _
    $region37: #{tpu_custom_call.1} parent=1 // pred_fallthru
      _
    %v34 = vld [vmem:[%s0] sm:$0xf]
    %v35 = vld [vmem:[%s0 + $0x4] sm:$0xf]
    %v36 = vld [vmem:[%s0 + $0x8] sm:$0xf]
    %v37 = vld [vmem:[%s0 + $0xc] sm:$0xf]
    %v38 = vld [vmem:[%s0 + $0x10] sm:$0xf]
    %v39 = vld [vmem:[%s0 + $0x14] sm:$0xf]
    %v40 = vld [vmem:[%s0 + $0x18] sm:$0xf]
    %v41 = vld [vmem:[%s0 + $0x1c] sm:$0xf]
    %v42 = vld [vmem:[%s0 + $0x20] sm:$0xf]
    %v43 = vld [vmem:[%s0 + $0x24] sm:$0xf]
    %v44 = vld [vmem:[%s0 + $0x28] sm:$0xf]
    %v45 = vld [vmem:[%s0 + $0x2c] sm:$0xf]
    %v46 = vld [vmem:[%s0 + $0x30] sm:$0xf]
    %v47 = vld [vmem:[%s0 + $0x34] sm:$0xf]
    %v48 = vld [vmem:[%s0 + $0x38] sm:$0xf]
    %v49 = vld [vmem:[%s0 + $0x3c] sm:$0xf]
    %v50 = vld [vmem:[%s0 + $0x40] sm:$0xf]
    %v51 = vld [vmem:[%s0 + $0x44] sm:$0xf]
    %v52 = vld [vmem:[%s0 + $0x48] sm:$0xf]
    %v53 = vld [vmem:[%s0 + $0x4c] sm:$0xf]
    %v54 = vld [vmem:[%s0 + $0x50] sm:$0xf]
    %v55 = vld [vmem:[%s0 + $0x54] sm:$0xf]
    %v56 = vld [vmem:[%s0 + $0x58] sm:$0xf]
    %v57 = vld [vmem:[%s0 + $0x5c] sm:$0xf]
    %v58 = vld [vmem:[%s0 + $0x60] sm:$0xf]
    %v59 = vld [vmem:[%s0 + $0x64] sm:$0xf]
    %v60 = vld [vmem:[%s0 + $0x68] sm:$0xf]
    %v61 = vld [vmem:[%s0 + $0x6c] sm:$0xf]
    %v62 = vld [vmem:[%s0 + $0x70] sm:$0xf]
    %v63 = vld [vmem:[%s0 + $0x74] sm:$0xf]
    %v64 = vld [vmem:[%s0 + $0x78] sm:$0xf]
    %v65 = vld [vmem:[%s0 + $0x7c] sm:$0xf]
    %v66 = vld [vmem:[%s1] sm:$0xf]
    %v67 = vld [vmem:[%s1 + $0x4] sm:$0xf]
    %v68 = vld [vmem:[%s3] sm:$0x1]
    %v70 = vlaneseq
    %v71 = vshrl.u32 %v70, 7
    %v72 = vsub.s32 0, %v71
    %v73 = vrot.slane %v68, %v72
    %v107 = vunpack.c.l.b16 %v34
    %v108 = vunpack.c.l.b16 %v35
    %v109 = vunpack.c.l.b16 %v36
    %v110 = vunpack.c.l.b16 %v37
    %v111 = vunpack.c.l.b16 %v38
    %v112 = vunpack.c.l.b16 %v39
    %v113 = vunpack.c.l.b16 %v40
    %v114 = vunpack.c.l.b16 %v41
    %v115 = vunpack.c.l.b16 %v42
    %v116 = vunpack.c.l.b16 %v43
    %v117 = vunpack.c.l.b16 %v44
    %v118 = vunpack.c.l.b16 %v45
    %v119 = vunpack.c.l.b16 %v46
    %v120 = vunpack.c.l.b16 %v47
    %v121 = vunpack.c.l.b16 %v48
    %v122 = vunpack.c.l.b16 %v49
    %v123 = vunpack.c.l.b16 %v50
    %v124 = vunpack.c.l.b16 %v51
    %v125 = vunpack.c.l.b16 %v52
    %v126 = vunpack.c.l.b16 %v53
    %v127 = vunpack.c.l.b16 %v54
    %v128 = vunpack.c.l.b16 %v55
    %v129 = vunpack.c.l.b16 %v56
    %v130 = vunpack.c.l.b16 %v57
    %v131 = vunpack.c.l.b16 %v58
    %v132 = vunpack.c.l.b16 %v59
    %v133 = vunpack.c.l.b16 %v60
    %v134 = vunpack.c.l.b16 %v61
    %v135 = vunpack.c.l.b16 %v62
    %v136 = vunpack.c.l.b16 %v63
    %v137 = vunpack.c.l.b16 %v64
    %v138 = vunpack.c.l.b16 %v65
    %v139 = vpack.c.b16 %v108, %v107
    %v140 = vpack.c.b16 %v110, %v109
    %v141 = vpack.c.b16 %v112, %v111
    %v142 = vpack.c.b16 %v114, %v113
    %v143 = vpack.c.b16 %v116, %v115
    %v144 = vpack.c.b16 %v118, %v117
    %v145 = vpack.c.b16 %v120, %v119
    %v146 = vpack.c.b16 %v122, %v121
    %v147 = vpack.c.b16 %v124, %v123
    %v148 = vpack.c.b16 %v126, %v125
    %v149 = vpack.c.b16 %v128, %v127
    %v150 = vpack.c.b16 %v130, %v129
    %v151 = vpack.c.b16 %v132, %v131
    %v152 = vpack.c.b16 %v134, %v133
    %v153 = vpack.c.b16 %v136, %v135
    %v154 = vpack.c.b16 %v138, %v137
    %v157 = vunpack.c.l.b16 %v66
    %v158 = vunpack.c.l.b16 %v67
    %v159 = vpack.c.b16 %v158, %v157
    %vm161 = vcmask 130048
    %v163 = vsel %vm161, %v139, 0
    %v166 = vsel %vm161, %v140, 0
    %v169 = vsel %vm161, %v141, 0
    %v172 = vsel %vm161, %v142, 0
    %v175 = vsel %vm161, %v143, 0
    %v178 = vsel %vm161, %v144, 0
    %v181 = vsel %vm161, %v145, 0
    %v184 = vsel %vm161, %v146, 0
    %v187 = vsel %vm161, %v147, 0
    %v190 = vsel %vm161, %v148, 0
    %v193 = vsel %vm161, %v149, 0
    %v196 = vsel %vm161, %v150, 0
    %v199 = vsel %vm161, %v151, 0
    %v202 = vsel %vm161, %v152, 0
    %v205 = vsel %vm161, %v153, 0
    %v208 = vsel %vm161, %v154, 0
    %210 = vmatprep.subr.bf16.mxu0 0
    %211 = vmatpush1.bf16.msra.mxu0 0
    %212 = vmatprep.subr.bf16.mxu0 0
    %213 = vmatpush1.bf16.msra.mxu0 0
    %214 = vmatprep.subr.bf16.mxu0 0
    %215 = vmatpush1.bf16.msra.mxu0 0
    %216 = vmatprep.subr.bf16.mxu0 0
    %217 = vmatpush1.bf16.msra.mxu0 0
    %218 = vmatprep.subr.bf16.mxu0 0
    %219 = vmatpush1.bf16.msra.mxu0 0
    %220 = vmatprep.subr.bf16.mxu0 0
    %221 = vmatpush1.bf16.msra.mxu0 0
    %222 = vmatprep.subr.bf16.mxu0 0
    %223 = vmatpush1.bf16.msra.mxu0 0
    %224 = vmatprep.subr.bf16.mxu0 0
    %225 = vmatpush1.bf16.msra.mxu0 %v159
    %226 = vmatprep.subr.bf16.mxu0 0
    %227 = vmatpush2.bf16.msra.mxu0 0
    %228 = vmatprep.subr.bf16.mxu0 0
    %229 = vmatpush2.bf16.msra.mxu0 0
    %230 = vmatprep.subr.bf16.mxu0 0
    %231 = vmatpush2.bf16.msra.mxu0 0
    %232 = vmatprep.subr.bf16.mxu0 0
    %233 = vmatpush2.bf16.msra.mxu0 0
    %234 = vmatprep.subr.bf16.mxu0 0
    %235 = vmatpush2.bf16.msra.mxu0 0
    %236 = vmatprep.subr.bf16.mxu0 0
    %237 = vmatpush2.bf16.msra.mxu0 0
    %238 = vmatprep.subr.bf16.mxu0 0
    %239 = vmatpush2.bf16.msra.mxu0 0
    %240 = vmatprep.subr.bf16.mxu0 0
    %241 = vmatpush2.bf16.msra.mxu0 0
    %242 = vmatprep.mubr.bf16.mxu0 0
    %243 = vmatmul.mubr.bf16.gmra.mxu0 %v163
    %v244 = vpop.f32.mrf.mxu0
    %v245 = vadd.f32 %v73, %v244
    %v246 = vpop.f32.mrf.mxu0
    %v247 = vpop.f32.mrf.mxu0
    %v248 = vadd.f32 %v73, %v247
    %v249 = vpop.f32.mrf.mxu0
    %250 = vmatprep.mubr.bf16.mxu0 0
    %251 = vmatmul.mubr.bf16.gmra.mxu0 %v166
    %v252 = vpop.f32.mrf.mxu0
    %v253 = vadd.f32 %v73, %v252
    %v254 = vpop.f32.mrf.mxu0
    %v255 = vpop.f32.mrf.mxu0
    %v256 = vadd.f32 %v73, %v255
    %v257 = vpop.f32.mrf.mxu0
    %258 = vmatprep.mubr.bf16.mxu0 0
    %259 = vmatmul.mubr.bf16.gmra.mxu0 %v169
    %v260 = vpop.f32.mrf.mxu0
    %v261 = vadd.f32 %v73, %v260
    %v262 = vpop.f32.mrf.mxu0
    %v263 = vpop.f32.mrf.mxu0
    %v264 = vadd.f32 %v73, %v263
    %v265 = vpop.f32.mrf.mxu0
    %266 = vmatprep.mubr.bf16.mxu0 0
    %267 = vmatmul.mubr.bf16.gmra.mxu0 %v172
    %v268 = vpop.f32.mrf.mxu0
    %v269 = vadd.f32 %v73, %v268
    %v270 = vpop.f32.mrf.mxu0
    %v271 = vpop.f32.mrf.mxu0
    %v272 = vadd.f32 %v73, %v271
    %v273 = vpop.f32.mrf.mxu0
    %274 = vmatprep.mubr.bf16.mxu0 0
    %275 = vmatmul.mubr.bf16.gmra.mxu0 %v175
    %v276 = vpop.f32.mrf.mxu0
    %v277 = vadd.f32 %v73, %v276
    %v278 = vpop.f32.mrf.mxu0
    %v279 = vpop.f32.mrf.mxu0
    %v280 = vadd.f32 %v73, %v279
    %v281 = vpop.f32.mrf.mxu0
    %282 = vmatprep.mubr.bf16.mxu0 0
    %283 = vmatmul.mubr.bf16.gmra.mxu0 %v178
    %v284 = vpop.f32.mrf.mxu0
    %v285 = vadd.f32 %v73, %v284
    %v286 = vpop.f32.mrf.mxu0
    %v287 = vpop.f32.mrf.mxu0
    %v288 = vadd.f32 %v73, %v287
    %v289 = vpop.f32.mrf.mxu0
    %290 = vmatprep.mubr.bf16.mxu0 0
    %291 = vmatmul.mubr.bf16.gmra.mxu0 %v181
    %v292 = vpop.f32.mrf.mxu0
    %v293 = vadd.f32 %v73, %v292
    %v294 = vpop.f32.mrf.mxu0
    %v295 = vpop.f32.mrf.mxu0
    %v296 = vadd.f32 %v73, %v295
    %v297 = vpop.f32.mrf.mxu0
    %298 = vmatprep.mubr.bf16.mxu0 0
    %299 = vmatmul.mubr.bf16.gmra.mxu0 %v184
    %v300 = vpop.f32.mrf.mxu0
    %v301 = vadd.f32 %v73, %v300
    %v302 = vpop.f32.mrf.mxu0
    %v303 = vpop.f32.mrf.mxu0
    %v304 = vadd.f32 %v73, %v303
    %v305 = vpop.f32.mrf.mxu0
    %306 = vmatprep.mubr.bf16.mxu0 0
    %307 = vmatmul.mubr.bf16.gmra.mxu0 %v187
    %v308 = vpop.f32.mrf.mxu0
    %v309 = vadd.f32 %v73, %v308
    %v310 = vpop.f32.mrf.mxu0
    %v311 = vpop.f32.mrf.mxu0
    %v312 = vadd.f32 %v73, %v311
    %v313 = vpop.f32.mrf.mxu0
    %314 = vmatprep.mubr.bf16.mxu0 0
    %315 = vmatmul.mubr.bf16.gmra.mxu0 %v190
    %v316 = vpop.f32.mrf.mxu0
    %v317 = vadd.f32 %v73, %v316
    %v318 = vpop.f32.mrf.mxu0
    %v319 = vpop.f32.mrf.mxu0
    %v320 = vadd.f32 %v73, %v319
    %v321 = vpop.f32.mrf.mxu0
    %322 = vmatprep.mubr.bf16.mxu0 0
    %323 = vmatmul.mubr.bf16.gmra.mxu0 %v193
    %v324 = vpop.f32.mrf.mxu0
    %v325 = vadd.f32 %v73, %v324
    %v326 = vpop.f32.mrf.mxu0
    %v327 = vpop.f32.mrf.mxu0
    %v328 = vadd.f32 %v73, %v327
    %v329 = vpop.f32.mrf.mxu0
    %330 = vmatprep.mubr.bf16.mxu0 0
    %331 = vmatmul.mubr.bf16.gmra.mxu0 %v196
    %v332 = vpop.f32.mrf.mxu0
    %v333 = vadd.f32 %v73, %v332
    %v334 = vpop.f32.mrf.mxu0
    %v335 = vpop.f32.mrf.mxu0
    %v336 = vadd.f32 %v73, %v335
    %v337 = vpop.f32.mrf.mxu0
    %338 = vmatprep.mubr.bf16.mxu0 0
    %339 = vmatmul.mubr.bf16.gmra.mxu0 %v199
    %v340 = vpop.f32.mrf.mxu0
    %v341 = vadd.f32 %v73, %v340
    %v342 = vpop.f32.mrf.mxu0
    %v343 = vpop.f32.mrf.mxu0
    %v344 = vadd.f32 %v73, %v343
    %v345 = vpop.f32.mrf.mxu0
    %346 = vmatprep.mubr.bf16.mxu0 0
    %347 = vmatmul.mubr.bf16.gmra.mxu0 %v202
    %v348 = vpop.f32.mrf.mxu0
    %v349 = vadd.f32 %v73, %v348
    %v350 = vpop.f32.mrf.mxu0
    %v351 = vpop.f32.mrf.mxu0
    %v352 = vadd.f32 %v73, %v351
    %v353 = vpop.f32.mrf.mxu0
    %354 = vmatprep.mubr.bf16.mxu0 0
    %355 = vmatmul.mubr.bf16.gmra.mxu0 %v205
    %v356 = vpop.f32.mrf.mxu0
    %v357 = vadd.f32 %v73, %v356
    %v358 = vpop.f32.mrf.mxu0
    %v359 = vpop.f32.mrf.mxu0
    %v360 = vadd.f32 %v73, %v359
    %v361 = vpop.f32.mrf.mxu0
    %362 = vmatprep.mubr.bf16.mxu0 0
    %363 = vmatmul.mubr.bf16.gmra.mxu0 %v208
    %v364 = vpop.f32.mrf.mxu0
    %v365 = vadd.f32 %v73, %v364
    %v366 = vpop.f32.mrf.mxu0
    %v367 = vpop.f32.mrf.mxu0
    %v368 = vadd.f32 %v73, %v367
    %v369 = vpop.f32.mrf.mxu0
    %370 = vdwg.mxu0
    %vm371 = vcmask 261120
    %372 = vst.msk [vmem:[#allocation2] sm:$0xff] %vm371, %v245
    %373 = vst.msk [vmem:[#allocation2 + $0x8] sm:$0xff] %vm371, %v248
    %374 = vst.msk [vmem:[#allocation2 + $0x10] sm:$0xff] %vm371, %v253
    %375 = vst.msk [vmem:[#allocation2 + $0x18] sm:$0xff] %vm371, %v256
    %376 = vst.msk [vmem:[#allocation2 + $0x20] sm:$0xff] %vm371, %v261
    %377 = vst.msk [vmem:[#allocation2 + $0x28] sm:$0xff] %vm371, %v264
    %378 = vst.msk [vmem:[#allocation2 + $0x30] sm:$0xff] %vm371, %v269
    %379 = vst.msk [vmem:[#allocation2 + $0x38] sm:$0xff] %vm371, %v272
    %380 = vst.msk [vmem:[#allocation2 + $0x40] sm:$0xff] %vm371, %v277
    %381 = vst.msk [vmem:[#allocation2 + $0x48] sm:$0xff] %vm371, %v280
    %382 = vst.msk [vmem:[#allocation2 + $0x50] sm:$0xff] %vm371, %v285
    %383 = vst.msk [vmem:[#allocation2 + $0x58] sm:$0xff] %vm371, %v288
    %384 = vst.msk [vmem:[#allocation2 + $0x60] sm:$0xff] %vm371, %v293
    %385 = vst.msk [vmem:[#allocation2 + $0x68] sm:$0xff] %vm371, %v296
    %386 = vst.msk [vmem:[#allocation2 + $0x70] sm:$0xff] %vm371, %v301
    %387 = vst.msk [vmem:[#allocation2 + $0x78] sm:$0xff] %vm371, %v304
    %388 = vst.msk [vmem:[#allocation2 + $0x80] sm:$0xff] %vm371, %v309
    %389 = vst.msk [vmem:[#allocation2 + $0x88] sm:$0xff] %vm371, %v312
    %390 = vst.msk [vmem:[#allocation2 + $0x90] sm:$0xff] %vm371, %v317
    %391 = vst.msk [vmem:[#allocation2 + $0x98] sm:$0xff] %vm371, %v320
    %392 = vst.msk [vmem:[#allocation2 + $0xa0] sm:$0xff] %vm371, %v325
    %393 = vst.msk [vmem:[#allocation2 + $0xa8] sm:$0xff] %vm371, %v328
    %394 = vst.msk [vmem:[#allocation2 + $0xb0] sm:$0xff] %vm371, %v333
    %395 = vst.msk [vmem:[#allocation2 + $0xb8] sm:$0xff] %vm371, %v336
    %396 = vst.msk [vmem:[#allocation2 + $0xc0] sm:$0xff] %vm371, %v341
    %397 = vst.msk [vmem:[#allocation2 + $0xc8] sm:$0xff] %vm371, %v344
    %398 = vst.msk [vmem:[#allocation2 + $0xd0] sm:$0xff] %vm371, %v349
    %399 = vst.msk [vmem:[#allocation2 + $0xd8] sm:$0xff] %vm371, %v352
    %400 = vst.msk [vmem:[#allocation2 + $0xe0] sm:$0xff] %vm371, %v357
    %401 = vst.msk [vmem:[#allocation2 + $0xe8] sm:$0xff] %vm371, %v360
    %402 = vst.msk [vmem:[#allocation2 + $0xf0] sm:$0xff] %vm371, %v365
    %403 = vst.msk [vmem:[#allocation2 + $0xf8] sm:$0xff] %vm371, %v368
    %v404 = vld [vmem:[%s2] sm:$0xf]
    %v405 = vld [vmem:[%s2 + $0x4] sm:$0xf]
    %v406 = vld [vmem:[%s2 + $0x8] sm:$0xf]
    %v407 = vld [vmem:[%s2 + $0xc] sm:$0xf]
    %v408 = vld [vmem:[%s5] sm:$0xf]
    %v409 = vld [vmem:[%s5 + $0x4] sm:$0xf]
    %v410 = vld [vmem:[%s5 + $0x8] sm:$0xf]
    %v411 = vld [vmem:[%s5 + $0xc] sm:$0xf]
    %v412 = vld [vmem:[%s4] sm:$0xf]
    %v413 = vld [vmem:[%s4 + $0x4] sm:$0xf]
    %v414 = vld [vmem:[%s4 + $0x8] sm:$0xf]
    %v415 = vld [vmem:[%s4 + $0xc] sm:$0xf]
    %v416 = vld [vmem:[%s6] sm:$0x1]
    %v417 = vld [vmem:[#allocation2] sm:$0xff]
    %v418 = vld [vmem:[#allocation2 + $0x8] sm:$0xff]
    %v423 = vunpack.c.l.b16 %v404
    %v424 = vunpack.c.l.b16 %v405
    %v425 = vunpack.c.l.b16 %v406
    %v426 = vunpack.c.l.b16 %v407
    %v427 = vpack.c.b16 %v424, %v423
    %v428 = vpack.c.b16 %v426, %v425
    %v432 = vsel %vm371, 0, 0
    %434 = vmatprep.subr.bf16.mxu0 0
    %435 = vmatpush1.bf16.msra.mxu0 0
    %436 = vmatprep.subr.bf16.mxu0 0
    %437 = vmatpush1.bf16.msra.mxu0 0
    %438 = vmatprep.subr.bf16.mxu0 0
    %439 = vmatpush1.bf16.msra.mxu0 0
    %440 = vmatprep.subr.bf16.mxu0 0
    %441 = vmatpush1.bf16.msra.mxu0 0
    %442 = vmatprep.subr.bf16.mxu0 0
    %443 = vmatpush1.bf16.msra.mxu0 0
    %444 = vmatprep.subr.bf16.mxu0 0
    %445 = vmatpush1.bf16.msra.mxu0 0
    %446 = vmatprep.subr.bf16.mxu0 0
    %447 = vmatpush1.bf16.msra.mxu0 %v428
    %448 = vmatprep.subr.bf16.mxu0 0
    %449 = vmatpush1.bf16.msra.mxu0 %v427
    %450 = vmatprep.subr.bf16.mxu0 0
    %451 = vmatpush2.bf16.msra.mxu0 0
    %452 = vmatprep.subr.bf16.mxu0 0
    %453 = vmatpush2.bf16.msra.mxu0 0
    %454 = vmatprep.subr.bf16.mxu0 0
    %455 = vmatpush2.bf16.msra.mxu0 0
    %456 = vmatprep.subr.bf16.mxu0 0
    %457 = vmatpush2.bf16.msra.mxu0 0
    %458 = vmatprep.subr.bf16.mxu0 0
    %459 = vmatpush2.bf16.msra.mxu0 0
    %460 = vmatprep.subr.bf16.mxu0 0
    %461 = vmatpush2.bf16.msra.mxu0 0
    %462 = vmatprep.subr.bf16.mxu0 0
    %463 = vmatpush2.bf16.msra.mxu0 0
    %464 = vmatprep.subr.bf16.mxu0 0
    %465 = vmatpush2.bf16.msra.mxu0 0
    %466 = vmatprep.mubr.bf16.mxu0 0
    %467 = vmatmul.mubr.bf16.gmra.mxu0 %v432
    %v468 = vpop.f32.mrf.mxu0
    %v469 = vadd.f32 0.0, %v468
    %v470 = vpop.f32.mrf.mxu0
    %v471 = vpop.f32.mrf.mxu0
    %v472 = vadd.f32 0.0, %v471
    %v473 = vpop.f32.mrf.mxu0
    %474 = vdwg.mxu0
    %v475 = vadd.f32 %v417, %v469
    %v476 = vadd.f32 %v418, %v472
    %v477 = vtanh.pop %v475
    %v478 = vtanh.pop %v476
    %v479 = vpack.c.bf16 %v478, %v477
    %v480 = vld [vmem:[#allocation2 + $0x10] sm:$0xff]
    %v481 = vld [vmem:[#allocation2 + $0x18] sm:$0xff]
    %v483 = vsel %vm371, %v479, 0
    %485 = vmatprep.subr.bf16.mxu0 0
    %486 = vmatpush1.bf16.msra.mxu0 0
    %487 = vmatprep.subr.bf16.mxu0 0
    %488 = vmatpush1.bf16.msra.mxu0 0
    %489 = vmatprep.subr.bf16.mxu0 0
    %490 = vmatpush1.bf16.msra.mxu0 0
    %491 = vmatprep.subr.bf16.mxu0 0
    %492 = vmatpush1.bf16.msra.mxu0 0
    %493 = vmatprep.subr.bf16.mxu0 0
    %494 = vmatpush1.bf16.msra.mxu0 0
    %495 = vmatprep.subr.bf16.mxu0 0
    %496 = vmatpush1.bf16.msra.mxu0 0
    %497 = vmatprep.subr.bf16.mxu0 0
    %498 = vmatpush1.bf16.msra.mxu0 %v428
    %499 = vmatprep.subr.bf16.mxu0 0
    %500 = vmatpush1.bf16.msra.mxu0 %v427
    %501 = vmatprep.subr.bf16.mxu0 0
    %502 = vmatpush2.bf16.msra.mxu0 0
    %503 = vmatprep.subr.bf16.mxu0 0
    %504 = vmatpush2.bf16.msra.mxu0 0
    %505 = vmatprep.subr.bf16.mxu0 0
    %506 = vmatpush2.bf16.msra.mxu0 0
    %507 = vmatprep.subr.bf16.mxu0 0
    %508 = vmatpush2.bf16.msra.mxu0 0
    %509 = vmatprep.subr.bf16.mxu0 0
    %510 = vmatpush2.bf16.msra.mxu0 0
    %511 = vmatprep.subr.bf16.mxu0 0
    %512 = vmatpush2.bf16.msra.mxu0 0
    %513 = vmatprep.subr.bf16.mxu0 0
    %514 = vmatpush2.bf16.msra.mxu0 0
    %515 = vmatprep.subr.bf16.mxu0 0
    %516 = vmatpush2.bf16.msra.mxu0 0
    %517 = vmatprep.mubr.bf16.mxu0 0
    %518 = vmatmul.mubr.bf16.gmra.mxu0 %v483
    %v519 = vpop.f32.mrf.mxu0
    %v520 = vadd.f32 0.0, %v519
    %v521 = vpop.f32.mrf.mxu0
    %v522 = vpop.f32.mrf.mxu0
    %v523 = vadd.f32 0.0, %v522
    %v524 = vpop.f32.mrf.mxu0
    %525 = vdwg.mxu0
    %v526 = vadd.f32 %v480, %v520
    %v527 = vadd.f32 %v481, %v523
    %v528 = vtanh.pop %v526
    %v529 = vtanh.pop %v527
    %v530 = vpack.c.bf16 %v529, %v528
    %v532 = vlaneseq
    %v533 = vshrl.u32 %v532, 7
    %v534 = vsub.s32 0, %v533
    %v535 = vrot.slane %v416, %v534
    %v541 = vunpack.c.l.b16 %v412
    %v542 = vunpack.c.l.b16 %v413
    %v543 = vunpack.c.l.b16 %v414
    %v544 = vunpack.c.l.b16 %v415
    %v545 = vpack.c.b16 %v542, %v541
    %v546 = vpack.c.b16 %v544, %v543
    %549 = vmatprep.subr.bf16.mxu0 0
    %550 = vmatpush1.bf16.msra.mxu0 0
    %551 = vmatprep.subr.bf16.mxu0 0
    %552 = vmatpush1.bf16.msra.mxu0 0
    %553 = vmatprep.subr.bf16.mxu0 0
    %554 = vmatpush1.bf16.msra.mxu0 0
    %555 = vmatprep.subr.bf16.mxu0 0
    %556 = vmatpush1.bf16.msra.mxu0 0
    %557 = vmatprep.subr.bf16.mxu0 0
    %558 = vmatpush1.bf16.msra.mxu0 0
    %559 = vmatprep.subr.bf16.mxu0 0
    %560 = vmatpush1.bf16.msra.mxu0 0
    %561 = vmatprep.subr.bf16.mxu0 0
    %562 = vmatpush1.bf16.msra.mxu0 %v546
    %563 = vmatprep.subr.bf16.mxu0 0
    %564 = vmatpush1.bf16.msra.mxu0 %v545
    %565 = vmatprep.subr.bf16.mxu0 0
    %566 = vmatpush2.bf16.msra.mxu0 0
    %567 = vmatprep.subr.bf16.mxu0 0
    %568 = vmatpush2.bf16.msra.mxu0 0
    %569 = vmatprep.subr.bf16.mxu0 0
    %570 = vmatpush2.bf16.msra.mxu0 0
    %571 = vmatprep.subr.bf16.mxu0 0
    %572 = vmatpush2.bf16.msra.mxu0 0
    %573 = vmatprep.subr.bf16.mxu0 0
    %574 = vmatpush2.bf16.msra.mxu0 0
    %575 = vmatprep.subr.bf16.mxu0 0
    %576 = vmatpush2.bf16.msra.mxu0 0
    %577 = vmatprep.subr.bf16.mxu0 0
    %578 = vmatpush2.bf16.msra.mxu0 0
    %579 = vmatprep.subr.bf16.mxu0 0
    %580 = vmatpush2.bf16.msra.mxu0 0
    %581 = vmatprep.mubr.bf16.mxu0 0
    %582 = vmatmul.mubr.bf16.gmra.mxu0 %v483
    %v583 = vpop.f32.mrf.mxu0
    %v584 = vadd.f32 %v535, %v583
    %v585 = vpop.f32.mrf.mxu0
    %v586 = vpop.f32.mrf.mxu0
    %v587 = vadd.f32 %v535, %v586
    %v588 = vpop.f32.mrf.mxu0
    %589 = vdwg.mxu0
    %v594 = vunpack.c.l.b16 %v408
    %v595 = vunpack.c.l.b16 %v409
    %v596 = vunpack.c.l.b16 %v410
    %v597 = vunpack.c.l.b16 %v411
    %v598 = vpack.c.b16 %v595, %v594
    %v599 = vpack.c.b16 %v597, %v596
    %602 = vmatprep.subr.bf16.mxu0 0
    %603 = vmatpush1.bf16.msra.mxu0 0
    %604 = vmatprep.subr.bf16.mxu0 0
    %605 = vmatpush1.bf16.msra.mxu0 0
    %606 = vmatprep.subr.bf16.mxu0 0
    %607 = vmatpush1.bf16.msra.mxu0 0
    %608 = vmatprep.subr.bf16.mxu0 0
    %609 = vmatpush1.bf16.msra.mxu0 0
    %610 = vmatprep.subr.bf16.mxu0 0
    %611 = vmatpush1.bf16.msra.mxu0 0
    %612 = vmatprep.subr.bf16.mxu0 0
    %613 = vmatpush1.bf16.msra.mxu0 0
    %614 = vmatprep.subr.bf16.mxu0 0
    %615 = vmatpush1.bf16.msra.mxu0 %v599
    %616 = vmatprep.subr.bf16.mxu0 0
    %617 = vmatpush1.bf16.msra.mxu0 %v598
    %618 = vmatprep.subr.bf16.mxu0 0
    %619 = vmatpush2.bf16.msra.mxu0 0
    %620 = vmatprep.subr.bf16.mxu0 0
    %621 = vmatpush2.bf16.msra.mxu0 0
    %622 = vmatprep.subr.bf16.mxu0 0
    %623 = vmatpush2.bf16.msra.mxu0 0
    %624 = vmatprep.subr.bf16.mxu0 0
    %625 = vmatpush2.bf16.msra.mxu0 0
    %626 = vmatprep.subr.bf16.mxu0 0
    %627 = vmatpush2.bf16.msra.mxu0 0
    %628 = vmatprep.subr.bf16.mxu0 0
    %629 = vmatpush2.bf16.msra.mxu0 0
    %630 = vmatprep.subr.bf16.mxu0 0
    %631 = vmatpush2.bf16.msra.mxu0 0
    %632 = vmatprep.subr.bf16.mxu0 0
    %633 = vmatpush2.bf16.msra.mxu0 0
    %634 = vmatprep.mubr.bf16.mxu0 0
    %635 = vmatmul.mubr.bf16.gmra.mxu0 %v432
    %v636 = vpop.f32.mrf.mxu0
    %v637 = vadd.f32 0.0, %v636
    %v638 = vpop.f32.mrf.mxu0
    %v639 = vpop.f32.mrf.mxu0
    %v640 = vadd.f32 0.0, %v639
    %v641 = vpop.f32.mrf.mxu0
    %642 = vdwg.mxu0
    %v643 = vadd.f32 %v584, %v637
    %v644 = vadd.f32 %v587, %v640
    %v645 = vtanh.pop %v643
    %v646 = vtanh.pop %v644
    %v647 = vpack.c.bf16 %v646, %v645
    %v648 = vld [vmem:[#allocation2 + $0x20] sm:$0xff]
    %v649 = vld [vmem:[#allocation2 + $0x28] sm:$0xff]
    %v651 = vsel %vm371, %v530, 0
    %653 = vmatprep.subr.bf16.mxu0 0
    %654 = vmatpush1.bf16.msra.mxu0 0
    %655 = vmatprep.subr.bf16.mxu0 0
    %656 = vmatpush1.bf16.msra.mxu0 0
    %657 = vmatprep.subr.bf16.mxu0 0
    %658 = vmatpush1.bf16.msra.mxu0 0
    %659 = vmatprep.subr.bf16.mxu0 0
    %660 = vmatpush1.bf16.msra.mxu0 0
    %661 = vmatprep.subr.bf16.mxu0 0
    %662 = vmatpush1.bf16.msra.mxu0 0
    %663 = vmatprep.subr.bf16.mxu0 0
    %664 = vmatpush1.bf16.msra.mxu0 0
    %665 = vmatprep.subr.bf16.mxu0 0
    %666 = vmatpush1.bf16.msra.mxu0 %v428
    %667 = vmatprep.subr.bf16.mxu0 0
    %668 = vmatpush1.bf16.msra.mxu0 %v427
    %669 = vmatprep.subr.bf16.mxu0 0
    %670 = vmatpush2.bf16.msra.mxu0 0
    %671 = vmatprep.subr.bf16.mxu0 0
    %672 = vmatpush2.bf16.msra.mxu0 0
    %673 = vmatprep.subr.bf16.mxu0 0
    %674 = vmatpush2.bf16.msra.mxu0 0
    %675 = vmatprep.subr.bf16.mxu0 0
    %676 = vmatpush2.bf16.msra.mxu0 0
    %677 = vmatprep.subr.bf16.mxu0 0
    %678 = vmatpush2.bf16.msra.mxu0 0
    %679 = vmatprep.subr.bf16.mxu0 0
    %680 = vmatpush2.bf16.msra.mxu0 0
    %681 = vmatprep.subr.bf16.mxu0 0
    %682 = vmatpush2.bf16.msra.mxu0 0
    %683 = vmatprep.subr.bf16.mxu0 0
    %684 = vmatpush2.bf16.msra.mxu0 0
    %685 = vmatprep.mubr.bf16.mxu0 0
    %686 = vmatmul.mubr.bf16.gmra.mxu0 %v651
    %v687 = vpop.f32.mrf.mxu0
    %v688 = vadd.f32 0.0, %v687
    %v689 = vpop.f32.mrf.mxu0
    %v690 = vpop.f32.mrf.mxu0
    %v691 = vadd.f32 0.0, %v690
    %v692 = vpop.f32.mrf.mxu0
    %693 = vdwg.mxu0
    %v694 = vadd.f32 %v648, %v688
    %v695 = vadd.f32 %v649, %v691
    %v696 = vtanh.pop %v694
    %v697 = vtanh.pop %v695
    %v698 = vpack.c.bf16 %v697, %v696
    %699 = vmatprep.subr.bf16.mxu0 0
    %700 = vmatpush1.bf16.msra.mxu0 0
    %701 = vmatprep.subr.bf16.mxu0 0
    %702 = vmatpush1.bf16.msra.mxu0 0
    %703 = vmatprep.subr.bf16.mxu0 0
    %704 = vmatpush1.bf16.msra.mxu0 0
    %705 = vmatprep.subr.bf16.mxu0 0
    %706 = vmatpush1.bf16.msra.mxu0 0
    %707 = vmatprep.subr.bf16.mxu0 0
    %708 = vmatpush1.bf16.msra.mxu0 0
    %709 = vmatprep.subr.bf16.mxu0 0
    %710 = vmatpush1.bf16.msra.mxu0 0
    %711 = vmatprep.subr.bf16.mxu0 0
    %712 = vmatpush1.bf16.msra.mxu0 %v546
    %713 = vmatprep.subr.bf16.mxu0 0
    %714 = vmatpush1.bf16.msra.mxu0 %v545
    %715 = vmatprep.subr.bf16.mxu0 0
    %716 = vmatpush2.bf16.msra.mxu0 0
    %717 = vmatprep.subr.bf16.mxu0 0
    %718 = vmatpush2.bf16.msra.mxu0 0
    %719 = vmatprep.subr.bf16.mxu0 0
    %720 = vmatpush2.bf16.msra.mxu0 0
    %721 = vmatprep.subr.bf16.mxu0 0
    %722 = vmatpush2.bf16.msra.mxu0 0
    %723 = vmatprep.subr.bf16.mxu0 0
    %724 = vmatpush2.bf16.msra.mxu0 0
    %725 = vmatprep.subr.bf16.mxu0 0
    %726 = vmatpush2.bf16.msra.mxu0 0
    %727 = vmatprep.subr.bf16.mxu0 0
    %728 = vmatpush2.bf16.msra.mxu0 0
    %729 = vmatprep.subr.bf16.mxu0 0
    %730 = vmatpush2.bf16.msra.mxu0 0
    %731 = vmatprep.mubr.bf16.mxu0 0
    %732 = vmatmul.mubr.bf16.gmra.mxu0 %v651
    %v733 = vpop.f32.mrf.mxu0
    %v734 = vadd.f32 %v535, %v733
    %v735 = vpop.f32.mrf.mxu0
    %v736 = vpop.f32.mrf.mxu0
    %v737 = vadd.f32 %v535, %v736
    %v738 = vpop.f32.mrf.mxu0
    %739 = vdwg.mxu0
    %v741 = vsel %vm371, %v647, 0
    %743 = vmatprep.subr.bf16.mxu0 0
    %744 = vmatpush1.bf16.msra.mxu0 0
    %745 = vmatprep.subr.bf16.mxu0 0
    %746 = vmatpush1.bf16.msra.mxu0 0
    %747 = vmatprep.subr.bf16.mxu0 0
    %748 = vmatpush1.bf16.msra.mxu0 0
    %749 = vmatprep.subr.bf16.mxu0 0
    %750 = vmatpush1.bf16.msra.mxu0 0
    %751 = vmatprep.subr.bf16.mxu0 0
    %752 = vmatpush1.bf16.msra.mxu0 0
    %753 = vmatprep.subr.bf16.mxu0 0
    %754 = vmatpush1.bf16.msra.mxu0 0
    %755 = vmatprep.subr.bf16.mxu0 0
    %756 = vmatpush1.bf16.msra.mxu0 %v599
    %757 = vmatprep.subr.bf16.mxu0 0
    %758 = vmatpush1.bf16.msra.mxu0 %v598
    %759 = vmatprep.subr.bf16.mxu0 0
    %760 = vmatpush2.bf16.msra.mxu0 0
    %761 = vmatprep.subr.bf16.mxu0 0
    %762 = vmatpush2.bf16.msra.mxu0 0
    %763 = vmatprep.subr.bf16.mxu0 0
    %764 = vmatpush2.bf16.msra.mxu0 0
    %765 = vmatprep.subr.bf16.mxu0 0
    %766 = vmatpush2.bf16.msra.mxu0 0
    %767 = vmatprep.subr.bf16.mxu0 0
    %768 = vmatpush2.bf16.msra.mxu0 0
    %769 = vmatprep.subr.bf16.mxu0 0
    %770 = vmatpush2.bf16.msra.mxu0 0
    %771 = vmatprep.subr.bf16.mxu0 0
    %772 = vmatpush2.bf16.msra.mxu0 0
    %773 = vmatprep.subr.bf16.mxu0 0
    %774 = vmatpush2.bf16.msra.mxu0 0
    %775 = vmatprep.mubr.bf16.mxu0 0
    %776 = vmatmul.mubr.bf16.gmra.mxu0 %v741
    %v777 = vpop.f32.mrf.mxu0
    %v778 = vadd.f32 0.0, %v777
    %v779 = vpop.f32.mrf.mxu0
    %v780 = vpop.f32.mrf.mxu0
    %v781 = vadd.f32 0.0, %v780
    %v782 = vpop.f32.mrf.mxu0
    %783 = vdwg.mxu0
    %v784 = vadd.f32 %v734, %v778
    %v785 = vadd.f32 %v737, %v781
    %v786 = vtanh.pop %v784
    %v787 = vtanh.pop %v785
    %v788 = vpack.c.bf16 %v787, %v786
    %v789 = vld [vmem:[#allocation2 + $0x30] sm:$0xff]
    %v790 = vld [vmem:[#allocation2 + $0x38] sm:$0xff]
    %v792 = vsel %vm371, %v698, 0
    %794 = vmatprep.subr.bf16.mxu0 0
    %795 = vmatpush1.bf16.msra.mxu0 0
    %796 = vmatprep.subr.bf16.mxu0 0
    %797 = vmatpush1.bf16.msra.mxu0 0
    %798 = vmatprep.subr.bf16.mxu0 0
    %799 = vmatpush1.bf16.msra.mxu0 0
    %800 = vmatprep.subr.bf16.mxu0 0
    %801 = vmatpush1.bf16.msra.mxu0 0
    %802 = vmatprep.subr.bf16.mxu0 0
    %803 = vmatpush1.bf16.msra.mxu0 0
    %804 = vmatprep.subr.bf16.mxu0 0
    %805 = vmatpush1.bf16.msra.mxu0 0
    %806 = vmatprep.subr.bf16.mxu0 0
    %807 = vmatpush1.bf16.msra.mxu0 %v428
    %808 = vmatprep.subr.bf16.mxu0 0
    %809 = vmatpush1.bf16.msra.mxu0 %v427
    %810 = vmatprep.subr.bf16.mxu0 0
    %811 = vmatpush2.bf16.msra.mxu0 0
    %812 = vmatprep.subr.bf16.mxu0 0
    %813 = vmatpush2.bf16.msra.mxu0 0
    %814 = vmatprep.subr.bf16.mxu0 0
    %815 = vmatpush2.bf16.msra.mxu0 0
    %816 = vmatprep.subr.bf16.mxu0 0
    %817 = vmatpush2.bf16.msra.mxu0 0
    %818 = vmatprep.subr.bf16.mxu0 0
    %819 = vmatpush2.bf16.msra.mxu0 0
    %820 = vmatprep.subr.bf16.mxu0 0
    %821 = vmatpush2.bf16.msra.mxu0 0
    %822 = vmatprep.subr.bf16.mxu0 0
    %823 = vmatpush2.bf16.msra.mxu0 0
    %824 = vmatprep.subr.bf16.mxu0 0
    %825 = vmatpush2.bf16.msra.mxu0 0
    %826 = vmatprep.mubr.bf16.mxu0 0
    %827 = vmatmul.mubr.bf16.gmra.mxu0 %v792
    %v828 = vpop.f32.mrf.mxu0
    %v829 = vadd.f32 0.0, %v828
    %v830 = vpop.f32.mrf.mxu0
    %v831 = vpop.f32.mrf.mxu0
    %v832 = vadd.f32 0.0, %v831
    %v833 = vpop.f32.mrf.mxu0
    %834 = vdwg.mxu0
    %v835 = vadd.f32 %v789, %v829
    %v836 = vadd.f32 %v790, %v832
    %v837 = vtanh.pop %v835
    %v838 = vtanh.pop %v836
    %v839 = vpack.c.bf16 %v838, %v837
    %840 = vmatprep.subr.bf16.mxu0 0
    %841 = vmatpush1.bf16.msra.mxu0 0
    %842 = vmatprep.subr.bf16.mxu0 0
    %843 = vmatpush1.bf16.msra.mxu0 0
    %844 = vmatprep.subr.bf16.mxu0 0
    %845 = vmatpush1.bf16.msra.mxu0 0
    %846 = vmatprep.subr.bf16.mxu0 0
    %847 = vmatpush1.bf16.msra.mxu0 0
    %848 = vmatprep.subr.bf16.mxu0 0
    %849 = vmatpush1.bf16.msra.mxu0 0
    %850 = vmatprep.subr.bf16.mxu0 0
    %851 = vmatpush1.bf16.msra.mxu0 0
    %852 = vmatprep.subr.bf16.mxu0 0
    %853 = vmatpush1.bf16.msra.mxu0 %v546
    %854 = vmatprep.subr.bf16.mxu0 0
    %855 = vmatpush1.bf16.msra.mxu0 %v545
    %856 = vmatprep.subr.bf16.mxu0 0
    %857 = vmatpush2.bf16.msra.mxu0 0
    %858 = vmatprep.subr.bf16.mxu0 0
    %859 = vmatpush2.bf16.msra.mxu0 0
    %860 = vmatprep.subr.bf16.mxu0 0
    %861 = vmatpush2.bf16.msra.mxu0 0
    %862 = vmatprep.subr.bf16.mxu0 0
    %863 = vmatpush2.bf16.msra.mxu0 0
    %864 = vmatprep.subr.bf16.mxu0 0
    %865 = vmatpush2.bf16.msra.mxu0 0
    %866 = vmatprep.subr.bf16.mxu0 0
    %867 = vmatpush2.bf16.msra.mxu0 0
    %868 = vmatprep.subr.bf16.mxu0 0
    %869 = vmatpush2.bf16.msra.mxu0 0
    %870 = vmatprep.subr.bf16.mxu0 0
    %871 = vmatpush2.bf16.msra.mxu0 0
    %872 = vmatprep.mubr.bf16.mxu0 0
    %873 = vmatmul.mubr.bf16.gmra.mxu0 %v792
    %v874 = vpop.f32.mrf.mxu0
    %v875 = vadd.f32 %v535, %v874
    %v876 = vpop.f32.mrf.mxu0
    %v877 = vpop.f32.mrf.mxu0
    %v878 = vadd.f32 %v535, %v877
    %v879 = vpop.f32.mrf.mxu0
    %880 = vdwg.mxu0
    %v882 = vsel %vm371, %v788, 0
    %884 = vmatprep.subr.bf16.mxu0 0
    %885 = vmatpush1.bf16.msra.mxu0 0
    %886 = vmatprep.subr.bf16.mxu0 0
    %887 = vmatpush1.bf16.msra.mxu0 0
    %888 = vmatprep.subr.bf16.mxu0 0
    %889 = vmatpush1.bf16.msra.mxu0 0
    %890 = vmatprep.subr.bf16.mxu0 0
    %891 = vmatpush1.bf16.msra.mxu0 0
    %892 = vmatprep.subr.bf16.mxu0 0
    %893 = vmatpush1.bf16.msra.mxu0 0
    %894 = vmatprep.subr.bf16.mxu0 0
    %895 = vmatpush1.bf16.msra.mxu0 0
    %896 = vmatprep.subr.bf16.mxu0 0
    %897 = vmatpush1.bf16.msra.mxu0 %v599
    %898 = vmatprep.subr.bf16.mxu0 0
    %899 = vmatpush1.bf16.msra.mxu0 %v598
    %900 = vmatprep.subr.bf16.mxu0 0
    %901 = vmatpush2.bf16.msra.mxu0 0
    %902 = vmatprep.subr.bf16.mxu0 0
    %903 = vmatpush2.bf16.msra.mxu0 0
    %904 = vmatprep.subr.bf16.mxu0 0
    %905 = vmatpush2.bf16.msra.mxu0 0
    %906 = vmatprep.subr.bf16.mxu0 0
    %907 = vmatpush2.bf16.msra.mxu0 0
    %908 = vmatprep.subr.bf16.mxu0 0
    %909 = vmatpush2.bf16.msra.mxu0 0
    %910 = vmatprep.subr.bf16.mxu0 0
    %911 = vmatpush2.bf16.msra.mxu0 0
    %912 = vmatprep.subr.bf16.mxu0 0
    %913 = vmatpush2.bf16.msra.mxu0 0
    %914 = vmatprep.subr.bf16.mxu0 0
    %915 = vmatpush2.bf16.msra.mxu0 0
    %916 = vmatprep.mubr.bf16.mxu0 0
    %917 = vmatmul.mubr.bf16.gmra.mxu0 %v882
    %v918 = vpop.f32.mrf.mxu0
    %v919 = vadd.f32 0.0, %v918
    %v920 = vpop.f32.mrf.mxu0
    %v921 = vpop.f32.mrf.mxu0
    %v922 = vadd.f32 0.0, %v921
    %v923 = vpop.f32.mrf.mxu0
    %924 = vdwg.mxu0
    %v925 = vadd.f32 %v875, %v919
    %v926 = vadd.f32 %v878, %v922
    %v927 = vtanh.pop %v925
    %v928 = vtanh.pop %v926
    %v929 = vpack.c.bf16 %v928, %v927
    %v930 = vld [vmem:[#allocation2 + $0x40] sm:$0xff]
    %v931 = vld [vmem:[#allocation2 + $0x48] sm:$0xff]
    %v933 = vsel %vm371, %v839, 0
    %935 = vmatprep.subr.bf16.mxu0 0
    %936 = vmatpush1.bf16.msra.mxu0 0
    %937 = vmatprep.subr.bf16.mxu0 0
    %938 = vmatpush1.bf16.msra.mxu0 0
    %939 = vmatprep.subr.bf16.mxu0 0
    %940 = vmatpush1.bf16.msra.mxu0 0
    %941 = vmatprep.subr.bf16.mxu0 0
    %942 = vmatpush1.bf16.msra.mxu0 0
    %943 = vmatprep.subr.bf16.mxu0 0
    %944 = vmatpush1.bf16.msra.mxu0 0
    %945 = vmatprep.subr.bf16.mxu0 0
    %946 = vmatpush1.bf16.msra.mxu0 0
    %947 = vmatprep.subr.bf16.mxu0 0
    %948 = vmatpush1.bf16.msra.mxu0 %v428
    %949 = vmatprep.subr.bf16.mxu0 0
    %950 = vmatpush1.bf16.msra.mxu0 %v427
    %951 = vmatprep.subr.bf16.mxu0 0
    %952 = vmatpush2.bf16.msra.mxu0 0
    %953 = vmatprep.subr.bf16.mxu0 0
    %954 = vmatpush2.bf16.msra.mxu0 0
    %955 = vmatprep.subr.bf16.mxu0 0
    %956 = vmatpush2.bf16.msra.mxu0 0
    %957 = vmatprep.subr.bf16.mxu0 0
    %958 = vmatpush2.bf16.msra.mxu0 0
    %959 = vmatprep.subr.bf16.mxu0 0
    %960 = vmatpush2.bf16.msra.mxu0 0
    %961 = vmatprep.subr.bf16.mxu0 0
    %962 = vmatpush2.bf16.msra.mxu0 0
    %963 = vmatprep.subr.bf16.mxu0 0
    %964 = vmatpush2.bf16.msra.mxu0 0
    %965 = vmatprep.subr.bf16.mxu0 0
    %966 = vmatpush2.bf16.msra.mxu0 0
    %967 = vmatprep.mubr.bf16.mxu0 0
    %968 = vmatmul.mubr.bf16.gmra.mxu0 %v933
    %v969 = vpop.f32.mrf.mxu0
    %v970 = vadd.f32 0.0, %v969
    %v971 = vpop.f32.mrf.mxu0
    %v972 = vpop.f32.mrf.mxu0
    %v973 = vadd.f32 0.0, %v972
    %v974 = vpop.f32.mrf.mxu0
    %975 = vdwg.mxu0
    %v976 = vadd.f32 %v930, %v970
    %v977 = vadd.f32 %v931, %v973
    %v978 = vtanh.pop %v976
    %v979 = vtanh.pop %v977
    %v980 = vpack.c.bf16 %v979, %v978
    %981 = vmatprep.subr.bf16.mxu0 0
    %982 = vmatpush1.bf16.msra.mxu0 0
    %983 = vmatprep.subr.bf16.mxu0 0
    %984 = vmatpush1.bf16.msra.mxu0 0
    %985 = vmatprep.subr.bf16.mxu0 0
    %986 = vmatpush1.bf16.msra.mxu0 0
    %987 = vmatprep.subr.bf16.mxu0 0
    %988 = vmatpush1.bf16.msra.mxu0 0
    %989 = vmatprep.subr.bf16.mxu0 0
    %990 = vmatpush1.bf16.msra.mxu0 0
    %991 = vmatprep.subr.bf16.mxu0 0
    %992 = vmatpush1.bf16.msra.mxu0 0
    %993 = vmatprep.subr.bf16.mxu0 0
    %994 = vmatpush1.bf16.msra.mxu0 %v546
    %995 = vmatprep.subr.bf16.mxu0 0
    %996 = vmatpush1.bf16.msra.mxu0 %v545
    %997 = vmatprep.subr.bf16.mxu0 0
    %998 = vmatpush2.bf16.msra.mxu0 0
    %999 = vmatprep.subr.bf16.mxu0 0
    %1000 = vmatpush2.bf16.msra.mxu0 0
    %1001 = vmatprep.subr.bf16.mxu0 0
    %1002 = vmatpush2.bf16.msra.mxu0 0
    %1003 = vmatprep.subr.bf16.mxu0 0
    %1004 = vmatpush2.bf16.msra.mxu0 0
    %1005 = vmatprep.subr.bf16.mxu0 0
    %1006 = vmatpush2.bf16.msra.mxu0 0
    %1007 = vmatprep.subr.bf16.mxu0 0
    %1008 = vmatpush2.bf16.msra.mxu0 0
    %1009 = vmatprep.subr.bf16.mxu0 0
    %1010 = vmatpush2.bf16.msra.mxu0 0
    %1011 = vmatprep.subr.bf16.mxu0 0
    %1012 = vmatpush2.bf16.msra.mxu0 0
    %1013 = vmatprep.mubr.bf16.mxu0 0
    %1014 = vmatmul.mubr.bf16.gmra.mxu0 %v933
    %v1015 = vpop.f32.mrf.mxu0
    %v1016 = vadd.f32 %v535, %v1015
    %v1017 = vpop.f32.mrf.mxu0
    %v1018 = vpop.f32.mrf.mxu0
    %v1019 = vadd.f32 %v535, %v1018
    %v1020 = vpop.f32.mrf.mxu0
    %1021 = vdwg.mxu0
    %v1023 = vsel %vm371, %v929, 0
    %1025 = vmatprep.subr.bf16.mxu0 0
    %1026 = vmatpush1.bf16.msra.mxu0 0
    %1027 = vmatprep.subr.bf16.mxu0 0
    %1028 = vmatpush1.bf16.msra.mxu0 0
    %1029 = vmatprep.subr.bf16.mxu0 0
    %1030 = vmatpush1.bf16.msra.mxu0 0
    %1031 = vmatprep.subr.bf16.mxu0 0
    %1032 = vmatpush1.bf16.msra.mxu0 0
    %1033 = vmatprep.subr.bf16.mxu0 0
    %1034 = vmatpush1.bf16.msra.mxu0 0
    %1035 = vmatprep.subr.bf16.mxu0 0
    %1036 = vmatpush1.bf16.msra.mxu0 0
    %1037 = vmatprep.subr.bf16.mxu0 0
    %1038 = vmatpush1.bf16.msra.mxu0 %v599
    %1039 = vmatprep.subr.bf16.mxu0 0
    %1040 = vmatpush1.bf16.msra.mxu0 %v598
    %1041 = vmatprep.subr.bf16.mxu0 0
    %1042 = vmatpush2.bf16.msra.mxu0 0
    %1043 = vmatprep.subr.bf16.mxu0 0
    %1044 = vmatpush2.bf16.msra.mxu0 0
    %1045 = vmatprep.subr.bf16.mxu0 0
    %1046 = vmatpush2.bf16.msra.mxu0 0
    %1047 = vmatprep.subr.bf16.mxu0 0
    %1048 = vmatpush2.bf16.msra.mxu0 0
    %1049 = vmatprep.subr.bf16.mxu0 0
    %1050 = vmatpush2.bf16.msra.mxu0 0
    %1051 = vmatprep.subr.bf16.mxu0 0
    %1052 = vmatpush2.bf16.msra.mxu0 0
    %1053 = vmatprep.subr.bf16.mxu0 0
    %1054 = vmatpush2.bf16.msra.mxu0 0
    %1055 = vmatprep.subr.bf16.mxu0 0
    %1056 = vmatpush2.bf16.msra.mxu0 0
    %1057 = vmatprep.mubr.bf16.mxu0 0
    %1058 = vmatmul.mubr.bf16.gmra.mxu0 %v1023
    %v1059 = vpop.f32.mrf.mxu0
    %v1060 = vadd.f32 0.0, %v1059
    %v1061 = vpop.f32.mrf.mxu0
    %v1062 = vpop.f32.mrf.mxu0
    %v1063 = vadd.f32 0.0, %v1062
    %v1064 = vpop.f32.mrf.mxu0
    %1065 = vdwg.mxu0
    %v1066 = vadd.f32 %v1016, %v1060
    %v1067 = vadd.f32 %v1019, %v1063
    %v1068 = vtanh.pop %v1066
    %v1069 = vtanh.pop %v1067
    %v1070 = vpack.c.bf16 %v1069, %v1068
    %v1071 = vld [vmem:[#allocation2 + $0x50] sm:$0xff]
    %v1072 = vld [vmem:[#allocation2 + $0x58] sm:$0xff]
    %v1074 = vsel %vm371, %v980, 0
    %1076 = vmatprep.subr.bf16.mxu0 0
    %1077 = vmatpush1.bf16.msra.mxu0 0
    %1078 = vmatprep.subr.bf16.mxu0 0
    %1079 = vmatpush1.bf16.msra.mxu0 0
    %1080 = vmatprep.subr.bf16.mxu0 0
    %1081 = vmatpush1.bf16.msra.mxu0 0
    %1082 = vmatprep.subr.bf16.mxu0 0
    %1083 = vmatpush1.bf16.msra.mxu0 0
    %1084 = vmatprep.subr.bf16.mxu0 0
    %1085 = vmatpush1.bf16.msra.mxu0 0
    %1086 = vmatprep.subr.bf16.mxu0 0
    %1087 = vmatpush1.bf16.msra.mxu0 0
    %1088 = vmatprep.subr.bf16.mxu0 0
    %1089 = vmatpush1.bf16.msra.mxu0 %v428
    %1090 = vmatprep.subr.bf16.mxu0 0
    %1091 = vmatpush1.bf16.msra.mxu0 %v427
    %1092 = vmatprep.subr.bf16.mxu0 0
    %1093 = vmatpush2.bf16.msra.mxu0 0
    %1094 = vmatprep.subr.bf16.mxu0 0
    %1095 = vmatpush2.bf16.msra.mxu0 0
    %1096 = vmatprep.subr.bf16.mxu0 0
    %1097 = vmatpush2.bf16.msra.mxu0 0
    %1098 = vmatprep.subr.bf16.mxu0 0
    %1099 = vmatpush2.bf16.msra.mxu0 0
    %1100 = vmatprep.subr.bf16.mxu0 0
    %1101 = vmatpush2.bf16.msra.mxu0 0
    %1102 = vmatprep.subr.bf16.mxu0 0
    %1103 = vmatpush2.bf16.msra.mxu0 0
    %1104 = vmatprep.subr.bf16.mxu0 0
    %1105 = vmatpush2.bf16.msra.mxu0 0
    %1106 = vmatprep.subr.bf16.mxu0 0
    %1107 = vmatpush2.bf16.msra.mxu0 0
    %1108 = vmatprep.mubr.bf16.mxu0 0
    %1109 = vmatmul.mubr.bf16.gmra.mxu0 %v1074
    %v1110 = vpop.f32.mrf.mxu0
    %v1111 = vadd.f32 0.0, %v1110
    %v1112 = vpop.f32.mrf.mxu0
    %v1113 = vpop.f32.mrf.mxu0
    %v1114 = vadd.f32 0.0, %v1113
    %v1115 = vpop.f32.mrf.mxu0
    %1116 = vdwg.mxu0
    %v1117 = vadd.f32 %v1071, %v1111
    %v1118 = vadd.f32 %v1072, %v1114
    %v1119 = vtanh.pop %v1117
    %v1120 = vtanh.pop %v1118
    %v1121 = vpack.c.bf16 %v1120, %v1119
    %1122 = vmatprep.subr.bf16.mxu0 0
    %1123 = vmatpush1.bf16.msra.mxu0 0
    %1124 = vmatprep.subr.bf16.mxu0 0
    %1125 = vmatpush1.bf16.msra.mxu0 0
    %1126 = vmatprep.subr.bf16.mxu0 0
    %1127 = vmatpush1.bf16.msra.mxu0 0
    %1128 = vmatprep.subr.bf16.mxu0 0
    %1129 = vmatpush1.bf16.msra.mxu0 0
    %1130 = vmatprep.subr.bf16.mxu0 0
    %1131 = vmatpush1.bf16.msra.mxu0 0
    %1132 = vmatprep.subr.bf16.mxu0 0
    %1133 = vmatpush1.bf16.msra.mxu0 0
    %1134 = vmatprep.subr.bf16.mxu0 0
    %1135 = vmatpush1.bf16.msra.mxu0 %v546
    %1136 = vmatprep.subr.bf16.mxu0 0
    %1137 = vmatpush1.bf16.msra.mxu0 %v545
    %1138 = vmatprep.subr.bf16.mxu0 0
    %1139 = vmatpush2.bf16.msra.mxu0 0
    %1140 = vmatprep.subr.bf16.mxu0 0
    %1141 = vmatpush2.bf16.msra.mxu0 0
    %1142 = vmatprep.subr.bf16.mxu0 0
    %1143 = vmatpush2.bf16.msra.mxu0 0
    %1144 = vmatprep.subr.bf16.mxu0 0
    %1145 = vmatpush2.bf16.msra.mxu0 0
    %1146 = vmatprep.subr.bf16.mxu0 0
    %1147 = vmatpush2.bf16.msra.mxu0 0
    %1148 = vmatprep.subr.bf16.mxu0 0
    %1149 = vmatpush2.bf16.msra.mxu0 0
    %1150 = vmatprep.subr.bf16.mxu0 0
    %1151 = vmatpush2.bf16.msra.mxu0 0
    %1152 = vmatprep.subr.bf16.mxu0 0
    %1153 = vmatpush2.bf16.msra.mxu0 0
    %1154 = vmatprep.mubr.bf16.mxu0 0
    %1155 = vmatmul.mubr.bf16.gmra.mxu0 %v1074
    %v1156 = vpop.f32.mrf.mxu0
    %v1157 = vadd.f32 %v535, %v1156
    %v1158 = vpop.f32.mrf.mxu0
    %v1159 = vpop.f32.mrf.mxu0
    %v1160 = vadd.f32 %v535, %v1159
    %v1161 = vpop.f32.mrf.mxu0
    %1162 = vdwg.mxu0
    %v1164 = vsel %vm371, %v1070, 0
    %1166 = vmatprep.subr.bf16.mxu0 0
    %1167 = vmatpush1.bf16.msra.mxu0 0
    %1168 = vmatprep.subr.bf16.mxu0 0
    %1169 = vmatpush1.bf16.msra.mxu0 0
    %1170 = vmatprep.subr.bf16.mxu0 0
    %1171 = vmatpush1.bf16.msra.mxu0 0
    %1172 = vmatprep.subr.bf16.mxu0 0
    %1173 = vmatpush1.bf16.msra.mxu0 0
    %1174 = vmatprep.subr.bf16.mxu0 0
    %1175 = vmatpush1.bf16.msra.mxu0 0
    %1176 = vmatprep.subr.bf16.mxu0 0
    %1177 = vmatpush1.bf16.msra.mxu0 0
    %1178 = vmatprep.subr.bf16.mxu0 0
    %1179 = vmatpush1.bf16.msra.mxu0 %v599
    %1180 = vmatprep.subr.bf16.mxu0 0
    %1181 = vmatpush1.bf16.msra.mxu0 %v598
    %1182 = vmatprep.subr.bf16.mxu0 0
    %1183 = vmatpush2.bf16.msra.mxu0 0
    %1184 = vmatprep.subr.bf16.mxu0 0
    %1185 = vmatpush2.bf16.msra.mxu0 0
    %1186 = vmatprep.subr.bf16.mxu0 0
    %1187 = vmatpush2.bf16.msra.mxu0 0
    %1188 = vmatprep.subr.bf16.mxu0 0
    %1189 = vmatpush2.bf16.msra.mxu0 0
    %1190 = vmatprep.subr.bf16.mxu0 0
    %1191 = vmatpush2.bf16.msra.mxu0 0
    %1192 = vmatprep.subr.bf16.mxu0 0
    %1193 = vmatpush2.bf16.msra.mxu0 0
    %1194 = vmatprep.subr.bf16.mxu0 0
    %1195 = vmatpush2.bf16.msra.mxu0 0
    %1196 = vmatprep.subr.bf16.mxu0 0
    %1197 = vmatpush2.bf16.msra.mxu0 0
    %1198 = vmatprep.mubr.bf16.mxu0 0
    %1199 = vmatmul.mubr.bf16.gmra.mxu0 %v1164
    %v1200 = vpop.f32.mrf.mxu0
    %v1201 = vadd.f32 0.0, %v1200
    %v1202 = vpop.f32.mrf.mxu0
    %v1203 = vpop.f32.mrf.mxu0
    %v1204 = vadd.f32 0.0, %v1203
    %v1205 = vpop.f32.mrf.mxu0
    %1206 = vdwg.mxu0
    %v1207 = vadd.f32 %v1157, %v1201
    %v1208 = vadd.f32 %v1160, %v1204
    %v1209 = vtanh.pop %v1207
    %v1210 = vtanh.pop %v1208
    %v1211 = vpack.c.bf16 %v1210, %v1209
    %v1212 = vld [vmem:[#allocation2 + $0x60] sm:$0xff]
    %v1213 = vld [vmem:[#allocation2 + $0x68] sm:$0xff]
    %v1215 = vsel %vm371, %v1121, 0
    %1217 = vmatprep.subr.bf16.mxu0 0
    %1218 = vmatpush1.bf16.msra.mxu0 0
    %1219 = vmatprep.subr.bf16.mxu0 0
    %1220 = vmatpush1.bf16.msra.mxu0 0
    %1221 = vmatprep.subr.bf16.mxu0 0
    %1222 = vmatpush1.bf16.msra.mxu0 0
    %1223 = vmatprep.subr.bf16.mxu0 0
    %1224 = vmatpush1.bf16.msra.mxu0 0
    %1225 = vmatprep.subr.bf16.mxu0 0
    %1226 = vmatpush1.bf16.msra.mxu0 0
    %1227 = vmatprep.subr.bf16.mxu0 0
    %1228 = vmatpush1.bf16.msra.mxu0 0
    %1229 = vmatprep.subr.bf16.mxu0 0
    %1230 = vmatpush1.bf16.msra.mxu0 %v428
    %1231 = vmatprep.subr.bf16.mxu0 0
    %1232 = vmatpush1.bf16.msra.mxu0 %v427
    %1233 = vmatprep.subr.bf16.mxu0 0
    %1234 = vmatpush2.bf16.msra.mxu0 0
    %1235 = vmatprep.subr.bf16.mxu0 0
    %1236 = vmatpush2.bf16.msra.mxu0 0
    %1237 = vmatprep.subr.bf16.mxu0 0
    %1238 = vmatpush2.bf16.msra.mxu0 0
    %1239 = vmatprep.subr.bf16.mxu0 0
    %1240 = vmatpush2.bf16.msra.mxu0 0
    %1241 = vmatprep.subr.bf16.mxu0 0
    %1242 = vmatpush2.bf16.msra.mxu0 0
    %1243 = vmatprep.subr.bf16.mxu0 0
    %1244 = vmatpush2.bf16.msra.mxu0 0
    %1245 = vmatprep.subr.bf16.mxu0 0
    %1246 = vmatpush2.bf16.msra.mxu0 0
    %1247 = vmatprep.subr.bf16.mxu0 0
    %1248 = vmatpush2.bf16.msra.mxu0 0
    %1249 = vmatprep.mubr.bf16.mxu0 0
    %1250 = vmatmul.mubr.bf16.gmra.mxu0 %v1215
    %v1251 = vpop.f32.mrf.mxu0
    %v1252 = vadd.f32 0.0, %v1251
    %v1253 = vpop.f32.mrf.mxu0
    %v1254 = vpop.f32.mrf.mxu0
    %v1255 = vadd.f32 0.0, %v1254
    %v1256 = vpop.f32.mrf.mxu0
    %1257 = vdwg.mxu0
    %v1258 = vadd.f32 %v1212, %v1252
    %v1259 = vadd.f32 %v1213, %v1255
    %v1260 = vtanh.pop %v1258
    %v1261 = vtanh.pop %v1259
    %v1262 = vpack.c.bf16 %v1261, %v1260
    %1263 = vmatprep.subr.bf16.mxu0 0
    %1264 = vmatpush1.bf16.msra.mxu0 0
    %1265 = vmatprep.subr.bf16.mxu0 0
    %1266 = vmatpush1.bf16.msra.mxu0 0
    %1267 = vmatprep.subr.bf16.mxu0 0
    %1268 = vmatpush1.bf16.msra.mxu0 0
    %1269 = vmatprep.subr.bf16.mxu0 0
    %1270 = vmatpush1.bf16.msra.mxu0 0
    %1271 = vmatprep.subr.bf16.mxu0 0
    %1272 = vmatpush1.bf16.msra.mxu0 0
    %1273 = vmatprep.subr.bf16.mxu0 0
    %1274 = vmatpush1.bf16.msra.mxu0 0
    %1275 = vmatprep.subr.bf16.mxu0 0
    %1276 = vmatpush1.bf16.msra.mxu0 %v546
    %1277 = vmatprep.subr.bf16.mxu0 0
    %1278 = vmatpush1.bf16.msra.mxu0 %v545
    %1279 = vmatprep.subr.bf16.mxu0 0
    %1280 = vmatpush2.bf16.msra.mxu0 0
    %1281 = vmatprep.subr.bf16.mxu0 0
    %1282 = vmatpush2.bf16.msra.mxu0 0
    %1283 = vmatprep.subr.bf16.mxu0 0
    %1284 = vmatpush2.bf16.msra.mxu0 0
    %1285 = vmatprep.subr.bf16.mxu0 0
    %1286 = vmatpush2.bf16.msra.mxu0 0
    %1287 = vmatprep.subr.bf16.mxu0 0
    %1288 = vmatpush2.bf16.msra.mxu0 0
    %1289 = vmatprep.subr.bf16.mxu0 0
    %1290 = vmatpush2.bf16.msra.mxu0 0
    %1291 = vmatprep.subr.bf16.mxu0 0
    %1292 = vmatpush2.bf16.msra.mxu0 0
    %1293 = vmatprep.subr.bf16.mxu0 0
    %1294 = vmatpush2.bf16.msra.mxu0 0
    %1295 = vmatprep.mubr.bf16.mxu0 0
    %1296 = vmatmul.mubr.bf16.gmra.mxu0 %v1215
    %v1297 = vpop.f32.mrf.mxu0
    %v1298 = vadd.f32 %v535, %v1297
    %v1299 = vpop.f32.mrf.mxu0
    %v1300 = vpop.f32.mrf.mxu0
    %v1301 = vadd.f32 %v535, %v1300
    %v1302 = vpop.f32.mrf.mxu0
    %1303 = vdwg.mxu0
    %v1305 = vsel %vm371, %v1211, 0
    %1307 = vmatprep.subr.bf16.mxu0 0
    %1308 = vmatpush1.bf16.msra.mxu0 0
    %1309 = vmatprep.subr.bf16.mxu0 0
    %1310 = vmatpush1.bf16.msra.mxu0 0
    %1311 = vmatprep.subr.bf16.mxu0 0
    %1312 = vmatpush1.bf16.msra.mxu0 0
    %1313 = vmatprep.subr.bf16.mxu0 0
    %1314 = vmatpush1.bf16.msra.mxu0 0
    %1315 = vmatprep.subr.bf16.mxu0 0
    %1316 = vmatpush1.bf16.msra.mxu0 0
    %1317 = vmatprep.subr.bf16.mxu0 0
    %1318 = vmatpush1.bf16.msra.mxu0 0
    %1319 = vmatprep.subr.bf16.mxu0 0
    %1320 = vmatpush1.bf16.msra.mxu0 %v599
    %1321 = vmatprep.subr.bf16.mxu0 0
    %1322 = vmatpush1.bf16.msra.mxu0 %v598
    %1323 = vmatprep.subr.bf16.mxu0 0
    %1324 = vmatpush2.bf16.msra.mxu0 0
    %1325 = vmatprep.subr.bf16.mxu0 0
    %1326 = vmatpush2.bf16.msra.mxu0 0
    %1327 = vmatprep.subr.bf16.mxu0 0
    %1328 = vmatpush2.bf16.msra.mxu0 0
    %1329 = vmatprep.subr.bf16.mxu0 0
    %1330 = vmatpush2.bf16.msra.mxu0 0
    %1331 = vmatprep.subr.bf16.mxu0 0
    %1332 = vmatpush2.bf16.msra.mxu0 0
    %1333 = vmatprep.subr.bf16.mxu0 0
    %1334 = vmatpush2.bf16.msra.mxu0 0
    %1335 = vmatprep.subr.bf16.mxu0 0
    %1336 = vmatpush2.bf16.msra.mxu0 0
    %1337 = vmatprep.subr.bf16.mxu0 0
    %1338 = vmatpush2.bf16.msra.mxu0 0
    %1339 = vmatprep.mubr.bf16.mxu0 0
    %1340 = vmatmul.mubr.bf16.gmra.mxu0 %v1305
    %v1341 = vpop.f32.mrf.mxu0
    %v1342 = vadd.f32 0.0, %v1341
    %v1343 = vpop.f32.mrf.mxu0
    %v1344 = vpop.f32.mrf.mxu0
    %v1345 = vadd.f32 0.0, %v1344
    %v1346 = vpop.f32.mrf.mxu0
    %1347 = vdwg.mxu0
    %v1348 = vadd.f32 %v1298, %v1342
    %v1349 = vadd.f32 %v1301, %v1345
    %v1350 = vtanh.pop %v1348
    %v1351 = vtanh.pop %v1349
    %v1352 = vpack.c.bf16 %v1351, %v1350
    %v1353 = vld [vmem:[#allocation2 + $0x70] sm:$0xff]
    %v1354 = vld [vmem:[#allocation2 + $0x78] sm:$0xff]
    %v1356 = vsel %vm371, %v1262, 0
    %1358 = vmatprep.subr.bf16.mxu0 0
    %1359 = vmatpush1.bf16.msra.mxu0 0
    %1360 = vmatprep.subr.bf16.mxu0 0
    %1361 = vmatpush1.bf16.msra.mxu0 0
    %1362 = vmatprep.subr.bf16.mxu0 0
    %1363 = vmatpush1.bf16.msra.mxu0 0
    %1364 = vmatprep.subr.bf16.mxu0 0
    %1365 = vmatpush1.bf16.msra.mxu0 0
    %1366 = vmatprep.subr.bf16.mxu0 0
    %1367 = vmatpush1.bf16.msra.mxu0 0
    %1368 = vmatprep.subr.bf16.mxu0 0
    %1369 = vmatpush1.bf16.msra.mxu0 0
    %1370 = vmatprep.subr.bf16.mxu0 0
    %1371 = vmatpush1.bf16.msra.mxu0 %v428
    %1372 = vmatprep.subr.bf16.mxu0 0
    %1373 = vmatpush1.bf16.msra.mxu0 %v427
    %1374 = vmatprep.subr.bf16.mxu0 0
    %1375 = vmatpush2.bf16.msra.mxu0 0
    %1376 = vmatprep.subr.bf16.mxu0 0
    %1377 = vmatpush2.bf16.msra.mxu0 0
    %1378 = vmatprep.subr.bf16.mxu0 0
    %1379 = vmatpush2.bf16.msra.mxu0 0
    %1380 = vmatprep.subr.bf16.mxu0 0
    %1381 = vmatpush2.bf16.msra.mxu0 0
    %1382 = vmatprep.subr.bf16.mxu0 0
    %1383 = vmatpush2.bf16.msra.mxu0 0
    %1384 = vmatprep.subr.bf16.mxu0 0
    %1385 = vmatpush2.bf16.msra.mxu0 0
    %1386 = vmatprep.subr.bf16.mxu0 0
    %1387 = vmatpush2.bf16.msra.mxu0 0
    %1388 = vmatprep.subr.bf16.mxu0 0
    %1389 = vmatpush2.bf16.msra.mxu0 0
    %1390 = vmatprep.mubr.bf16.mxu0 0
    %1391 = vmatmul.mubr.bf16.gmra.mxu0 %v1356
    %v1392 = vpop.f32.mrf.mxu0
    %v1393 = vadd.f32 0.0, %v1392
    %v1394 = vpop.f32.mrf.mxu0
    %v1395 = vpop.f32.mrf.mxu0
    %v1396 = vadd.f32 0.0, %v1395
    %v1397 = vpop.f32.mrf.mxu0
    %1398 = vdwg.mxu0
    %v1399 = vadd.f32 %v1353, %v1393
    %v1400 = vadd.f32 %v1354, %v1396
    %v1401 = vtanh.pop %v1399
    %v1402 = vtanh.pop %v1400
    %v1403 = vpack.c.bf16 %v1402, %v1401
    %1404 = vmatprep.subr.bf16.mxu0 0
    %1405 = vmatpush1.bf16.msra.mxu0 0
    %1406 = vmatprep.subr.bf16.mxu0 0
    %1407 = vmatpush1.bf16.msra.mxu0 0
    %1408 = vmatprep.subr.bf16.mxu0 0
    %1409 = vmatpush1.bf16.msra.mxu0 0
    %1410 = vmatprep.subr.bf16.mxu0 0
    %1411 = vmatpush1.bf16.msra.mxu0 0
    %1412 = vmatprep.subr.bf16.mxu0 0
    %1413 = vmatpush1.bf16.msra.mxu0 0
    %1414 = vmatprep.subr.bf16.mxu0 0
    %1415 = vmatpush1.bf16.msra.mxu0 0
    %1416 = vmatprep.subr.bf16.mxu0 0
    %1417 = vmatpush1.bf16.msra.mxu0 %v546
    %1418 = vmatprep.subr.bf16.mxu0 0
    %1419 = vmatpush1.bf16.msra.mxu0 %v545
    %1420 = vmatprep.subr.bf16.mxu0 0
    %1421 = vmatpush2.bf16.msra.mxu0 0
    %1422 = vmatprep.subr.bf16.mxu0 0
    %1423 = vmatpush2.bf16.msra.mxu0 0
    %1424 = vmatprep.subr.bf16.mxu0 0
    %1425 = vmatpush2.bf16.msra.mxu0 0
    %1426 = vmatprep.subr.bf16.mxu0 0
    %1427 = vmatpush2.bf16.msra.mxu0 0
    %1428 = vmatprep.subr.bf16.mxu0 0
    %1429 = vmatpush2.bf16.msra.mxu0 0
    %1430 = vmatprep.subr.bf16.mxu0 0
    %1431 = vmatpush2.bf16.msra.mxu0 0
    %1432 = vmatprep.subr.bf16.mxu0 0
    %1433 = vmatpush2.bf16.msra.mxu0 0
    %1434 = vmatprep.subr.bf16.mxu0 0
    %1435 = vmatpush2.bf16.msra.mxu0 0
    %1436 = vmatprep.mubr.bf16.mxu0 0
    %1437 = vmatmul.mubr.bf16.gmra.mxu0 %v1356
    %v1438 = vpop.f32.mrf.mxu0
    %v1439 = vadd.f32 %v535, %v1438
    %v1440 = vpop.f32.mrf.mxu0
    %v1441 = vpop.f32.mrf.mxu0
    %v1442 = vadd.f32 %v535, %v1441
    %v1443 = vpop.f32.mrf.mxu0
    %1444 = vdwg.mxu0
    %v1446 = vsel %vm371, %v1352, 0
    %1448 = vmatprep.subr.bf16.mxu0 0
    %1449 = vmatpush1.bf16.msra.mxu0 0
    %1450 = vmatprep.subr.bf16.mxu0 0
    %1451 = vmatpush1.bf16.msra.mxu0 0
    %1452 = vmatprep.subr.bf16.mxu0 0
    %1453 = vmatpush1.bf16.msra.mxu0 0
    %1454 = vmatprep.subr.bf16.mxu0 0
    %1455 = vmatpush1.bf16.msra.mxu0 0
    %1456 = vmatprep.subr.bf16.mxu0 0
    %1457 = vmatpush1.bf16.msra.mxu0 0
    %1458 = vmatprep.subr.bf16.mxu0 0
    %1459 = vmatpush1.bf16.msra.mxu0 0
    %1460 = vmatprep.subr.bf16.mxu0 0
    %1461 = vmatpush1.bf16.msra.mxu0 %v599
    %1462 = vmatprep.subr.bf16.mxu0 0
    %1463 = vmatpush1.bf16.msra.mxu0 %v598
    %1464 = vmatprep.subr.bf16.mxu0 0
    %1465 = vmatpush2.bf16.msra.mxu0 0
    %1466 = vmatprep.subr.bf16.mxu0 0
    %1467 = vmatpush2.bf16.msra.mxu0 0
    %1468 = vmatprep.subr.bf16.mxu0 0
    %1469 = vmatpush2.bf16.msra.mxu0 0
    %1470 = vmatprep.subr.bf16.mxu0 0
    %1471 = vmatpush2.bf16.msra.mxu0 0
    %1472 = vmatprep.subr.bf16.mxu0 0
    %1473 = vmatpush2.bf16.msra.mxu0 0
    %1474 = vmatprep.subr.bf16.mxu0 0
    %1475 = vmatpush2.bf16.msra.mxu0 0
    %1476 = vmatprep.subr.bf16.mxu0 0
    %1477 = vmatpush2.bf16.msra.mxu0 0
    %1478 = vmatprep.subr.bf16.mxu0 0
    %1479 = vmatpush2.bf16.msra.mxu0 0
    %1480 = vmatprep.mubr.bf16.mxu0 0
    %1481 = vmatmul.mubr.bf16.gmra.mxu0 %v1446
    %v1482 = vpop.f32.mrf.mxu0
    %v1483 = vadd.f32 0.0, %v1482
    %v1484 = vpop.f32.mrf.mxu0
    %v1485 = vpop.f32.mrf.mxu0
    %v1486 = vadd.f32 0.0, %v1485
    %v1487 = vpop.f32.mrf.mxu0
    %1488 = vdwg.mxu0
    %v1489 = vadd.f32 %v1439, %v1483
    %v1490 = vadd.f32 %v1442, %v1486
    %v1491 = vtanh.pop %v1489
    %v1492 = vtanh.pop %v1490
    %v1493 = vpack.c.bf16 %v1492, %v1491
    %v1494 = vld [vmem:[#allocation2 + $0x80] sm:$0xff]
    %v1495 = vld [vmem:[#allocation2 + $0x88] sm:$0xff]
    %v1497 = vsel %vm371, %v1403, 0
    %1499 = vmatprep.subr.bf16.mxu0 0
    %1500 = vmatpush1.bf16.msra.mxu0 0
    %1501 = vmatprep.subr.bf16.mxu0 0
    %1502 = vmatpush1.bf16.msra.mxu0 0
    %1503 = vmatprep.subr.bf16.mxu0 0
    %1504 = vmatpush1.bf16.msra.mxu0 0
    %1505 = vmatprep.subr.bf16.mxu0 0
    %1506 = vmatpush1.bf16.msra.mxu0 0
    %1507 = vmatprep.subr.bf16.mxu0 0
    %1508 = vmatpush1.bf16.msra.mxu0 0
    %1509 = vmatprep.subr.bf16.mxu0 0
    %1510 = vmatpush1.bf16.msra.mxu0 0
    %1511 = vmatprep.subr.bf16.mxu0 0
    %1512 = vmatpush1.bf16.msra.mxu0 %v428
    %1513 = vmatprep.subr.bf16.mxu0 0
    %1514 = vmatpush1.bf16.msra.mxu0 %v427
    %1515 = vmatprep.subr.bf16.mxu0 0
    %1516 = vmatpush2.bf16.msra.mxu0 0
    %1517 = vmatprep.subr.bf16.mxu0 0
    %1518 = vmatpush2.bf16.msra.mxu0 0
    %1519 = vmatprep.subr.bf16.mxu0 0
    %1520 = vmatpush2.bf16.msra.mxu0 0
    %1521 = vmatprep.subr.bf16.mxu0 0
    %1522 = vmatpush2.bf16.msra.mxu0 0
    %1523 = vmatprep.subr.bf16.mxu0 0
    %1524 = vmatpush2.bf16.msra.mxu0 0
    %1525 = vmatprep.subr.bf16.mxu0 0
    %1526 = vmatpush2.bf16.msra.mxu0 0
    %1527 = vmatprep.subr.bf16.mxu0 0
    %1528 = vmatpush2.bf16.msra.mxu0 0
    %1529 = vmatprep.subr.bf16.mxu0 0
    %1530 = vmatpush2.bf16.msra.mxu0 0
    %1531 = vmatprep.mubr.bf16.mxu0 0
    %1532 = vmatmul.mubr.bf16.gmra.mxu0 %v1497
    %v1533 = vpop.f32.mrf.mxu0
    %v1534 = vadd.f32 0.0, %v1533
    %v1535 = vpop.f32.mrf.mxu0
    %v1536 = vpop.f32.mrf.mxu0
    %v1537 = vadd.f32 0.0, %v1536
    %v1538 = vpop.f32.mrf.mxu0
    %1539 = vdwg.mxu0
    %v1540 = vadd.f32 %v1494, %v1534
    %v1541 = vadd.f32 %v1495, %v1537
    %v1542 = vtanh.pop %v1540
    %v1543 = vtanh.pop %v1541
    %v1544 = vpack.c.bf16 %v1543, %v1542
    %1545 = vmatprep.subr.bf16.mxu0 0
    %1546 = vmatpush1.bf16.msra.mxu0 0
    %1547 = vmatprep.subr.bf16.mxu0 0
    %1548 = vmatpush1.bf16.msra.mxu0 0
    %1549 = vmatprep.subr.bf16.mxu0 0
    %1550 = vmatpush1.bf16.msra.mxu0 0
    %1551 = vmatprep.subr.bf16.mxu0 0
    %1552 = vmatpush1.bf16.msra.mxu0 0
    %1553 = vmatprep.subr.bf16.mxu0 0
    %1554 = vmatpush1.bf16.msra.mxu0 0
    %1555 = vmatprep.subr.bf16.mxu0 0
    %1556 = vmatpush1.bf16.msra.mxu0 0
    %1557 = vmatprep.subr.bf16.mxu0 0
    %1558 = vmatpush1.bf16.msra.mxu0 %v546
    %1559 = vmatprep.subr.bf16.mxu0 0
    %1560 = vmatpush1.bf16.msra.mxu0 %v545
    %1561 = vmatprep.subr.bf16.mxu0 0
    %1562 = vmatpush2.bf16.msra.mxu0 0
    %1563 = vmatprep.subr.bf16.mxu0 0
    %1564 = vmatpush2.bf16.msra.mxu0 0
    %1565 = vmatprep.subr.bf16.mxu0 0
    %1566 = vmatpush2.bf16.msra.mxu0 0
    %1567 = vmatprep.subr.bf16.mxu0 0
    %1568 = vmatpush2.bf16.msra.mxu0 0
    %1569 = vmatprep.subr.bf16.mxu0 0
    %1570 = vmatpush2.bf16.msra.mxu0 0
    %1571 = vmatprep.subr.bf16.mxu0 0
    %1572 = vmatpush2.bf16.msra.mxu0 0
    %1573 = vmatprep.subr.bf16.mxu0 0
    %1574 = vmatpush2.bf16.msra.mxu0 0
    %1575 = vmatprep.subr.bf16.mxu0 0
    %1576 = vmatpush2.bf16.msra.mxu0 0
    %1577 = vmatprep.mubr.bf16.mxu0 0
    %1578 = vmatmul.mubr.bf16.gmra.mxu0 %v1497
    %v1579 = vpop.f32.mrf.mxu0
    %v1580 = vadd.f32 %v535, %v1579
    %v1581 = vpop.f32.mrf.mxu0
    %v1582 = vpop.f32.mrf.mxu0
    %v1583 = vadd.f32 %v535, %v1582
    %v1584 = vpop.f32.mrf.mxu0
    %1585 = vdwg.mxu0
    %v1587 = vsel %vm371, %v1493, 0
    %1589 = vmatprep.subr.bf16.mxu0 0
    %1590 = vmatpush1.bf16.msra.mxu0 0
    %1591 = vmatprep.subr.bf16.mxu0 0
    %1592 = vmatpush1.bf16.msra.mxu0 0
    %1593 = vmatprep.subr.bf16.mxu0 0
    %1594 = vmatpush1.bf16.msra.mxu0 0
    %1595 = vmatprep.subr.bf16.mxu0 0
    %1596 = vmatpush1.bf16.msra.mxu0 0
    %1597 = vmatprep.subr.bf16.mxu0 0
    %1598 = vmatpush1.bf16.msra.mxu0 0
    %1599 = vmatprep.subr.bf16.mxu0 0
    %1600 = vmatpush1.bf16.msra.mxu0 0
    %1601 = vmatprep.subr.bf16.mxu0 0
    %1602 = vmatpush1.bf16.msra.mxu0 %v599
    %1603 = vmatprep.subr.bf16.mxu0 0
    %1604 = vmatpush1.bf16.msra.mxu0 %v598
    %1605 = vmatprep.subr.bf16.mxu0 0
    %1606 = vmatpush2.bf16.msra.mxu0 0
    %1607 = vmatprep.subr.bf16.mxu0 0
    %1608 = vmatpush2.bf16.msra.mxu0 0
    %1609 = vmatprep.subr.bf16.mxu0 0
    %1610 = vmatpush2.bf16.msra.mxu0 0
    %1611 = vmatprep.subr.bf16.mxu0 0
    %1612 = vmatpush2.bf16.msra.mxu0 0
    %1613 = vmatprep.subr.bf16.mxu0 0
    %1614 = vmatpush2.bf16.msra.mxu0 0
    %1615 = vmatprep.subr.bf16.mxu0 0
    %1616 = vmatpush2.bf16.msra.mxu0 0
    %1617 = vmatprep.subr.bf16.mxu0 0
    %1618 = vmatpush2.bf16.msra.mxu0 0
    %1619 = vmatprep.subr.bf16.mxu0 0
    %1620 = vmatpush2.bf16.msra.mxu0 0
    %1621 = vmatprep.mubr.bf16.mxu0 0
    %1622 = vmatmul.mubr.bf16.gmra.mxu0 %v1587
    %v1623 = vpop.f32.mrf.mxu0
    %v1624 = vadd.f32 0.0, %v1623
    %v1625 = vpop.f32.mrf.mxu0
    %v1626 = vpop.f32.mrf.mxu0
    %v1627 = vadd.f32 0.0, %v1626
    %v1628 = vpop.f32.mrf.mxu0
    %1629 = vdwg.mxu0
    %v1630 = vadd.f32 %v1580, %v1624
    %v1631 = vadd.f32 %v1583, %v1627
    %v1632 = vtanh.pop %v1630
    %v1633 = vtanh.pop %v1631
    %v1634 = vpack.c.bf16 %v1633, %v1632
    %v1635 = vld [vmem:[#allocation2 + $0x90] sm:$0xff]
    %v1636 = vld [vmem:[#allocation2 + $0x98] sm:$0xff]
    %v1638 = vsel %vm371, %v1544, 0
    %1640 = vmatprep.subr.bf16.mxu0 0
    %1641 = vmatpush1.bf16.msra.mxu0 0
    %1642 = vmatprep.subr.bf16.mxu0 0
    %1643 = vmatpush1.bf16.msra.mxu0 0
    %1644 = vmatprep.subr.bf16.mxu0 0
    %1645 = vmatpush1.bf16.msra.mxu0 0
    %1646 = vmatprep.subr.bf16.mxu0 0
    %1647 = vmatpush1.bf16.msra.mxu0 0
    %1648 = vmatprep.subr.bf16.mxu0 0
    %1649 = vmatpush1.bf16.msra.mxu0 0
    %1650 = vmatprep.subr.bf16.mxu0 0
    %1651 = vmatpush1.bf16.msra.mxu0 0
    %1652 = vmatprep.subr.bf16.mxu0 0
    %1653 = vmatpush1.bf16.msra.mxu0 %v428
    %1654 = vmatprep.subr.bf16.mxu0 0
    %1655 = vmatpush1.bf16.msra.mxu0 %v427
    %1656 = vmatprep.subr.bf16.mxu0 0
    %1657 = vmatpush2.bf16.msra.mxu0 0
    %1658 = vmatprep.subr.bf16.mxu0 0
    %1659 = vmatpush2.bf16.msra.mxu0 0
    %1660 = vmatprep.subr.bf16.mxu0 0
    %1661 = vmatpush2.bf16.msra.mxu0 0
    %1662 = vmatprep.subr.bf16.mxu0 0
    %1663 = vmatpush2.bf16.msra.mxu0 0
    %1664 = vmatprep.subr.bf16.mxu0 0
    %1665 = vmatpush2.bf16.msra.mxu0 0
    %1666 = vmatprep.subr.bf16.mxu0 0
    %1667 = vmatpush2.bf16.msra.mxu0 0
    %1668 = vmatprep.subr.bf16.mxu0 0
    %1669 = vmatpush2.bf16.msra.mxu0 0
    %1670 = vmatprep.subr.bf16.mxu0 0
    %1671 = vmatpush2.bf16.msra.mxu0 0
    %1672 = vmatprep.mubr.bf16.mxu0 0
    %1673 = vmatmul.mubr.bf16.gmra.mxu0 %v1638
    %v1674 = vpop.f32.mrf.mxu0
    %v1675 = vadd.f32 0.0, %v1674
    %v1676 = vpop.f32.mrf.mxu0
    %v1677 = vpop.f32.mrf.mxu0
    %v1678 = vadd.f32 0.0, %v1677
    %v1679 = vpop.f32.mrf.mxu0
    %1680 = vdwg.mxu0
    %v1681 = vadd.f32 %v1635, %v1675
    %v1682 = vadd.f32 %v1636, %v1678
    %v1683 = vtanh.pop %v1681
    %v1684 = vtanh.pop %v1682
    %v1685 = vpack.c.bf16 %v1684, %v1683
    %1686 = vmatprep.subr.bf16.mxu0 0
    %1687 = vmatpush1.bf16.msra.mxu0 0
    %1688 = vmatprep.subr.bf16.mxu0 0
    %1689 = vmatpush1.bf16.msra.mxu0 0
    %1690 = vmatprep.subr.bf16.mxu0 0
    %1691 = vmatpush1.bf16.msra.mxu0 0
    %1692 = vmatprep.subr.bf16.mxu0 0
    %1693 = vmatpush1.bf16.msra.mxu0 0
    %1694 = vmatprep.subr.bf16.mxu0 0
    %1695 = vmatpush1.bf16.msra.mxu0 0
    %1696 = vmatprep.subr.bf16.mxu0 0
    %1697 = vmatpush1.bf16.msra.mxu0 0
    %1698 = vmatprep.subr.bf16.mxu0 0
    %1699 = vmatpush1.bf16.msra.mxu0 %v546
    %1700 = vmatprep.subr.bf16.mxu0 0
    %1701 = vmatpush1.bf16.msra.mxu0 %v545
    %1702 = vmatprep.subr.bf16.mxu0 0
    %1703 = vmatpush2.bf16.msra.mxu0 0
    %1704 = vmatprep.subr.bf16.mxu0 0
    %1705 = vmatpush2.bf16.msra.mxu0 0
    %1706 = vmatprep.subr.bf16.mxu0 0
    %1707 = vmatpush2.bf16.msra.mxu0 0
    %1708 = vmatprep.subr.bf16.mxu0 0
    %1709 = vmatpush2.bf16.msra.mxu0 0
    %1710 = vmatprep.subr.bf16.mxu0 0
    %1711 = vmatpush2.bf16.msra.mxu0 0
    %1712 = vmatprep.subr.bf16.mxu0 0
    %1713 = vmatpush2.bf16.msra.mxu0 0
    %1714 = vmatprep.subr.bf16.mxu0 0
    %1715 = vmatpush2.bf16.msra.mxu0 0
    %1716 = vmatprep.subr.bf16.mxu0 0
    %1717 = vmatpush2.bf16.msra.mxu0 0
    %1718 = vmatprep.mubr.bf16.mxu0 0
    %1719 = vmatmul.mubr.bf16.gmra.mxu0 %v1638
    %v1720 = vpop.f32.mrf.mxu0
    %v1721 = vadd.f32 %v535, %v1720
    %v1722 = vpop.f32.mrf.mxu0
    %v1723 = vpop.f32.mrf.mxu0
    %v1724 = vadd.f32 %v535, %v1723
    %v1725 = vpop.f32.mrf.mxu0
    %1726 = vdwg.mxu0
    %v1728 = vsel %vm371, %v1634, 0
    %1730 = vmatprep.subr.bf16.mxu0 0
    %1731 = vmatpush1.bf16.msra.mxu0 0
    %1732 = vmatprep.subr.bf16.mxu0 0
    %1733 = vmatpush1.bf16.msra.mxu0 0
    %1734 = vmatprep.subr.bf16.mxu0 0
    %1735 = vmatpush1.bf16.msra.mxu0 0
    %1736 = vmatprep.subr.bf16.mxu0 0
    %1737 = vmatpush1.bf16.msra.mxu0 0
    %1738 = vmatprep.subr.bf16.mxu0 0
    %1739 = vmatpush1.bf16.msra.mxu0 0
    %1740 = vmatprep.subr.bf16.mxu0 0
    %1741 = vmatpush1.bf16.msra.mxu0 0
    %1742 = vmatprep.subr.bf16.mxu0 0
    %1743 = vmatpush1.bf16.msra.mxu0 %v599
    %1744 = vmatprep.subr.bf16.mxu0 0
    %1745 = vmatpush1.bf16.msra.mxu0 %v598
    %1746 = vmatprep.subr.bf16.mxu0 0
    %1747 = vmatpush2.bf16.msra.mxu0 0
    %1748 = vmatprep.subr.bf16.mxu0 0
    %1749 = vmatpush2.bf16.msra.mxu0 0
    %1750 = vmatprep.subr.bf16.mxu0 0
    %1751 = vmatpush2.bf16.msra.mxu0 0
    %1752 = vmatprep.subr.bf16.mxu0 0
    %1753 = vmatpush2.bf16.msra.mxu0 0
    %1754 = vmatprep.subr.bf16.mxu0 0
    %1755 = vmatpush2.bf16.msra.mxu0 0
    %1756 = vmatprep.subr.bf16.mxu0 0
    %1757 = vmatpush2.bf16.msra.mxu0 0
    %1758 = vmatprep.subr.bf16.mxu0 0
    %1759 = vmatpush2.bf16.msra.mxu0 0
    %1760 = vmatprep.subr.bf16.mxu0 0
    %1761 = vmatpush2.bf16.msra.mxu0 0
    %1762 = vmatprep.mubr.bf16.mxu0 0
    %1763 = vmatmul.mubr.bf16.gmra.mxu0 %v1728
    %v1764 = vpop.f32.mrf.mxu0
    %v1765 = vadd.f32 0.0, %v1764
    %v1766 = vpop.f32.mrf.mxu0
    %v1767 = vpop.f32.mrf.mxu0
    %v1768 = vadd.f32 0.0, %v1767
    %v1769 = vpop.f32.mrf.mxu0
    %1770 = vdwg.mxu0
    %v1771 = vadd.f32 %v1721, %v1765
    %v1772 = vadd.f32 %v1724, %v1768
    %v1773 = vtanh.pop %v1771
    %v1774 = vtanh.pop %v1772
    %v1775 = vpack.c.bf16 %v1774, %v1773
    %v1776 = vld [vmem:[#allocation2 + $0xa0] sm:$0xff]
    %v1777 = vld [vmem:[#allocation2 + $0xa8] sm:$0xff]
    %v1779 = vsel %vm371, %v1685, 0
    %1781 = vmatprep.subr.bf16.mxu0 0
    %1782 = vmatpush1.bf16.msra.mxu0 0
    %1783 = vmatprep.subr.bf16.mxu0 0
    %1784 = vmatpush1.bf16.msra.mxu0 0
    %1785 = vmatprep.subr.bf16.mxu0 0
    %1786 = vmatpush1.bf16.msra.mxu0 0
    %1787 = vmatprep.subr.bf16.mxu0 0
    %1788 = vmatpush1.bf16.msra.mxu0 0
    %1789 = vmatprep.subr.bf16.mxu0 0
    %1790 = vmatpush1.bf16.msra.mxu0 0
    %1791 = vmatprep.subr.bf16.mxu0 0
    %1792 = vmatpush1.bf16.msra.mxu0 0
    %1793 = vmatprep.subr.bf16.mxu0 0
    %1794 = vmatpush1.bf16.msra.mxu0 %v428
    %1795 = vmatprep.subr.bf16.mxu0 0
    %1796 = vmatpush1.bf16.msra.mxu0 %v427
    %1797 = vmatprep.subr.bf16.mxu0 0
    %1798 = vmatpush2.bf16.msra.mxu0 0
    %1799 = vmatprep.subr.bf16.mxu0 0
    %1800 = vmatpush2.bf16.msra.mxu0 0
    %1801 = vmatprep.subr.bf16.mxu0 0
    %1802 = vmatpush2.bf16.msra.mxu0 0
    %1803 = vmatprep.subr.bf16.mxu0 0
    %1804 = vmatpush2.bf16.msra.mxu0 0
    %1805 = vmatprep.subr.bf16.mxu0 0
    %1806 = vmatpush2.bf16.msra.mxu0 0
    %1807 = vmatprep.subr.bf16.mxu0 0
    %1808 = vmatpush2.bf16.msra.mxu0 0
    %1809 = vmatprep.subr.bf16.mxu0 0
    %1810 = vmatpush2.bf16.msra.mxu0 0
    %1811 = vmatprep.subr.bf16.mxu0 0
    %1812 = vmatpush2.bf16.msra.mxu0 0
    %1813 = vmatprep.mubr.bf16.mxu0 0
    %1814 = vmatmul.mubr.bf16.gmra.mxu0 %v1779
    %v1815 = vpop.f32.mrf.mxu0
    %v1816 = vadd.f32 0.0, %v1815
    %v1817 = vpop.f32.mrf.mxu0
    %v1818 = vpop.f32.mrf.mxu0
    %v1819 = vadd.f32 0.0, %v1818
    %v1820 = vpop.f32.mrf.mxu0
    %1821 = vdwg.mxu0
    %v1822 = vadd.f32 %v1776, %v1816
    %v1823 = vadd.f32 %v1777, %v1819
    %v1824 = vtanh.pop %v1822
    %v1825 = vtanh.pop %v1823
    %v1826 = vpack.c.bf16 %v1825, %v1824
    %1827 = vmatprep.subr.bf16.mxu0 0
    %1828 = vmatpush1.bf16.msra.mxu0 0
    %1829 = vmatprep.subr.bf16.mxu0 0
    %1830 = vmatpush1.bf16.msra.mxu0 0
    %1831 = vmatprep.subr.bf16.mxu0 0
    %1832 = vmatpush1.bf16.msra.mxu0 0
    %1833 = vmatprep.subr.bf16.mxu0 0
    %1834 = vmatpush1.bf16.msra.mxu0 0
    %1835 = vmatprep.subr.bf16.mxu0 0
    %1836 = vmatpush1.bf16.msra.mxu0 0
    %1837 = vmatprep.subr.bf16.mxu0 0
    %1838 = vmatpush1.bf16.msra.mxu0 0
    %1839 = vmatprep.subr.bf16.mxu0 0
    %1840 = vmatpush1.bf16.msra.mxu0 %v546
    %1841 = vmatprep.subr.bf16.mxu0 0
    %1842 = vmatpush1.bf16.msra.mxu0 %v545
    %1843 = vmatprep.subr.bf16.mxu0 0
    %1844 = vmatpush2.bf16.msra.mxu0 0
    %1845 = vmatprep.subr.bf16.mxu0 0
    %1846 = vmatpush2.bf16.msra.mxu0 0
    %1847 = vmatprep.subr.bf16.mxu0 0
    %1848 = vmatpush2.bf16.msra.mxu0 0
    %1849 = vmatprep.subr.bf16.mxu0 0
    %1850 = vmatpush2.bf16.msra.mxu0 0
    %1851 = vmatprep.subr.bf16.mxu0 0
    %1852 = vmatpush2.bf16.msra.mxu0 0
    %1853 = vmatprep.subr.bf16.mxu0 0
    %1854 = vmatpush2.bf16.msra.mxu0 0
    %1855 = vmatprep.subr.bf16.mxu0 0
    %1856 = vmatpush2.bf16.msra.mxu0 0
    %1857 = vmatprep.subr.bf16.mxu0 0
    %1858 = vmatpush2.bf16.msra.mxu0 0
    %1859 = vmatprep.mubr.bf16.mxu0 0
    %1860 = vmatmul.mubr.bf16.gmra.mxu0 %v1779
    %v1861 = vpop.f32.mrf.mxu0
    %v1862 = vadd.f32 %v535, %v1861
    %v1863 = vpop.f32.mrf.mxu0
    %v1864 = vpop.f32.mrf.mxu0
    %v1865 = vadd.f32 %v535, %v1864
    %v1866 = vpop.f32.mrf.mxu0
    %1867 = vdwg.mxu0
    %v1869 = vsel %vm371, %v1775, 0
    %1871 = vmatprep.subr.bf16.mxu0 0
    %1872 = vmatpush1.bf16.msra.mxu0 0
    %1873 = vmatprep.subr.bf16.mxu0 0
    %1874 = vmatpush1.bf16.msra.mxu0 0
    %1875 = vmatprep.subr.bf16.mxu0 0
    %1876 = vmatpush1.bf16.msra.mxu0 0
    %1877 = vmatprep.subr.bf16.mxu0 0
    %1878 = vmatpush1.bf16.msra.mxu0 0
    %1879 = vmatprep.subr.bf16.mxu0 0
    %1880 = vmatpush1.bf16.msra.mxu0 0
    %1881 = vmatprep.subr.bf16.mxu0 0
    %1882 = vmatpush1.bf16.msra.mxu0 0
    %1883 = vmatprep.subr.bf16.mxu0 0
    %1884 = vmatpush1.bf16.msra.mxu0 %v599
    %1885 = vmatprep.subr.bf16.mxu0 0
    %1886 = vmatpush1.bf16.msra.mxu0 %v598
    %1887 = vmatprep.subr.bf16.mxu0 0
    %1888 = vmatpush2.bf16.msra.mxu0 0
    %1889 = vmatprep.subr.bf16.mxu0 0
    %1890 = vmatpush2.bf16.msra.mxu0 0
    %1891 = vmatprep.subr.bf16.mxu0 0
    %1892 = vmatpush2.bf16.msra.mxu0 0
    %1893 = vmatprep.subr.bf16.mxu0 0
    %1894 = vmatpush2.bf16.msra.mxu0 0
    %1895 = vmatprep.subr.bf16.mxu0 0
    %1896 = vmatpush2.bf16.msra.mxu0 0
    %1897 = vmatprep.subr.bf16.mxu0 0
    %1898 = vmatpush2.bf16.msra.mxu0 0
    %1899 = vmatprep.subr.bf16.mxu0 0
    %1900 = vmatpush2.bf16.msra.mxu0 0
    %1901 = vmatprep.subr.bf16.mxu0 0
    %1902 = vmatpush2.bf16.msra.mxu0 0
    %1903 = vmatprep.mubr.bf16.mxu0 0
    %1904 = vmatmul.mubr.bf16.gmra.mxu0 %v1869
    %v1905 = vpop.f32.mrf.mxu0
    %v1906 = vadd.f32 0.0, %v1905
    %v1907 = vpop.f32.mrf.mxu0
    %v1908 = vpop.f32.mrf.mxu0
    %v1909 = vadd.f32 0.0, %v1908
    %v1910 = vpop.f32.mrf.mxu0
    %1911 = vdwg.mxu0
    %v1912 = vadd.f32 %v1862, %v1906
    %v1913 = vadd.f32 %v1865, %v1909
    %v1914 = vtanh.pop %v1912
    %v1915 = vtanh.pop %v1913
    %v1916 = vpack.c.bf16 %v1915, %v1914
    %v1917 = vld [vmem:[#allocation2 + $0xb0] sm:$0xff]
    %v1918 = vld [vmem:[#allocation2 + $0xb8] sm:$0xff]
    %v1920 = vsel %vm371, %v1826, 0
    %1922 = vmatprep.subr.bf16.mxu0 0
    %1923 = vmatpush1.bf16.msra.mxu0 0
    %1924 = vmatprep.subr.bf16.mxu0 0
    %1925 = vmatpush1.bf16.msra.mxu0 0
    %1926 = vmatprep.subr.bf16.mxu0 0
    %1927 = vmatpush1.bf16.msra.mxu0 0
    %1928 = vmatprep.subr.bf16.mxu0 0
    %1929 = vmatpush1.bf16.msra.mxu0 0
    %1930 = vmatprep.subr.bf16.mxu0 0
    %1931 = vmatpush1.bf16.msra.mxu0 0
    %1932 = vmatprep.subr.bf16.mxu0 0
    %1933 = vmatpush1.bf16.msra.mxu0 0
    %1934 = vmatprep.subr.bf16.mxu0 0
    %1935 = vmatpush1.bf16.msra.mxu0 %v428
    %1936 = vmatprep.subr.bf16.mxu0 0
    %1937 = vmatpush1.bf16.msra.mxu0 %v427
    %1938 = vmatprep.subr.bf16.mxu0 0
    %1939 = vmatpush2.bf16.msra.mxu0 0
    %1940 = vmatprep.subr.bf16.mxu0 0
    %1941 = vmatpush2.bf16.msra.mxu0 0
    %1942 = vmatprep.subr.bf16.mxu0 0
    %1943 = vmatpush2.bf16.msra.mxu0 0
    %1944 = vmatprep.subr.bf16.mxu0 0
    %1945 = vmatpush2.bf16.msra.mxu0 0
    %1946 = vmatprep.subr.bf16.mxu0 0
    %1947 = vmatpush2.bf16.msra.mxu0 0
    %1948 = vmatprep.subr.bf16.mxu0 0
    %1949 = vmatpush2.bf16.msra.mxu0 0
    %1950 = vmatprep.subr.bf16.mxu0 0
    %1951 = vmatpush2.bf16.msra.mxu0 0
    %1952 = vmatprep.subr.bf16.mxu0 0
    %1953 = vmatpush2.bf16.msra.mxu0 0
    %1954 = vmatprep.mubr.bf16.mxu0 0
    %1955 = vmatmul.mubr.bf16.gmra.mxu0 %v1920
    %v1956 = vpop.f32.mrf.mxu0
    %v1957 = vadd.f32 0.0, %v1956
    %v1958 = vpop.f32.mrf.mxu0
    %v1959 = vpop.f32.mrf.mxu0
    %v1960 = vadd.f32 0.0, %v1959
    %v1961 = vpop.f32.mrf.mxu0
    %1962 = vdwg.mxu0
    %v1963 = vadd.f32 %v1917, %v1957
    %v1964 = vadd.f32 %v1918, %v1960
    %v1965 = vtanh.pop %v1963
    %v1966 = vtanh.pop %v1964
    %v1967 = vpack.c.bf16 %v1966, %v1965
    %1968 = vmatprep.subr.bf16.mxu0 0
    %1969 = vmatpush1.bf16.msra.mxu0 0
    %1970 = vmatprep.subr.bf16.mxu0 0
    %1971 = vmatpush1.bf16.msra.mxu0 0
    %1972 = vmatprep.subr.bf16.mxu0 0
    %1973 = vmatpush1.bf16.msra.mxu0 0
    %1974 = vmatprep.subr.bf16.mxu0 0
    %1975 = vmatpush1.bf16.msra.mxu0 0
    %1976 = vmatprep.subr.bf16.mxu0 0
    %1977 = vmatpush1.bf16.msra.mxu0 0
    %1978 = vmatprep.subr.bf16.mxu0 0
    %1979 = vmatpush1.bf16.msra.mxu0 0
    %1980 = vmatprep.subr.bf16.mxu0 0
    %1981 = vmatpush1.bf16.msra.mxu0 %v546
    %1982 = vmatprep.subr.bf16.mxu0 0
    %1983 = vmatpush1.bf16.msra.mxu0 %v545
    %1984 = vmatprep.subr.bf16.mxu0 0
    %1985 = vmatpush2.bf16.msra.mxu0 0
    %1986 = vmatprep.subr.bf16.mxu0 0
    %1987 = vmatpush2.bf16.msra.mxu0 0
    %1988 = vmatprep.subr.bf16.mxu0 0
    %1989 = vmatpush2.bf16.msra.mxu0 0
    %1990 = vmatprep.subr.bf16.mxu0 0
    %1991 = vmatpush2.bf16.msra.mxu0 0
    %1992 = vmatprep.subr.bf16.mxu0 0
    %1993 = vmatpush2.bf16.msra.mxu0 0
    %1994 = vmatprep.subr.bf16.mxu0 0
    %1995 = vmatpush2.bf16.msra.mxu0 0
    %1996 = vmatprep.subr.bf16.mxu0 0
    %1997 = vmatpush2.bf16.msra.mxu0 0
    %1998 = vmatprep.subr.bf16.mxu0 0
    %1999 = vmatpush2.bf16.msra.mxu0 0
    %2000 = vmatprep.mubr.bf16.mxu0 0
    %2001 = vmatmul.mubr.bf16.gmra.mxu0 %v1920
    %v2002 = vpop.f32.mrf.mxu0
    %v2003 = vadd.f32 %v535, %v2002
    %v2004 = vpop.f32.mrf.mxu0
    %v2005 = vpop.f32.mrf.mxu0
    %v2006 = vadd.f32 %v535, %v2005
    %v2007 = vpop.f32.mrf.mxu0
    %2008 = vdwg.mxu0
    %v2010 = vsel %vm371, %v1916, 0
    %2012 = vmatprep.subr.bf16.mxu0 0
    %2013 = vmatpush1.bf16.msra.mxu0 0
    %2014 = vmatprep.subr.bf16.mxu0 0
    %2015 = vmatpush1.bf16.msra.mxu0 0
    %2016 = vmatprep.subr.bf16.mxu0 0
    %2017 = vmatpush1.bf16.msra.mxu0 0
    %2018 = vmatprep.subr.bf16.mxu0 0
    %2019 = vmatpush1.bf16.msra.mxu0 0
    %2020 = vmatprep.subr.bf16.mxu0 0
    %2021 = vmatpush1.bf16.msra.mxu0 0
    %2022 = vmatprep.subr.bf16.mxu0 0
    %2023 = vmatpush1.bf16.msra.mxu0 0
    %2024 = vmatprep.subr.bf16.mxu0 0
    %2025 = vmatpush1.bf16.msra.mxu0 %v599
    %2026 = vmatprep.subr.bf16.mxu0 0
    %2027 = vmatpush1.bf16.msra.mxu0 %v598
    %2028 = vmatprep.subr.bf16.mxu0 0
    %2029 = vmatpush2.bf16.msra.mxu0 0
    %2030 = vmatprep.subr.bf16.mxu0 0
    %2031 = vmatpush2.bf16.msra.mxu0 0
    %2032 = vmatprep.subr.bf16.mxu0 0
    %2033 = vmatpush2.bf16.msra.mxu0 0
    %2034 = vmatprep.subr.bf16.mxu0 0
    %2035 = vmatpush2.bf16.msra.mxu0 0
    %2036 = vmatprep.subr.bf16.mxu0 0
    %2037 = vmatpush2.bf16.msra.mxu0 0
    %2038 = vmatprep.subr.bf16.mxu0 0
    %2039 = vmatpush2.bf16.msra.mxu0 0
    %2040 = vmatprep.subr.bf16.mxu0 0
    %2041 = vmatpush2.bf16.msra.mxu0 0
    %2042 = vmatprep.subr.bf16.mxu0 0
    %2043 = vmatpush2.bf16.msra.mxu0 0
    %2044 = vmatprep.mubr.bf16.mxu0 0
    %2045 = vmatmul.mubr.bf16.gmra.mxu0 %v2010
    %v2046 = vpop.f32.mrf.mxu0
    %v2047 = vadd.f32 0.0, %v2046
    %v2048 = vpop.f32.mrf.mxu0
    %v2049 = vpop.f32.mrf.mxu0
    %v2050 = vadd.f32 0.0, %v2049
    %v2051 = vpop.f32.mrf.mxu0
    %2052 = vdwg.mxu0
    %v2053 = vadd.f32 %v2003, %v2047
    %v2054 = vadd.f32 %v2006, %v2050
    %v2055 = vtanh.pop %v2053
    %v2056 = vtanh.pop %v2054
    %v2057 = vpack.c.bf16 %v2056, %v2055
    %v2058 = vld [vmem:[#allocation2 + $0xc0] sm:$0xff]
    %v2059 = vld [vmem:[#allocation2 + $0xc8] sm:$0xff]
    %v2061 = vsel %vm371, %v1967, 0
    %2063 = vmatprep.subr.bf16.mxu0 0
    %2064 = vmatpush1.bf16.msra.mxu0 0
    %2065 = vmatprep.subr.bf16.mxu0 0
    %2066 = vmatpush1.bf16.msra.mxu0 0
    %2067 = vmatprep.subr.bf16.mxu0 0
    %2068 = vmatpush1.bf16.msra.mxu0 0
    %2069 = vmatprep.subr.bf16.mxu0 0
    %2070 = vmatpush1.bf16.msra.mxu0 0
    %2071 = vmatprep.subr.bf16.mxu0 0
    %2072 = vmatpush1.bf16.msra.mxu0 0
    %2073 = vmatprep.subr.bf16.mxu0 0
    %2074 = vmatpush1.bf16.msra.mxu0 0
    %2075 = vmatprep.subr.bf16.mxu0 0
    %2076 = vmatpush1.bf16.msra.mxu0 %v428
    %2077 = vmatprep.subr.bf16.mxu0 0
    %2078 = vmatpush1.bf16.msra.mxu0 %v427
    %2079 = vmatprep.subr.bf16.mxu0 0
    %2080 = vmatpush2.bf16.msra.mxu0 0
    %2081 = vmatprep.subr.bf16.mxu0 0
    %2082 = vmatpush2.bf16.msra.mxu0 0
    %2083 = vmatprep.subr.bf16.mxu0 0
    %2084 = vmatpush2.bf16.msra.mxu0 0
    %2085 = vmatprep.subr.bf16.mxu0 0
    %2086 = vmatpush2.bf16.msra.mxu0 0
    %2087 = vmatprep.subr.bf16.mxu0 0
    %2088 = vmatpush2.bf16.msra.mxu0 0
    %2089 = vmatprep.subr.bf16.mxu0 0
    %2090 = vmatpush2.bf16.msra.mxu0 0
    %2091 = vmatprep.subr.bf16.mxu0 0
    %2092 = vmatpush2.bf16.msra.mxu0 0
    %2093 = vmatprep.subr.bf16.mxu0 0
    %2094 = vmatpush2.bf16.msra.mxu0 0
    %2095 = vmatprep.mubr.bf16.mxu0 0
    %2096 = vmatmul.mubr.bf16.gmra.mxu0 %v2061
    %v2097 = vpop.f32.mrf.mxu0
    %v2098 = vadd.f32 0.0, %v2097
    %v2099 = vpop.f32.mrf.mxu0
    %v2100 = vpop.f32.mrf.mxu0
    %v2101 = vadd.f32 0.0, %v2100
    %v2102 = vpop.f32.mrf.mxu0
    %2103 = vdwg.mxu0
    %v2104 = vadd.f32 %v2058, %v2098
    %v2105 = vadd.f32 %v2059, %v2101
    %v2106 = vtanh.pop %v2104
    %v2107 = vtanh.pop %v2105
    %v2108 = vpack.c.bf16 %v2107, %v2106
    %2109 = vmatprep.subr.bf16.mxu0 0
    %2110 = vmatpush1.bf16.msra.mxu0 0
    %2111 = vmatprep.subr.bf16.mxu0 0
    %2112 = vmatpush1.bf16.msra.mxu0 0
    %2113 = vmatprep.subr.bf16.mxu0 0
    %2114 = vmatpush1.bf16.msra.mxu0 0
    %2115 = vmatprep.subr.bf16.mxu0 0
    %2116 = vmatpush1.bf16.msra.mxu0 0
    %2117 = vmatprep.subr.bf16.mxu0 0
    %2118 = vmatpush1.bf16.msra.mxu0 0
    %2119 = vmatprep.subr.bf16.mxu0 0
    %2120 = vmatpush1.bf16.msra.mxu0 0
    %2121 = vmatprep.subr.bf16.mxu0 0
    %2122 = vmatpush1.bf16.msra.mxu0 %v546
    %2123 = vmatprep.subr.bf16.mxu0 0
    %2124 = vmatpush1.bf16.msra.mxu0 %v545
    %2125 = vmatprep.subr.bf16.mxu0 0
    %2126 = vmatpush2.bf16.msra.mxu0 0
    %2127 = vmatprep.subr.bf16.mxu0 0
    %2128 = vmatpush2.bf16.msra.mxu0 0
    %2129 = vmatprep.subr.bf16.mxu0 0
    %2130 = vmatpush2.bf16.msra.mxu0 0
    %2131 = vmatprep.subr.bf16.mxu0 0
    %2132 = vmatpush2.bf16.msra.mxu0 0
    %2133 = vmatprep.subr.bf16.mxu0 0
    %2134 = vmatpush2.bf16.msra.mxu0 0
    %2135 = vmatprep.subr.bf16.mxu0 0
    %2136 = vmatpush2.bf16.msra.mxu0 0
    %2137 = vmatprep.subr.bf16.mxu0 0
    %2138 = vmatpush2.bf16.msra.mxu0 0
    %2139 = vmatprep.subr.bf16.mxu0 0
    %2140 = vmatpush2.bf16.msra.mxu0 0
    %2141 = vmatprep.mubr.bf16.mxu0 0
    %2142 = vmatmul.mubr.bf16.gmra.mxu0 %v2061
    %v2143 = vpop.f32.mrf.mxu0
    %v2144 = vadd.f32 %v535, %v2143
    %v2145 = vpop.f32.mrf.mxu0
    %v2146 = vpop.f32.mrf.mxu0
    %v2147 = vadd.f32 %v535, %v2146
    %v2148 = vpop.f32.mrf.mxu0
    %2149 = vdwg.mxu0
    %v2151 = vsel %vm371, %v2057, 0
    %2153 = vmatprep.subr.bf16.mxu0 0
    %2154 = vmatpush1.bf16.msra.mxu0 0
    %2155 = vmatprep.subr.bf16.mxu0 0
    %2156 = vmatpush1.bf16.msra.mxu0 0
    %2157 = vmatprep.subr.bf16.mxu0 0
    %2158 = vmatpush1.bf16.msra.mxu0 0
    %2159 = vmatprep.subr.bf16.mxu0 0
    %2160 = vmatpush1.bf16.msra.mxu0 0
    %2161 = vmatprep.subr.bf16.mxu0 0
    %2162 = vmatpush1.bf16.msra.mxu0 0
    %2163 = vmatprep.subr.bf16.mxu0 0
    %2164 = vmatpush1.bf16.msra.mxu0 0
    %2165 = vmatprep.subr.bf16.mxu0 0
    %2166 = vmatpush1.bf16.msra.mxu0 %v599
    %2167 = vmatprep.subr.bf16.mxu0 0
    %2168 = vmatpush1.bf16.msra.mxu0 %v598
    %2169 = vmatprep.subr.bf16.mxu0 0
    %2170 = vmatpush2.bf16.msra.mxu0 0
    %2171 = vmatprep.subr.bf16.mxu0 0
    %2172 = vmatpush2.bf16.msra.mxu0 0
    %2173 = vmatprep.subr.bf16.mxu0 0
    %2174 = vmatpush2.bf16.msra.mxu0 0
    %2175 = vmatprep.subr.bf16.mxu0 0
    %2176 = vmatpush2.bf16.msra.mxu0 0
    %2177 = vmatprep.subr.bf16.mxu0 0
    %2178 = vmatpush2.bf16.msra.mxu0 0
    %2179 = vmatprep.subr.bf16.mxu0 0
    %2180 = vmatpush2.bf16.msra.mxu0 0
    %2181 = vmatprep.subr.bf16.mxu0 0
    %2182 = vmatpush2.bf16.msra.mxu0 0
    %2183 = vmatprep.subr.bf16.mxu0 0
    %2184 = vmatpush2.bf16.msra.mxu0 0
    %2185 = vmatprep.mubr.bf16.mxu0 0
    %2186 = vmatmul.mubr.bf16.gmra.mxu0 %v2151
    %v2187 = vpop.f32.mrf.mxu0
    %v2188 = vadd.f32 0.0, %v2187
    %v2189 = vpop.f32.mrf.mxu0
    %v2190 = vpop.f32.mrf.mxu0
    %v2191 = vadd.f32 0.0, %v2190
    %v2192 = vpop.f32.mrf.mxu0
    %2193 = vdwg.mxu0
    %v2194 = vadd.f32 %v2144, %v2188
    %v2195 = vadd.f32 %v2147, %v2191
    %v2196 = vtanh.pop %v2194
    %v2197 = vtanh.pop %v2195
    %v2198 = vpack.c.bf16 %v2197, %v2196
    %v2199 = vld [vmem:[#allocation2 + $0xd0] sm:$0xff]
    %v2200 = vld [vmem:[#allocation2 + $0xd8] sm:$0xff]
    %v2202 = vsel %vm371, %v2108, 0
    %2204 = vmatprep.subr.bf16.mxu0 0
    %2205 = vmatpush1.bf16.msra.mxu0 0
    %2206 = vmatprep.subr.bf16.mxu0 0
    %2207 = vmatpush1.bf16.msra.mxu0 0
    %2208 = vmatprep.subr.bf16.mxu0 0
    %2209 = vmatpush1.bf16.msra.mxu0 0
    %2210 = vmatprep.subr.bf16.mxu0 0
    %2211 = vmatpush1.bf16.msra.mxu0 0
    %2212 = vmatprep.subr.bf16.mxu0 0
    %2213 = vmatpush1.bf16.msra.mxu0 0
    %2214 = vmatprep.subr.bf16.mxu0 0
    %2215 = vmatpush1.bf16.msra.mxu0 0
    %2216 = vmatprep.subr.bf16.mxu0 0
    %2217 = vmatpush1.bf16.msra.mxu0 %v428
    %2218 = vmatprep.subr.bf16.mxu0 0
    %2219 = vmatpush1.bf16.msra.mxu0 %v427
    %2220 = vmatprep.subr.bf16.mxu0 0
    %2221 = vmatpush2.bf16.msra.mxu0 0
    %2222 = vmatprep.subr.bf16.mxu0 0
    %2223 = vmatpush2.bf16.msra.mxu0 0
    %2224 = vmatprep.subr.bf16.mxu0 0
    %2225 = vmatpush2.bf16.msra.mxu0 0
    %2226 = vmatprep.subr.bf16.mxu0 0
    %2227 = vmatpush2.bf16.msra.mxu0 0
    %2228 = vmatprep.subr.bf16.mxu0 0
    %2229 = vmatpush2.bf16.msra.mxu0 0
    %2230 = vmatprep.subr.bf16.mxu0 0
    %2231 = vmatpush2.bf16.msra.mxu0 0
    %2232 = vmatprep.subr.bf16.mxu0 0
    %2233 = vmatpush2.bf16.msra.mxu0 0
    %2234 = vmatprep.subr.bf16.mxu0 0
    %2235 = vmatpush2.bf16.msra.mxu0 0
    %2236 = vmatprep.mubr.bf16.mxu0 0
    %2237 = vmatmul.mubr.bf16.gmra.mxu0 %v2202
    %v2238 = vpop.f32.mrf.mxu0
    %v2239 = vadd.f32 0.0, %v2238
    %v2240 = vpop.f32.mrf.mxu0
    %v2241 = vpop.f32.mrf.mxu0
    %v2242 = vadd.f32 0.0, %v2241
    %v2243 = vpop.f32.mrf.mxu0
    %2244 = vdwg.mxu0
    %v2245 = vadd.f32 %v2199, %v2239
    %v2246 = vadd.f32 %v2200, %v2242
    %v2247 = vtanh.pop %v2245
    %v2248 = vtanh.pop %v2246
    %v2249 = vpack.c.bf16 %v2248, %v2247
    %2250 = vmatprep.subr.bf16.mxu0 0
    %2251 = vmatpush1.bf16.msra.mxu0 0
    %2252 = vmatprep.subr.bf16.mxu0 0
    %2253 = vmatpush1.bf16.msra.mxu0 0
    %2254 = vmatprep.subr.bf16.mxu0 0
    %2255 = vmatpush1.bf16.msra.mxu0 0
    %2256 = vmatprep.subr.bf16.mxu0 0
    %2257 = vmatpush1.bf16.msra.mxu0 0
    %2258 = vmatprep.subr.bf16.mxu0 0
    %2259 = vmatpush1.bf16.msra.mxu0 0
    %2260 = vmatprep.subr.bf16.mxu0 0
    %2261 = vmatpush1.bf16.msra.mxu0 0
    %2262 = vmatprep.subr.bf16.mxu0 0
    %2263 = vmatpush1.bf16.msra.mxu0 %v546
    %2264 = vmatprep.subr.bf16.mxu0 0
    %2265 = vmatpush1.bf16.msra.mxu0 %v545
    %2266 = vmatprep.subr.bf16.mxu0 0
    %2267 = vmatpush2.bf16.msra.mxu0 0
    %2268 = vmatprep.subr.bf16.mxu0 0
    %2269 = vmatpush2.bf16.msra.mxu0 0
    %2270 = vmatprep.subr.bf16.mxu0 0
    %2271 = vmatpush2.bf16.msra.mxu0 0
    %2272 = vmatprep.subr.bf16.mxu0 0
    %2273 = vmatpush2.bf16.msra.mxu0 0
    %2274 = vmatprep.subr.bf16.mxu0 0
    %2275 = vmatpush2.bf16.msra.mxu0 0
    %2276 = vmatprep.subr.bf16.mxu0 0
    %2277 = vmatpush2.bf16.msra.mxu0 0
    %2278 = vmatprep.subr.bf16.mxu0 0
    %2279 = vmatpush2.bf16.msra.mxu0 0
    %2280 = vmatprep.subr.bf16.mxu0 0
    %2281 = vmatpush2.bf16.msra.mxu0 0
    %2282 = vmatprep.mubr.bf16.mxu0 0
    %2283 = vmatmul.mubr.bf16.gmra.mxu0 %v2202
    %v2284 = vpop.f32.mrf.mxu0
    %v2285 = vadd.f32 %v535, %v2284
    %v2286 = vpop.f32.mrf.mxu0
    %v2287 = vpop.f32.mrf.mxu0
    %v2288 = vadd.f32 %v535, %v2287
    %v2289 = vpop.f32.mrf.mxu0
    %2290 = vdwg.mxu0
    %v2292 = vsel %vm371, %v2198, 0
    %2294 = vmatprep.subr.bf16.mxu0 0
    %2295 = vmatpush1.bf16.msra.mxu0 0
    %2296 = vmatprep.subr.bf16.mxu0 0
    %2297 = vmatpush1.bf16.msra.mxu0 0
    %2298 = vmatprep.subr.bf16.mxu0 0
    %2299 = vmatpush1.bf16.msra.mxu0 0
    %2300 = vmatprep.subr.bf16.mxu0 0
    %2301 = vmatpush1.bf16.msra.mxu0 0
    %2302 = vmatprep.subr.bf16.mxu0 0
    %2303 = vmatpush1.bf16.msra.mxu0 0
    %2304 = vmatprep.subr.bf16.mxu0 0
    %2305 = vmatpush1.bf16.msra.mxu0 0
    %2306 = vmatprep.subr.bf16.mxu0 0
    %2307 = vmatpush1.bf16.msra.mxu0 %v599
    %2308 = vmatprep.subr.bf16.mxu0 0
    %2309 = vmatpush1.bf16.msra.mxu0 %v598
    %2310 = vmatprep.subr.bf16.mxu0 0
    %2311 = vmatpush2.bf16.msra.mxu0 0
    %2312 = vmatprep.subr.bf16.mxu0 0
    %2313 = vmatpush2.bf16.msra.mxu0 0
    %2314 = vmatprep.subr.bf16.mxu0 0
    %2315 = vmatpush2.bf16.msra.mxu0 0
    %2316 = vmatprep.subr.bf16.mxu0 0
    %2317 = vmatpush2.bf16.msra.mxu0 0
    %2318 = vmatprep.subr.bf16.mxu0 0
    %2319 = vmatpush2.bf16.msra.mxu0 0
    %2320 = vmatprep.subr.bf16.mxu0 0
    %2321 = vmatpush2.bf16.msra.mxu0 0
    %2322 = vmatprep.subr.bf16.mxu0 0
    %2323 = vmatpush2.bf16.msra.mxu0 0
    %2324 = vmatprep.subr.bf16.mxu0 0
    %2325 = vmatpush2.bf16.msra.mxu0 0
    %2326 = vmatprep.mubr.bf16.mxu0 0
    %2327 = vmatmul.mubr.bf16.gmra.mxu0 %v2292
    %v2328 = vpop.f32.mrf.mxu0
    %v2329 = vadd.f32 0.0, %v2328
    %v2330 = vpop.f32.mrf.mxu0
    %v2331 = vpop.f32.mrf.mxu0
    %v2332 = vadd.f32 0.0, %v2331
    %v2333 = vpop.f32.mrf.mxu0
    %2334 = vdwg.mxu0
    %v2335 = vadd.f32 %v2285, %v2329
    %v2336 = vadd.f32 %v2288, %v2332
    %v2337 = vtanh.pop %v2335
    %v2338 = vtanh.pop %v2336
    %v2339 = vpack.c.bf16 %v2338, %v2337
    %v2340 = vld [vmem:[#allocation2 + $0xe0] sm:$0xff]
    %v2341 = vld [vmem:[#allocation2 + $0xe8] sm:$0xff]
    %v2343 = vsel %vm371, %v2249, 0
    %2345 = vmatprep.subr.bf16.mxu0 0
    %2346 = vmatpush1.bf16.msra.mxu0 0
    %2347 = vmatprep.subr.bf16.mxu0 0
    %2348 = vmatpush1.bf16.msra.mxu0 0
    %2349 = vmatprep.subr.bf16.mxu0 0
    %2350 = vmatpush1.bf16.msra.mxu0 0
    %2351 = vmatprep.subr.bf16.mxu0 0
    %2352 = vmatpush1.bf16.msra.mxu0 0
    %2353 = vmatprep.subr.bf16.mxu0 0
    %2354 = vmatpush1.bf16.msra.mxu0 0
    %2355 = vmatprep.subr.bf16.mxu0 0
    %2356 = vmatpush1.bf16.msra.mxu0 0
    %2357 = vmatprep.subr.bf16.mxu0 0
    %2358 = vmatpush1.bf16.msra.mxu0 %v428
    %2359 = vmatprep.subr.bf16.mxu0 0
    %2360 = vmatpush1.bf16.msra.mxu0 %v427
    %2361 = vmatprep.subr.bf16.mxu0 0
    %2362 = vmatpush2.bf16.msra.mxu0 0
    %2363 = vmatprep.subr.bf16.mxu0 0
    %2364 = vmatpush2.bf16.msra.mxu0 0
    %2365 = vmatprep.subr.bf16.mxu0 0
    %2366 = vmatpush2.bf16.msra.mxu0 0
    %2367 = vmatprep.subr.bf16.mxu0 0
    %2368 = vmatpush2.bf16.msra.mxu0 0
    %2369 = vmatprep.subr.bf16.mxu0 0
    %2370 = vmatpush2.bf16.msra.mxu0 0
    %2371 = vmatprep.subr.bf16.mxu0 0
    %2372 = vmatpush2.bf16.msra.mxu0 0
    %2373 = vmatprep.subr.bf16.mxu0 0
    %2374 = vmatpush2.bf16.msra.mxu0 0
    %2375 = vmatprep.subr.bf16.mxu0 0
    %2376 = vmatpush2.bf16.msra.mxu0 0
    %2377 = vmatprep.mubr.bf16.mxu0 0
    %2378 = vmatmul.mubr.bf16.gmra.mxu0 %v2343
    %v2379 = vpop.f32.mrf.mxu0
    %v2380 = vadd.f32 0.0, %v2379
    %v2381 = vpop.f32.mrf.mxu0
    %v2382 = vpop.f32.mrf.mxu0
    %v2383 = vadd.f32 0.0, %v2382
    %v2384 = vpop.f32.mrf.mxu0
    %2385 = vdwg.mxu0
    %v2386 = vadd.f32 %v2340, %v2380
    %v2387 = vadd.f32 %v2341, %v2383
    %v2388 = vtanh.pop %v2386
    %v2389 = vtanh.pop %v2387
    %v2390 = vpack.c.bf16 %v2389, %v2388
    %2391 = vmatprep.subr.bf16.mxu0 0
    %2392 = vmatpush1.bf16.msra.mxu0 0
    %2393 = vmatprep.subr.bf16.mxu0 0
    %2394 = vmatpush1.bf16.msra.mxu0 0
    %2395 = vmatprep.subr.bf16.mxu0 0
    %2396 = vmatpush1.bf16.msra.mxu0 0
    %2397 = vmatprep.subr.bf16.mxu0 0
    %2398 = vmatpush1.bf16.msra.mxu0 0
    %2399 = vmatprep.subr.bf16.mxu0 0
    %2400 = vmatpush1.bf16.msra.mxu0 0
    %2401 = vmatprep.subr.bf16.mxu0 0
    %2402 = vmatpush1.bf16.msra.mxu0 0
    %2403 = vmatprep.subr.bf16.mxu0 0
    %2404 = vmatpush1.bf16.msra.mxu0 %v546
    %2405 = vmatprep.subr.bf16.mxu0 0
    %2406 = vmatpush1.bf16.msra.mxu0 %v545
    %2407 = vmatprep.subr.bf16.mxu0 0
    %2408 = vmatpush2.bf16.msra.mxu0 0
    %2409 = vmatprep.subr.bf16.mxu0 0
    %2410 = vmatpush2.bf16.msra.mxu0 0
    %2411 = vmatprep.subr.bf16.mxu0 0
    %2412 = vmatpush2.bf16.msra.mxu0 0
    %2413 = vmatprep.subr.bf16.mxu0 0
    %2414 = vmatpush2.bf16.msra.mxu0 0
    %2415 = vmatprep.subr.bf16.mxu0 0
    %2416 = vmatpush2.bf16.msra.mxu0 0
    %2417 = vmatprep.subr.bf16.mxu0 0
    %2418 = vmatpush2.bf16.msra.mxu0 0
    %2419 = vmatprep.subr.bf16.mxu0 0
    %2420 = vmatpush2.bf16.msra.mxu0 0
    %2421 = vmatprep.subr.bf16.mxu0 0
    %2422 = vmatpush2.bf16.msra.mxu0 0
    %2423 = vmatprep.mubr.bf16.mxu0 0
    %2424 = vmatmul.mubr.bf16.gmra.mxu0 %v2343
    %v2425 = vpop.f32.mrf.mxu0
    %v2426 = vadd.f32 %v535, %v2425
    %v2427 = vpop.f32.mrf.mxu0
    %v2428 = vpop.f32.mrf.mxu0
    %v2429 = vadd.f32 %v535, %v2428
    %v2430 = vpop.f32.mrf.mxu0
    %2431 = vdwg.mxu0
    %v2433 = vsel %vm371, %v2339, 0
    %2435 = vmatprep.subr.bf16.mxu0 0
    %2436 = vmatpush1.bf16.msra.mxu0 0
    %2437 = vmatprep.subr.bf16.mxu0 0
    %2438 = vmatpush1.bf16.msra.mxu0 0
    %2439 = vmatprep.subr.bf16.mxu0 0
    %2440 = vmatpush1.bf16.msra.mxu0 0
    %2441 = vmatprep.subr.bf16.mxu0 0
    %2442 = vmatpush1.bf16.msra.mxu0 0
    %2443 = vmatprep.subr.bf16.mxu0 0
    %2444 = vmatpush1.bf16.msra.mxu0 0
    %2445 = vmatprep.subr.bf16.mxu0 0
    %2446 = vmatpush1.bf16.msra.mxu0 0
    %2447 = vmatprep.subr.bf16.mxu0 0
    %2448 = vmatpush1.bf16.msra.mxu0 %v599
    %2449 = vmatprep.subr.bf16.mxu0 0
    %2450 = vmatpush1.bf16.msra.mxu0 %v598
    %2451 = vmatprep.subr.bf16.mxu0 0
    %2452 = vmatpush2.bf16.msra.mxu0 0
    %2453 = vmatprep.subr.bf16.mxu0 0
    %2454 = vmatpush2.bf16.msra.mxu0 0
    %2455 = vmatprep.subr.bf16.mxu0 0
    %2456 = vmatpush2.bf16.msra.mxu0 0
    %2457 = vmatprep.subr.bf16.mxu0 0
    %2458 = vmatpush2.bf16.msra.mxu0 0
    %2459 = vmatprep.subr.bf16.mxu0 0
    %2460 = vmatpush2.bf16.msra.mxu0 0
    %2461 = vmatprep.subr.bf16.mxu0 0
    %2462 = vmatpush2.bf16.msra.mxu0 0
    %2463 = vmatprep.subr.bf16.mxu0 0
    %2464 = vmatpush2.bf16.msra.mxu0 0
    %2465 = vmatprep.subr.bf16.mxu0 0
    %2466 = vmatpush2.bf16.msra.mxu0 0
    %2467 = vmatprep.mubr.bf16.mxu0 0
    %2468 = vmatmul.mubr.bf16.gmra.mxu0 %v2433
    %v2469 = vpop.f32.mrf.mxu0
    %v2470 = vadd.f32 0.0, %v2469
    %v2471 = vpop.f32.mrf.mxu0
    %v2472 = vpop.f32.mrf.mxu0
    %v2473 = vadd.f32 0.0, %v2472
    %v2474 = vpop.f32.mrf.mxu0
    %2475 = vdwg.mxu0
    %v2476 = vadd.f32 %v2426, %v2470
    %v2477 = vadd.f32 %v2429, %v2473
    %v2478 = vtanh.pop %v2476
    %v2479 = vtanh.pop %v2477
    %v2480 = vpack.c.bf16 %v2479, %v2478
    %v2481 = vld [vmem:[#allocation2 + $0xf0] sm:$0xff]
    %v2482 = vld [vmem:[#allocation2 + $0xf8] sm:$0xff]
    %v2484 = vsel %vm371, %v2390, 0
    %2486 = vmatprep.subr.bf16.mxu0 0
    %2487 = vmatpush1.bf16.msra.mxu0 0
    %2488 = vmatprep.subr.bf16.mxu0 0
    %2489 = vmatpush1.bf16.msra.mxu0 0
    %2490 = vmatprep.subr.bf16.mxu0 0
    %2491 = vmatpush1.bf16.msra.mxu0 0
    %2492 = vmatprep.subr.bf16.mxu0 0
    %2493 = vmatpush1.bf16.msra.mxu0 0
    %2494 = vmatprep.subr.bf16.mxu0 0
    %2495 = vmatpush1.bf16.msra.mxu0 0
    %2496 = vmatprep.subr.bf16.mxu0 0
    %2497 = vmatpush1.bf16.msra.mxu0 0
    %2498 = vmatprep.subr.bf16.mxu0 0
    %2499 = vmatpush1.bf16.msra.mxu0 %v428
    %2500 = vmatprep.subr.bf16.mxu0 0
    %2501 = vmatpush1.bf16.msra.mxu0 %v427
    %2502 = vmatprep.subr.bf16.mxu0 0
    %2503 = vmatpush2.bf16.msra.mxu0 0
    %2504 = vmatprep.subr.bf16.mxu0 0
    %2505 = vmatpush2.bf16.msra.mxu0 0
    %2506 = vmatprep.subr.bf16.mxu0 0
    %2507 = vmatpush2.bf16.msra.mxu0 0
    %2508 = vmatprep.subr.bf16.mxu0 0
    %2509 = vmatpush2.bf16.msra.mxu0 0
    %2510 = vmatprep.subr.bf16.mxu0 0
    %2511 = vmatpush2.bf16.msra.mxu0 0
    %2512 = vmatprep.subr.bf16.mxu0 0
    %2513 = vmatpush2.bf16.msra.mxu0 0
    %2514 = vmatprep.subr.bf16.mxu0 0
    %2515 = vmatpush2.bf16.msra.mxu0 0
    %2516 = vmatprep.subr.bf16.mxu0 0
    %2517 = vmatpush2.bf16.msra.mxu0 0
    %2518 = vmatprep.mubr.bf16.mxu0 0
    %2519 = vmatmul.mubr.bf16.gmra.mxu0 %v2484
    %v2520 = vpop.f32.mrf.mxu0
    %v2521 = vadd.f32 0.0, %v2520
    %v2522 = vpop.f32.mrf.mxu0
    %v2523 = vpop.f32.mrf.mxu0
    %v2524 = vadd.f32 0.0, %v2523
    %v2525 = vpop.f32.mrf.mxu0
    %2526 = vdwg.mxu0
    %v2527 = vadd.f32 %v2481, %v2521
    %v2528 = vadd.f32 %v2482, %v2524
    %v2529 = vtanh.pop %v2527
    %v2530 = vtanh.pop %v2528
    %v2531 = vpack.c.bf16 %v2530, %v2529
    %2532 = vmatprep.subr.bf16.mxu0 0
    %2533 = vmatpush1.bf16.msra.mxu0 0
    %2534 = vmatprep.subr.bf16.mxu0 0
    %2535 = vmatpush1.bf16.msra.mxu0 0
    %2536 = vmatprep.subr.bf16.mxu0 0
    %2537 = vmatpush1.bf16.msra.mxu0 0
    %2538 = vmatprep.subr.bf16.mxu0 0
    %2539 = vmatpush1.bf16.msra.mxu0 0
    %2540 = vmatprep.subr.bf16.mxu0 0
    %2541 = vmatpush1.bf16.msra.mxu0 0
    %2542 = vmatprep.subr.bf16.mxu0 0
    %2543 = vmatpush1.bf16.msra.mxu0 0
    %2544 = vmatprep.subr.bf16.mxu0 0
    %2545 = vmatpush1.bf16.msra.mxu0 %v546
    %2546 = vmatprep.subr.bf16.mxu0 0
    %2547 = vmatpush1.bf16.msra.mxu0 %v545
    %2548 = vmatprep.subr.bf16.mxu0 0
    %2549 = vmatpush2.bf16.msra.mxu0 0
    %2550 = vmatprep.subr.bf16.mxu0 0
    %2551 = vmatpush2.bf16.msra.mxu0 0
    %2552 = vmatprep.subr.bf16.mxu0 0
    %2553 = vmatpush2.bf16.msra.mxu0 0
    %2554 = vmatprep.subr.bf16.mxu0 0
    %2555 = vmatpush2.bf16.msra.mxu0 0
    %2556 = vmatprep.subr.bf16.mxu0 0
    %2557 = vmatpush2.bf16.msra.mxu0 0
    %2558 = vmatprep.subr.bf16.mxu0 0
    %2559 = vmatpush2.bf16.msra.mxu0 0
    %2560 = vmatprep.subr.bf16.mxu0 0
    %2561 = vmatpush2.bf16.msra.mxu0 0
    %2562 = vmatprep.subr.bf16.mxu0 0
    %2563 = vmatpush2.bf16.msra.mxu0 0
    %2564 = vmatprep.mubr.bf16.mxu0 0
    %2565 = vmatmul.mubr.bf16.gmra.mxu0 %v2484
    %v2566 = vpop.f32.mrf.mxu0
    %v2567 = vadd.f32 %v535, %v2566
    %v2568 = vpop.f32.mrf.mxu0
    %v2569 = vpop.f32.mrf.mxu0
    %v2570 = vadd.f32 %v535, %v2569
    %v2571 = vpop.f32.mrf.mxu0
    %2572 = vdwg.mxu0
    %v2574 = vsel %vm371, %v2480, 0
    %2576 = vmatprep.subr.bf16.mxu0 0
    %2577 = vmatpush1.bf16.msra.mxu0 0
    %2578 = vmatprep.subr.bf16.mxu0 0
    %2579 = vmatpush1.bf16.msra.mxu0 0
    %2580 = vmatprep.subr.bf16.mxu0 0
    %2581 = vmatpush1.bf16.msra.mxu0 0
    %2582 = vmatprep.subr.bf16.mxu0 0
    %2583 = vmatpush1.bf16.msra.mxu0 0
    %2584 = vmatprep.subr.bf16.mxu0 0
    %2585 = vmatpush1.bf16.msra.mxu0 0
    %2586 = vmatprep.subr.bf16.mxu0 0
    %2587 = vmatpush1.bf16.msra.mxu0 0
    %2588 = vmatprep.subr.bf16.mxu0 0
    %2589 = vmatpush1.bf16.msra.mxu0 %v599
    %2590 = vmatprep.subr.bf16.mxu0 0
    %2591 = vmatpush1.bf16.msra.mxu0 %v598
    %2592 = vmatprep.subr.bf16.mxu0 0
    %2593 = vmatpush2.bf16.msra.mxu0 0
    %2594 = vmatprep.subr.bf16.mxu0 0
    %2595 = vmatpush2.bf16.msra.mxu0 0
    %2596 = vmatprep.subr.bf16.mxu0 0
    %2597 = vmatpush2.bf16.msra.mxu0 0
    %2598 = vmatprep.subr.bf16.mxu0 0
    %2599 = vmatpush2.bf16.msra.mxu0 0
    %2600 = vmatprep.subr.bf16.mxu0 0
    %2601 = vmatpush2.bf16.msra.mxu0 0
    %2602 = vmatprep.subr.bf16.mxu0 0
    %2603 = vmatpush2.bf16.msra.mxu0 0
    %2604 = vmatprep.subr.bf16.mxu0 0
    %2605 = vmatpush2.bf16.msra.mxu0 0
    %2606 = vmatprep.subr.bf16.mxu0 0
    %2607 = vmatpush2.bf16.msra.mxu0 0
    %2608 = vmatprep.mubr.bf16.mxu0 0
    %2609 = vmatmul.mubr.bf16.gmra.mxu0 %v2574
    %v2610 = vpop.f32.mrf.mxu0
    %v2611 = vadd.f32 0.0, %v2610
    %v2612 = vpop.f32.mrf.mxu0
    %v2613 = vpop.f32.mrf.mxu0
    %v2614 = vadd.f32 0.0, %v2613
    %v2615 = vpop.f32.mrf.mxu0
    %2616 = vdwg.mxu0
    %v2617 = vadd.f32 %v2567, %v2611
    %v2618 = vadd.f32 %v2570, %v2614
    %v2619 = vtanh.pop %v2617
    %v2620 = vtanh.pop %v2618
    %v2621 = vpack.c.bf16 %v2620, %v2619
    %v2623 = vsel %vm371, %v2531, 0
    %2625 = vmatprep.subr.bf16.mxu0 0
    %2626 = vmatpush1.bf16.msra.mxu0 0
    %2627 = vmatprep.subr.bf16.mxu0 0
    %2628 = vmatpush1.bf16.msra.mxu0 0
    %2629 = vmatprep.subr.bf16.mxu0 0
    %2630 = vmatpush1.bf16.msra.mxu0 0
    %2631 = vmatprep.subr.bf16.mxu0 0
    %2632 = vmatpush1.bf16.msra.mxu0 0
    %2633 = vmatprep.subr.bf16.mxu0 0
    %2634 = vmatpush1.bf16.msra.mxu0 0
    %2635 = vmatprep.subr.bf16.mxu0 0
    %2636 = vmatpush1.bf16.msra.mxu0 0
    %2637 = vmatprep.subr.bf16.mxu0 0
    %2638 = vmatpush1.bf16.msra.mxu0 %v546
    %2639 = vmatprep.subr.bf16.mxu0 0
    %2640 = vmatpush1.bf16.msra.mxu0 %v545
    %2641 = vmatprep.subr.bf16.mxu0 0
    %2642 = vmatpush2.bf16.msra.mxu0 0
    %2643 = vmatprep.subr.bf16.mxu0 0
    %2644 = vmatpush2.bf16.msra.mxu0 0
    %2645 = vmatprep.subr.bf16.mxu0 0
    %2646 = vmatpush2.bf16.msra.mxu0 0
    %2647 = vmatprep.subr.bf16.mxu0 0
    %2648 = vmatpush2.bf16.msra.mxu0 0
    %2649 = vmatprep.subr.bf16.mxu0 0
    %2650 = vmatpush2.bf16.msra.mxu0 0
    %2651 = vmatprep.subr.bf16.mxu0 0
    %2652 = vmatpush2.bf16.msra.mxu0 0
    %2653 = vmatprep.subr.bf16.mxu0 0
    %2654 = vmatpush2.bf16.msra.mxu0 0
    %2655 = vmatprep.subr.bf16.mxu0 0
    %2656 = vmatpush2.bf16.msra.mxu0 0
    %2657 = vmatprep.mubr.bf16.mxu0 0
    %2658 = vmatmul.mubr.bf16.gmra.mxu0 %v2623
    %v2659 = vpop.f32.mrf.mxu0
    %v2660 = vadd.f32 %v535, %v2659
    %v2661 = vpop.f32.mrf.mxu0
    %v2662 = vpop.f32.mrf.mxu0
    %v2663 = vadd.f32 %v535, %v2662
    %v2664 = vpop.f32.mrf.mxu0
    %2665 = vdwg.mxu0
    %v2667 = vsel %vm371, %v2621, 0
    %2669 = vmatprep.subr.bf16.mxu0 0
    %2670 = vmatpush1.bf16.msra.mxu0 0
    %2671 = vmatprep.subr.bf16.mxu0 0
    %2672 = vmatpush1.bf16.msra.mxu0 0
    %2673 = vmatprep.subr.bf16.mxu0 0
    %2674 = vmatpush1.bf16.msra.mxu0 0
    %2675 = vmatprep.subr.bf16.mxu0 0
    %2676 = vmatpush1.bf16.msra.mxu0 0
    %2677 = vmatprep.subr.bf16.mxu0 0
    %2678 = vmatpush1.bf16.msra.mxu0 0
    %2679 = vmatprep.subr.bf16.mxu0 0
    %2680 = vmatpush1.bf16.msra.mxu0 0
    %2681 = vmatprep.subr.bf16.mxu0 0
    %2682 = vmatpush1.bf16.msra.mxu0 %v599
    %2683 = vmatprep.subr.bf16.mxu0 0
    %2684 = vmatpush1.bf16.msra.mxu0 %v598
    %2685 = vmatprep.subr.bf16.mxu0 0
    %2686 = vmatpush2.bf16.msra.mxu0 0
    %2687 = vmatprep.subr.bf16.mxu0 0
    %2688 = vmatpush2.bf16.msra.mxu0 0
    %2689 = vmatprep.subr.bf16.mxu0 0
    %2690 = vmatpush2.bf16.msra.mxu0 0
    %2691 = vmatprep.subr.bf16.mxu0 0
    %2692 = vmatpush2.bf16.msra.mxu0 0
    %2693 = vmatprep.subr.bf16.mxu0 0
    %2694 = vmatpush2.bf16.msra.mxu0 0
    %2695 = vmatprep.subr.bf16.mxu0 0
    %2696 = vmatpush2.bf16.msra.mxu0 0
    %2697 = vmatprep.subr.bf16.mxu0 0
    %2698 = vmatpush2.bf16.msra.mxu0 0
    %2699 = vmatprep.subr.bf16.mxu0 0
    %2700 = vmatpush2.bf16.msra.mxu0 0
    %2701 = vmatprep.mubr.bf16.mxu0 0
    %2702 = vmatmul.mubr.bf16.gmra.mxu0 %v2667
    %v2703 = vpop.f32.mrf.mxu0
    %v2704 = vadd.f32 0.0, %v2703
    %v2705 = vpop.f32.mrf.mxu0
    %v2706 = vpop.f32.mrf.mxu0
    %v2707 = vadd.f32 0.0, %v2706
    %v2708 = vpop.f32.mrf.mxu0
    %2709 = vdwg.mxu0
    %v2710 = vadd.f32 %v2660, %v2704
    %v2711 = vadd.f32 %v2663, %v2707
    %v2712 = vtanh.pop %v2710
    %v2713 = vtanh.pop %v2711
    %v2714 = vld [vmem:[%s7] sm:$0xff]
    %v2715 = vld [vmem:[%s7 + $0x8] sm:$0xff]
    %v2716 = vld [vmem:[%s7 + $0x10] sm:$0xff]
    %v2717 = vld [vmem:[%s7 + $0x18] sm:$0xff]
    %v2718 = vld [vmem:[%s8] sm:$0x1]
    %v2720 = vlaneseq
    %v2721 = vshrl.u32 %v2720, 7
    %v2722 = vsub.s32 0, %v2721
    %v2723 = vrot.slane %v2718, %v2722
    %v2726 = vsel %vm371, %v2712, 0
    %v2729 = vsel %vm371, %v2713, 0
    %2731 = vmatprep.subr.mxu0 0.0
    %2732 = vmatpush1.msra.mxu0 0.0
    %2733 = vmatprep.subr.mxu0 0.0
    %2734 = vmatpush1.msra.mxu0 0.0
    %2735 = vmatprep.subr.mxu0 0.0
    %2736 = vmatpush1.msra.mxu0 0.0
    %2737 = vmatprep.subr.mxu0 0.0
    %2738 = vmatpush1.msra.mxu0 0.0
    %2739 = vmatprep.subr.mxu0 0.0
    %2740 = vmatpush1.msra.mxu0 0.0
    %2741 = vmatprep.subr.mxu0 0.0
    %2742 = vmatpush1.msra.mxu0 0.0
    %2743 = vmatprep.subr.mxu0 0.0
    %2744 = vmatpush1.msra.mxu0 0.0
    %2745 = vmatprep.subr.mxu0 0.0
    %2746 = vmatpush1.msra.mxu0 0.0
    %2747 = vmatprep.subr.mxu0 0.0
    %2748 = vmatpush1.msra.mxu0 0.0
    %2749 = vmatprep.subr.mxu0 0.0
    %2750 = vmatpush1.msra.mxu0 0.0
    %2751 = vmatprep.subr.mxu0 0.0
    %2752 = vmatpush1.msra.mxu0 0.0
    %2753 = vmatprep.subr.mxu0 0.0
    %2754 = vmatpush1.msra.mxu0 0.0
    %2755 = vmatprep.subr.mxu0 0.0
    %2756 = vmatpush1.msra.mxu0 %v2717
    %2757 = vmatprep.subr.mxu0 0.0
    %2758 = vmatpush1.msra.mxu0 %v2716
    %2759 = vmatprep.subr.mxu0 0.0
    %2760 = vmatpush1.msra.mxu0 %v2715
    %2761 = vmatprep.subr.mxu0 0.0
    %2762 = vmatpush1.msra.mxu0 %v2714
    %2763 = vmatprep.subr.mxu0 0.0
    %2764 = vmatpush2.msra.mxu0 0.0
    %2765 = vmatprep.subr.mxu0 0.0
    %2766 = vmatpush2.msra.mxu0 0.0
    %2767 = vmatprep.subr.mxu0 0.0
    %2768 = vmatpush2.msra.mxu0 0.0
    %2769 = vmatprep.subr.mxu0 0.0
    %2770 = vmatpush2.msra.mxu0 0.0
    %2771 = vmatprep.subr.mxu0 0.0
    %2772 = vmatpush2.msra.mxu0 0.0
    %2773 = vmatprep.subr.mxu0 0.0
    %2774 = vmatpush2.msra.mxu0 0.0
    %2775 = vmatprep.subr.mxu0 0.0
    %2776 = vmatpush2.msra.mxu0 0.0
    %2777 = vmatprep.subr.mxu0 0.0
    %2778 = vmatpush2.msra.mxu0 0.0
    %2779 = vmatprep.subr.mxu0 0.0
    %2780 = vmatpush2.msra.mxu0 0.0
    %2781 = vmatprep.subr.mxu0 0.0
    %2782 = vmatpush2.msra.mxu0 0.0
    %2783 = vmatprep.subr.mxu0 0.0
    %2784 = vmatpush2.msra.mxu0 0.0
    %2785 = vmatprep.subr.mxu0 0.0
    %2786 = vmatpush2.msra.mxu0 0.0
    %2787 = vmatprep.subr.mxu0 0.0
    %2788 = vmatpush2.msra.mxu0 0.0
    %2789 = vmatprep.subr.mxu0 0.0
    %2790 = vmatpush2.msra.mxu0 0.0
    %2791 = vmatprep.subr.mxu0 0.0
    %2792 = vmatpush2.msra.mxu0 0.0
    %2793 = vmatprep.subr.mxu0 0.0
    %2794 = vmatpush2.msra.mxu0 0.0
    %2795 = vmatprep.mubr.f32.mxu0 0.0
    %2796 = vmatmul.mubr.f32.gmra.mxu0 %v2726
    %v2797 = vpop.f32.mrf.mxu0
    %v2798 = vadd.f32 %v2723, %v2797
    %v2799 = vpop.f32.mrf.mxu0
    %2800 = vmatprep.mubr.f32.mxu0 0.0
    %2801 = vmatmul.mubr.f32.gmra.mxu0 %v2729
    %v2802 = vpop.f32.mrf.mxu0
    %v2803 = vadd.f32 %v2723, %v2802
    %v2804 = vpop.f32.mrf.mxu0
    %2805 = vdwg.mxu0
    %2806 = vst [vmem:[#allocation3] sm:$0xff] %v2798
    %2807 = vst [vmem:[#allocation3 + $0x8] sm:$0xff] %v2803
    // Predicated region
    $region38: #{tpu_custom_call.1} parent=1 // pred_check
      _
    $region39: #{tpu_custom_call.1} parent=1 // pred_check_branch
      %2809 = sbr.rel (0) target = $region41
    $region40: #{tpu_custom_call.1} parent=1 // pred_region
      %s2811 = ssub.s32 256, 256
      %2812 = vsyncadd [#allocation4], %s2811
      %s2813 = sshll.u32 [#allocation3], 4
      %s2814 = int_to_ptr.vmem [resolvable:$true] %s2813
      %2819 = dma.vmem_to_hbm [thread:$0]  %s2814, 256, %s9, [#allocation4], 128, 128, 8
    $region41: #{tpu_custom_call.1} parent=1 // pred_fallthru
      _
    // Predicated region
    $region42: #{tpu_custom_call.1} parent=1 // pred_check
      _
    $region43: #{tpu_custom_call.1} parent=1 // pred_check_branch
      %2821 = sbr.rel (0) target = $region45
    $region44: #{tpu_custom_call.1} parent=1 // pred_region
      %2822 = dma.done [#allocation4], 256
    $region45: #{tpu_custom_call.1} parent=1 // pred_fallthru
      _
    %2823 = vsyncpa [#allocation4], 1

</llo_original>
